<compile_context>
chip_gen: v5e
topology: v5e:2x2
jax: 0.10.0
libtpu: 0.0.40
codegen_flags: <defaults>
</compile_context>

<pallas_src>
import functools

import jax
import jax.numpy as jnp
from jax.experimental import pallas as pl
from jax.experimental.pallas import tpu as pltpu

_OFF = 8  # column offset at which activations are staged inside the padded scratch


# ------------------------------ in-kernel helpers ----------------------------
def _bn_lrelu(acc, scale, bias):
    """Folded BatchNorm (per-channel scale/bias) + LeakyReLU(0.2), in f32."""
    y = acc * scale + bias
    return jnp.where(y > 0, y, 0.2 * y)


def _maxpool2x2(y):
    """2x2 / stride-2 max pool with PyTorch floor semantics. y: (B, h, w, C) f32."""
    B, h, w, C = y.shape
    ho, wo = h // 2, w // 2
    y = y[:, : 2 * ho, : 2 * wo, :]                   # floor-mode crop (no-op if even)
    r = y.reshape(B * ho, 2, 2 * wo, C)               # split rows (major dims only)
    p = jnp.maximum(r[:, 0], r[:, 1])                 # (B*ho, 2*wo, C)
    q = p.reshape(B * ho, wo, 2, C)
    m = jnp.maximum(q[:, :, 0, :], q[:, :, 1, :])     # (B*ho, wo, C)
    return m.reshape(B, ho, wo, C)


def _conv_bn_lrelu_pool(pad_ref, col_ref, x, wf_ref, scale, bias):
    """One Conv(3x3,'same') + BN + LeakyReLU + MaxPool(2,2) block (layers 2-4).

    pad_ref : (B, H1+2, W1+9, C) bf16 VMEM scratch shared by layers 2-4.  The
              activation is staged at rows [1,1+h) x cols [_OFF,_OFF+w); only the
              border strips the taps read are zeroed (every step -> megacore-safe).
    col_ref : (B, H1, W1, 9*C) bf16 VMEM im2col scratch shared by layers 2-4.
    x       : (B, h, w, C) f32 activation from the previous block.
    wf_ref  : (9*C, C) bf16 conv weights, tap-major flattened (dy, dx, cin).
    scale/bias : (1, C) f32 folded BatchNorm parameters.
    """
    B, h, w, C = x.shape
    dt = pad_ref.dtype

    # Stage the activation: the single f32->bf16 cast of this layer.
    pad_ref[:, 1:1 + h, _OFF:_OFF + w, :] = x.astype(dt)

    # Zero ONLY the read border (rows 0 / h+1 over cols _OFF-1.._OFF+w, and cols
    # _OFF-1 / _OFF+w over rows 1..h) -- no full-buffer zero-fill.
    zrow = jnp.zeros((B, 1, w + 2, C), dt)
    pad_ref[:, 0:1, _OFF - 1:_OFF + w + 1, :] = zrow
    pad_ref[:, h + 1:h + 2, _OFF - 1:_OFF + w + 1, :] = zrow
    zcol = jnp.zeros((B, h, 1, C), dt)
    pad_ref[:, 1:1 + h, _OFF - 1:_OFF, :] = zcol
    pad_ref[:, 1:1 + h, _OFF + w:_OFF + w + 1, :] = zcol

    # In-VMEM im2col: copy the nine taps into lane slots [k*C, (k+1)*C) of the
    # shared col scratch (no per-tap cast, no per-tap f32 accumulate).
    for k in range(9):
        dy, dx = k // 3, k % 3
        col_ref[:, :h, :w, k * C:(k + 1) * C] = (
            pad_ref[:, dy:dy + h, _OFF - 1 + dx:_OFF - 1 + dx + w, :])

    # ONE K=576 MXU matmul per layer (f32 accumulation).
    # TODO(synk): a rank-4 dot_general contracting only the last axis would avoid
    # this reshape's relayout, but Mosaic only lowers 2-D / batched-3-D dots.
    patches = col_ref[:, :h, :w, :].reshape(B * h * w, 9 * C)
    acc = jnp.dot(patches, wf_ref[...], preferred_element_type=jnp.float32)

    y = _bn_lrelu(acc, scale, bias).reshape(B, h, w, C)
    return _maxpool2x2(y)


# ------------------------------- fused kernel --------------------------------
def _conv64f_fused_kernel(x_ref, w1_ref, w2_ref, w3_ref, w4_ref, s_ref, b_ref,
                          o_ref, pad_ref, col_ref, *, B, H, W):
    """Fused 4-layer Conv64F_MCL forward for one batch tile.

    x_ref : (B, H, W, Kp) bf16 -- layer-1 im2col patches (3x3 taps folded into
                                  the contraction dim, zero-padded to Kp=32).
    w1_ref: (Kp, 64)      bf16 -- layer-1 weights, tap-flattened to match.
    w2..w4: (576, 64)     bf16 -- layers 2-4 weights, tap-major flattened.
    s_ref, b_ref: (4, 64) f32  -- per-layer folded BN scale / bias.
    o_ref : (B, H4, W4, 64)    -- final features.
    pad_ref, col_ref : bf16 VMEM scratch shared by layers 2-4.
    """
    C = o_ref.shape[-1]
    Kp = x_ref.shape[-1]
    s = s_ref[...]
    b = b_ref[...]

    # ---- layer 1: single MXU matmul, K = Kp, M = B*H*W ----
    patches = x_ref[...].reshape(B * H * W, Kp)
    acc = jnp.dot(patches, w1_ref[...], preferred_element_type=jnp.float32)
    y = _bn_lrelu(acc, s[0:1, :], b[0:1, :]).reshape(B, H, W, C)
    y = _maxpool2x2(y)

    # ---- layers 2-4, entirely in VMEM (shared, shrinking scratch views) ----
    y = _conv_bn_lrelu_pool(pad_ref, col_ref, y, w2_ref, s[1:2, :], b[1:2, :])
    y = _conv_bn_lrelu_pool(pad_ref, col_ref, y, w3_ref, s[2:3, :], b[2:3, :])
    y = _conv_bn_lrelu_pool(pad_ref, col_ref, y, w4_ref, s[3:4, :], b[3:4, :])

    o_ref[...] = y.astype(o_ref.dtype)


# ------------------------------ host-side wrapper -----------------------------
def _fold_layer1_taps(x_nhwc):
    """Layer-1 im2col: (N, H, W, Cin) -> (N, H, W, Kp) bf16 with the 3x3 taps
    folded into the contraction dim (Kp = 9*Cin rounded up to >= 32)."""
    # TODO(synk): on v5e/v6e this host-side fold inflates the layer-1 HBM stream
    # ~5-10x vs the raw (N,H,W,3) image (plus an extra HBM write+read of the patch
    # array); an in-kernel layer-1 im2col from the raw block would trade that
    # bandwidth for extra in-kernel copies.  On v7x (3.2 TB/s) it is a non-issue.
    N, H, W, Cin = x_nhwc.shape
    xp = jnp.pad(x_nhwc, ((0, 0), (1, 1), (1, 1), (0, 0)))
    taps = [xp[:, dy:dy + H, dx:dx + W, :] for dy in range(3) for dx in range(3)]
    pat = jnp.concatenate(taps, axis=-1)                       # (N, H, W, 9*Cin)
    K = 9 * Cin
    Kp = max(32, -(-K // 8) * 8)
    pat = jnp.pad(pat, ((0, 0), (0, 0), (0, 0), (0, Kp - K)))
    return pat.astype(jnp.bfloat16)


def _round_up(a, m):
    return -(-a // m) * m


def _vmem_budget_and_limit():
    """Per-core VMEM capacity -> (footprint budget for picking bt, vmem_limit_bytes)."""
    cap = None
    try:
        cap = getattr(pltpu.get_tpu_info(), "vmem_capacity_bytes", None)
    except Exception:
        cap = None
    if not cap:
        cap = 64 << 20                       # conservative default (v7x per-core VMEM)
    cap = int(cap)
    budget = int(min(cap // 3, 40 << 20))    # ~21 MiB on v7x, ~40 MiB on v5e/v6e
    limit = int(min(cap - cap // 8, 120 << 20))
    return budget, limit


def _vmem_per_image(H, W):
    """Estimated per-image VMEM footprint INCLUDING Mosaic lane/sublane padding
    (64-channel minor dims occupy 128 lanes; bf16 sublane pack is 16, f32 is 8)."""
    H1, W1 = H // 2, W // 2
    H4, W4 = max(H // 16, 1), max(W // 16, 1)
    patch = H * _round_up(W, 16) * 128 * 2 * 2                   # layer-1 bf16 block, 2 bufs
    outb = H4 * _round_up(W4, 8) * 128 * 4 * 2                   # f32 output block, 2 bufs
    pad = (H1 + 2) * _round_up(W1 + _OFF + 1, 16) * 128 * 2      # shared bf16 padded scratch
    col = H1 * _round_up(W1, 16) * _round_up(576, 128) * 2       # shared bf16 im2col scratch
    temps = H * W * 128 * 4 * 2 + col                            # f32 acc/act + matmul operand
    return patch + outb + pad + col + temps


def _pick_batch_tile(N, H, W, budget_bytes):
    """Images per grid step: the largest divisor of N that (a) fits the corrected
    VMEM budget, (b) keeps the layer-1 matmul M below ~16K rows, and (c) prefers a
    grid of >= 2 (ideally even) steps so both v7x TensorCores get work."""
    fixed = 2 << 20                                  # weights (x2 bufs) + internal scratch
    per_img = max(1, _vmem_per_image(H, W))
    cap = max(1, (budget_bytes - fixed) // per_img)
    cap = min(N, cap, max(1, 16384 // max(1, H * W)))
    best_d, best_key = 1, None
    for d in range(1, cap + 1):
        if N % d:
            continue
        g = N // d
        key = (g >= 2, g % 2 == 0, d)
        if best_key is None or key > best_key:
            best_d, best_key = d, key
    return best_d


def conv64f_mcl_forward_nhwc(x_nhwc, params):
    """Conv64F_MCL forward, NHWC in / NHWC out, as one fused Pallas kernel."""
    N, H, W, Cin = x_nhwc.shape
    C = 64
    (w1, s1, b1), (w2, s2, b2), (w3, s3, b3), (w4, s4, b4) = params

    patches = _fold_layer1_taps(x_nhwc)
    Kp = patches.shape[-1]
    w1f = jnp.pad(w1.reshape(9 * Cin, C),
                  ((0, Kp - 9 * Cin), (0, 0))).astype(jnp.bfloat16)
    w2f = w2.reshape(9 * C, C).astype(jnp.bfloat16)   # tap-major (dy, dx, cin) rows
    w3f = w3.reshape(9 * C, C).astype(jnp.bfloat16)
    w4f = w4.reshape(9 * C, C).astype(jnp.bfloat16)
    scales = jnp.stack([s1, s2, s3, s4]).astype(jnp.float32)   # (4, 64)
    biases = jnp.stack([b1, b2, b3, b4]).astype(jnp.float32)   # (4, 64)

    # Spatial sizes after each block (conv is 'same'; pool floors like PyTorch).
    H1, W1 = H // 2, W // 2
    H2, W2 = H1 // 2, W1 // 2
    H3, W3 = H2 // 2, W2 // 2
    H4, W4 = H3 // 2, W3 // 2
    assert H4 >= 1 and W4 >= 1, "input too small for four 2x2 poolings"

    budget, vmem_limit = _vmem_budget_and_limit()
    bt = _pick_batch_tile(N, H, W, budget)
    grid = (N // bt,)
    kernel = functools.partial(_conv64f_fused_kernel, B=bt, H=H, W=W)

    return pl.pallas_call(
        kernel,
        out_shape=jax.ShapeDtypeStruct((N, H4, W4, C), x_nhwc.dtype),
        grid=grid,
        in_specs=[
            pl.BlockSpec((bt, H, W, Kp), lambda n: (n, 0, 0, 0)),   # layer-1 patches
            pl.BlockSpec((Kp, C), lambda n: (0, 0)),                # w1 (tap-flat)
            pl.BlockSpec((9 * C, C), lambda n: (0, 0)),             # w2 (tap-flat)
            pl.BlockSpec((9 * C, C), lambda n: (0, 0)),             # w3 (tap-flat)
            pl.BlockSpec((9 * C, C), lambda n: (0, 0)),             # w4 (tap-flat)
            pl.BlockSpec((4, C), lambda n: (0, 0)),                 # BN scales
            pl.BlockSpec((4, C), lambda n: (0, 0)),                 # BN biases
        ],
        out_specs=pl.BlockSpec((bt, H4, W4, C), lambda n: (n, 0, 0, 0)),
        scratch_shapes=[
            pltpu.VMEM((bt, H1 + 2, W1 + _OFF + 1, C), jnp.bfloat16),  # shared pad
            pltpu.VMEM((bt, H1, W1, 9 * C), jnp.bfloat16),             # shared im2col
        ],
        compiler_params=pltpu.CompilerParams(
            dimension_semantics=("parallel",),
            vmem_limit_bytes=vmem_limit,
        ),
    )(patches, w1f, w2f, w3f, w4f, scales, biases)


@jax.jit
def conv64f_mcl_forward(x_nchw, params):
    """PyTorch-compatible NCHW wrapper (layout change only at the boundary)."""
    x = jnp.transpose(x_nchw, (0, 2, 3, 1))          # NCHW -> NHWC
    y = conv64f_mcl_forward_nhwc(x, params)
    return jnp.transpose(y, (0, 3, 1, 2))            # NHWC -> NCHW


# --------------------------- parameter construction --------------------------
def xavier_uniform_hwio(key, cin, cout, k=3, dtype=jnp.float32):
    """torch.nn.init.xavier_uniform_ for a (cout, cin, k, k) conv, built in HWIO."""
    fan_in = cin * k * k
    fan_out = cout * k * k
    a = (6.0 / (fan_in + fan_out)) ** 0.5
    return jax.random.uniform(key, (k, k, cin, cout), dtype, minval=-a, maxval=a)


def make_params(seed=0):
    keys = jax.random.split(jax.random.PRNGKey(seed), 4)
    cins = [3, 64, 64, 64]
    eps = 1e-5
    params = []
    for i, cin in enumerate(cins):
        w = xavier_uniform_hwio(keys[i], cin, 64)
        # BN defaults at init: gamma=1, beta=0, running_mean=0, running_var=1.
        gamma = jnp.ones((64,), jnp.float32)
        beta = jnp.zeros((64,), jnp.float32)
        rmean = jnp.zeros((64,), jnp.float32)
        rvar = jnp.ones((64,), jnp.float32)
        scale = gamma / jnp.sqrt(rvar + eps)
        bias = beta - rmean * scale
        # NOTE: real PyTorch checkpoints must be transposed OIHW -> HWIO.
        params.append((w, scale, bias))
    return params


# --------------------------------- reference ---------------------------------
def _reference_forward_nchw(x_nchw, params):
    """Pure-JAX (XLA) reference used only as a loose sanity check."""
    x = jnp.transpose(x_nchw, (0, 2, 3, 1))
    for (w, scale, bias) in params:
        y = jax.lax.conv_general_dilated(
            x, w, window_strides=(1, 1), padding="SAME",
            dimension_numbers=("NHWC", "HWIO", "NHWC"))
        y = y * scale + bias
        y = jnp.where(y > 0, y, 0.2 * y)
        n, h, wd, c = y.shape
        y = y[:, : (h // 2) * 2, : (wd // 2) * 2, :]
        x = y.reshape(n, h // 2, 2, wd // 2, 2, c).max(axis=(2, 4))
    return jnp.transpose(x, (0, 3, 1, 2))


# ------------------------------------ main ------------------------------------
if __name__ == "__main__":
    key = jax.random.PRNGKey(0)
    x = jax.random.normal(key, (2, 3, 16, 16), jnp.float32)   # NCHW like PyTorch

    params = make_params(seed=0)
    out = conv64f_mcl_forward(x, params)
    out = jax.block_until_ready(out)

    assert out.shape == (2, 64, 1, 1), out.shape
    assert bool(jnp.all(jnp.isfinite(out)))

    # Loose numerical check vs. the XLA reference (kernel uses bf16 matmul inputs).
    ref = _reference_forward_nchw(x, params)
    assert bool(jnp.allclose(out, ref, rtol=5e-2, atol=5e-2)), \
        float(jnp.max(jnp.abs(out - ref)))

    print("KERNEL_OK")
</pallas_src>

<mosaic_0001>
module attributes {stable_mosaic.version = 11 : i64} {
  func.func @_conv64f_fused_kernel(%arg0: i32, %arg1: memref<1x16x16x32xbf16, #tpu.memory_space<vmem>>, %arg2: memref<32x64xbf16, #tpu.memory_space<vmem>>, %arg3: memref<576x64xbf16, #tpu.memory_space<vmem>>, %arg4: memref<576x64xbf16, #tpu.memory_space<vmem>>, %arg5: memref<576x64xbf16, #tpu.memory_space<vmem>>, %arg6: memref<4x64xf32, #tpu.memory_space<vmem>>, %arg7: memref<4x64xf32, #tpu.memory_space<vmem>>, %arg8: memref<1x1x1x64xf32, #tpu.memory_space<vmem>>, %arg9: memref<1x10x17x64xbf16, #tpu.memory_space<vmem>>, %arg10: memref<1x8x8x576xbf16, #tpu.memory_space<vmem>>) attributes {dimension_semantics = [#tpu.dimension_semantics<parallel>], iteration_bounds = array<i64: 2>, scalar_prefetch = 0 : i64, scratch_operands = 2 : i64, tpu.core_type = #tpu.core_type<tc>, window_params = [{transform_indices = @transform_0, window_bounds = array<i64: 1, 16, 16, 32>}, {pipeline_mode = #tpu.pipeline_mode<synchronous>, transform_indices = @transform_1, window_bounds = array<i64: 32, 64>}, {pipeline_mode = #tpu.pipeline_mode<synchronous>, transform_indices = @transform_2, window_bounds = array<i64: 576, 64>}, {pipeline_mode = #tpu.pipeline_mode<synchronous>, transform_indices = @transform_3, window_bounds = array<i64: 576, 64>}, {pipeline_mode = #tpu.pipeline_mode<synchronous>, transform_indices = @transform_4, window_bounds = array<i64: 576, 64>}, {pipeline_mode = #tpu.pipeline_mode<synchronous>, transform_indices = @transform_5, window_bounds = array<i64: 4, 64>}, {pipeline_mode = #tpu.pipeline_mode<synchronous>, transform_indices = @transform_6, window_bounds = array<i64: 4, 64>}, {transform_indices = @transform_7, window_bounds = array<i64: 1, 1, 1, 64>}]} {
    %c0 = arith.constant 0 : index
    %c0_0 = arith.constant 0 : index
    %0 = vector.load %arg6[%c0, %c0_0] : memref<4x64xf32, #tpu.memory_space<vmem>>, vector<4x64xf32>
    %c0_1 = arith.constant 0 : index
    %c0_2 = arith.constant 0 : index
    %1 = vector.load %arg7[%c0_1, %c0_2] : memref<4x64xf32, #tpu.memory_space<vmem>>, vector<4x64xf32>
    %c0_3 = arith.constant 0 : index
    %c0_4 = arith.constant 0 : index
    %c0_5 = arith.constant 0 : index
    %c0_6 = arith.constant 0 : index
    %2 = vector.load %arg1[%c0_3, %c0_4, %c0_5, %c0_6] : memref<1x16x16x32xbf16, #tpu.memory_space<vmem>>, vector<1x16x16x32xbf16>
    %3 = vector.shape_cast %2 : vector<1x16x16x32xbf16> to vector<256x32xbf16>
    %c0_7 = arith.constant 0 : index
    %c0_8 = arith.constant 0 : index
    %4 = vector.load %arg2[%c0_7, %c0_8] : memref<32x64xbf16, #tpu.memory_space<vmem>>, vector<32x64xbf16>
    %cst = arith.constant dense<0.000000e+00> : vector<256x64xf32>
    %5 = tpu.matmul %3, %4, %cst {dimension_numbers = #tpu.dot_dimension_numbers<[1], [0], [0], [1], [0, 0, 1, 1], [], []>} : vector<256x32xbf16>, vector<32x64xbf16>, vector<256x64xf32> -> vector<256x64xf32>
    %6 = vector.extract_strided_slice %0 {offsets = [0, 0], sizes = [1, 64], strides = [1, 1]} : vector<4x64xf32> to vector<1x64xf32>
    %7 = vector.extract_strided_slice %1 {offsets = [0, 0], sizes = [1, 64], strides = [1, 1]} : vector<4x64xf32> to vector<1x64xf32>
    %8 = vector.broadcast %6 : vector<1x64xf32> to vector<256x64xf32>
    %9 = arith.mulf %5, %8 : vector<256x64xf32>
    %10 = vector.broadcast %7 : vector<1x64xf32> to vector<256x64xf32>
    %11 = arith.addf %9, %10 : vector<256x64xf32>
    %cst_9 = arith.constant 0.000000e+00 : f32
    %12 = vector.broadcast %cst_9 : f32 to vector<256x64xf32>
    %13 = arith.cmpf ogt, %11, %12 : vector<256x64xf32>
    %cst_10 = arith.constant 2.000000e-01 : f32
    %14 = vector.broadcast %cst_10 : f32 to vector<256x64xf32>
    %15 = arith.mulf %14, %11 : vector<256x64xf32>
    %16 = arith.select %13, %11, %15 : vector<256x64xi1>, vector<256x64xf32>
    %17 = vector.shape_cast %16 : vector<256x64xf32> to vector<1x16x16x64xf32>
    %18 = vector.shape_cast %17 : vector<1x16x16x64xf32> to vector<8x2x16x64xf32>
    %19 = vector.extract_strided_slice %18 {offsets = [0, 0, 0, 0], sizes = [8, 1, 16, 64], strides = [1, 1, 1, 1]} : vector<8x2x16x64xf32> to vector<8x1x16x64xf32>
    %20 = vector.shape_cast %19 : vector<8x1x16x64xf32> to vector<8x16x64xf32>
    %21 = vector.extract_strided_slice %18 {offsets = [0, 1, 0, 0], sizes = [8, 1, 16, 64], strides = [1, 1, 1, 1]} : vector<8x2x16x64xf32> to vector<8x1x16x64xf32>
    %22 = vector.shape_cast %21 : vector<8x1x16x64xf32> to vector<8x16x64xf32>
    %23 = arith.maximumf %20, %22 : vector<8x16x64xf32>
    %24 = vector.shape_cast %23 : vector<8x16x64xf32> to vector<8x8x2x64xf32>
    %25 = vector.extract_strided_slice %24 {offsets = [0, 0, 0, 0], sizes = [8, 8, 1, 64], strides = [1, 1, 1, 1]} : vector<8x8x2x64xf32> to vector<8x8x1x64xf32>
    %26 = vector.shape_cast %25 : vector<8x8x1x64xf32> to vector<8x8x64xf32>
    %27 = vector.extract_strided_slice %24 {offsets = [0, 0, 1, 0], sizes = [8, 8, 1, 64], strides = [1, 1, 1, 1]} : vector<8x8x2x64xf32> to vector<8x8x1x64xf32>
    %28 = vector.shape_cast %27 : vector<8x8x1x64xf32> to vector<8x8x64xf32>
    %29 = arith.maximumf %26, %28 : vector<8x8x64xf32>
    %30 = vector.shape_cast %29 : vector<8x8x64xf32> to vector<1x8x8x64xf32>
    %31 = vector.extract_strided_slice %0 {offsets = [1, 0], sizes = [1, 64], strides = [1, 1]} : vector<4x64xf32> to vector<1x64xf32>
    %32 = vector.extract_strided_slice %1 {offsets = [1, 0], sizes = [1, 64], strides = [1, 1]} : vector<4x64xf32> to vector<1x64xf32>
    %33 = arith.truncf %30 : vector<1x8x8x64xf32> to vector<1x8x8x64xbf16>
    %c0_11 = arith.constant 0 : index
    %c1 = arith.constant 1 : index
    %c8 = arith.constant 8 : index
    %c0_12 = arith.constant 0 : index
    %34 = vector.load %arg9[%c0_11, %c1, %c8, %c0_12] : memref<1x10x17x64xbf16, #tpu.memory_space<vmem>>, vector<1x8x8x64xbf16>
    tpu.vector_store %arg9[%c0_11, %c1, %c8, %c0_12], %33 {strides = array<i32>} : memref<1x10x17x64xbf16, #tpu.memory_space<vmem>>, vector<1x8x8x64xbf16>,
    %cst_13 = arith.constant 0.000000e+00 : bf16
    %35 = vector.broadcast %cst_13 : bf16 to vector<1x1x10x64xbf16>
    %c0_14 = arith.constant 0 : index
    %c0_15 = arith.constant 0 : index
    %c7 = arith.constant 7 : index
    %c0_16 = arith.constant 0 : index
    %36 = vector.load %arg9[%c0_14, %c0_15, %c7, %c0_16] : memref<1x10x17x64xbf16, #tpu.memory_space<vmem>>, vector<1x1x10x64xbf16>
    tpu.vector_store %arg9[%c0_14, %c0_15, %c7, %c0_16], %35 {strides = array<i32>} : memref<1x10x17x64xbf16, #tpu.memory_space<vmem>>, vector<1x1x10x64xbf16>,
    %c0_17 = arith.constant 0 : index
    %c9 = arith.constant 9 : index
    %c7_18 = arith.constant 7 : index
    %c0_19 = arith.constant 0 : index
    %37 = vector.load %arg9[%c0_17, %c9, %c7_18, %c0_19] : memref<1x10x17x64xbf16, #tpu.memory_space<vmem>>, vector<1x1x10x64xbf16>
    tpu.vector_store %arg9[%c0_17, %c9, %c7_18, %c0_19], %35 {strides = array<i32>} : memref<1x10x17x64xbf16, #tpu.memory_space<vmem>>, vector<1x1x10x64xbf16>,
    %cst_20 = arith.constant 0.000000e+00 : bf16
    %38 = vector.broadcast %cst_20 : bf16 to vector<1x8x1x64xbf16>
    %c0_21 = arith.constant 0 : index
    %c1_22 = arith.constant 1 : index
    %c7_23 = arith.constant 7 : index
    %c0_24 = arith.constant 0 : index
    %39 = vector.load %arg9[%c0_21, %c1_22, %c7_23, %c0_24] : memref<1x10x17x64xbf16, #tpu.memory_space<vmem>>, vector<1x8x1x64xbf16>
    tpu.vector_store %arg9[%c0_21, %c1_22, %c7_23, %c0_24], %38 {strides = array<i32>} : memref<1x10x17x64xbf16, #tpu.memory_space<vmem>>, vector<1x8x1x64xbf16>,
    %c0_25 = arith.constant 0 : index
    %c1_26 = arith.constant 1 : index
    %c16 = arith.constant 16 : index
    %c0_27 = arith.constant 0 : index
    %40 = vector.load %arg9[%c0_25, %c1_26, %c16, %c0_27] : memref<1x10x17x64xbf16, #tpu.memory_space<vmem>>, vector<1x8x1x64xbf16>
    tpu.vector_store %arg9[%c0_25, %c1_26, %c16, %c0_27], %38 {strides = array<i32>} : memref<1x10x17x64xbf16, #tpu.memory_space<vmem>>, vector<1x8x1x64xbf16>,
    %c0_28 = arith.constant 0 : index
    %c0_29 = arith.constant 0 : index
    %c7_30 = arith.constant 7 : index
    %c0_31 = arith.constant 0 : index
    %41 = vector.load %arg9[%c0_28, %c0_29, %c7_30, %c0_31] : memref<1x10x17x64xbf16, #tpu.memory_space<vmem>>, vector<1x8x8x64xbf16>
    %c0_32 = arith.constant 0 : index
    %c0_33 = arith.constant 0 : index
    %c0_34 = arith.constant 0 : index
    %c0_35 = arith.constant 0 : index
    %42 = vector.load %arg10[%c0_32, %c0_33, %c0_34, %c0_35] : memref<1x8x8x576xbf16, #tpu.memory_space<vmem>>, vector<1x8x8x64xbf16>
    tpu.vector_store %arg10[%c0_32, %c0_33, %c0_34, %c0_35], %41 {strides = array<i32>} : memref<1x8x8x576xbf16, #tpu.memory_space<vmem>>, vector<1x8x8x64xbf16>,
    %c0_36 = arith.constant 0 : index
    %c0_37 = arith.constant 0 : index
    %c8_38 = arith.constant 8 : index
    %c0_39 = arith.constant 0 : index
    %43 = vector.load %arg9[%c0_36, %c0_37, %c8_38, %c0_39] : memref<1x10x17x64xbf16, #tpu.memory_space<vmem>>, vector<1x8x8x64xbf16>
    %c0_40 = arith.constant 0 : index
    %c0_41 = arith.constant 0 : index
    %c0_42 = arith.constant 0 : index
    %c64 = arith.constant 64 : index
    %44 = vector.load %arg10[%c0_40, %c0_41, %c0_42, %c64] : memref<1x8x8x576xbf16, #tpu.memory_space<vmem>>, vector<1x8x8x64xbf16>
    tpu.vector_store %arg10[%c0_40, %c0_41, %c0_42, %c64], %43 {strides = array<i32>} : memref<1x8x8x576xbf16, #tpu.memory_space<vmem>>, vector<1x8x8x64xbf16>,
    %c0_43 = arith.constant 0 : index
    %c0_44 = arith.constant 0 : index
    %c9_45 = arith.constant 9 : index
    %c0_46 = arith.constant 0 : index
    %45 = vector.load %arg9[%c0_43, %c0_44, %c9_45, %c0_46] : memref<1x10x17x64xbf16, #tpu.memory_space<vmem>>, vector<1x8x8x64xbf16>
    %c0_47 = arith.constant 0 : index
    %c0_48 = arith.constant 0 : index
    %c0_49 = arith.constant 0 : index
    %c128 = arith.constant 128 : index
    %46 = vector.load %arg10[%c0_47, %c0_48, %c0_49, %c128] : memref<1x8x8x576xbf16, #tpu.memory_space<vmem>>, vector<1x8x8x64xbf16>
    tpu.vector_store %arg10[%c0_47, %c0_48, %c0_49, %c128], %45 {strides = array<i32>} : memref<1x8x8x576xbf16, #tpu.memory_space<vmem>>, vector<1x8x8x64xbf16>,
    %c0_50 = arith.constant 0 : index
    %c1_51 = arith.constant 1 : index
    %c7_52 = arith.constant 7 : index
    %c0_53 = arith.constant 0 : index
    %47 = vector.load %arg9[%c0_50, %c1_51, %c7_52, %c0_53] : memref<1x10x17x64xbf16, #tpu.memory_space<vmem>>, vector<1x8x8x64xbf16>
    %c0_54 = arith.constant 0 : index
    %c0_55 = arith.constant 0 : index
    %c0_56 = arith.constant 0 : index
    %c192 = arith.constant 192 : index
    %48 = vector.load %arg10[%c0_54, %c0_55, %c0_56, %c192] : memref<1x8x8x576xbf16, #tpu.memory_space<vmem>>, vector<1x8x8x64xbf16>
    tpu.vector_store %arg10[%c0_54, %c0_55, %c0_56, %c192], %47 {strides = array<i32>} : memref<1x8x8x576xbf16, #tpu.memory_space<vmem>>, vector<1x8x8x64xbf16>,
    %c0_57 = arith.constant 0 : index
    %c1_58 = arith.constant 1 : index
    %c8_59 = arith.constant 8 : index
    %c0_60 = arith.constant 0 : index
    %49 = vector.load %arg9[%c0_57, %c1_58, %c8_59, %c0_60] : memref<1x10x17x64xbf16, #tpu.memory_space<vmem>>, vector<1x8x8x64xbf16>
    %c0_61 = arith.constant 0 : index
    %c0_62 = arith.constant 0 : index
    %c0_63 = arith.constant 0 : index
    %c256 = arith.constant 256 : index
    %50 = vector.load %arg10[%c0_61, %c0_62, %c0_63, %c256] : memref<1x8x8x576xbf16, #tpu.memory_space<vmem>>, vector<1x8x8x64xbf16>
    tpu.vector_store %arg10[%c0_61, %c0_62, %c0_63, %c256], %49 {strides = array<i32>} : memref<1x8x8x576xbf16, #tpu.memory_space<vmem>>, vector<1x8x8x64xbf16>,
    %c0_64 = arith.constant 0 : index
    %c1_65 = arith.constant 1 : index
    %c9_66 = arith.constant 9 : index
    %c0_67 = arith.constant 0 : index
    %51 = vector.load %arg9[%c0_64, %c1_65, %c9_66, %c0_67] : memref<1x10x17x64xbf16, #tpu.memory_space<vmem>>, vector<1x8x8x64xbf16>
    %c0_68 = arith.constant 0 : index
    %c0_69 = arith.constant 0 : index
    %c0_70 = arith.constant 0 : index
    %c320 = arith.constant 320 : index
    %52 = vector.load %arg10[%c0_68, %c0_69, %c0_70, %c320] : memref<1x8x8x576xbf16, #tpu.memory_space<vmem>>, vector<1x8x8x64xbf16>
    tpu.vector_store %arg10[%c0_68, %c0_69, %c0_70, %c320], %51 {strides = array<i32>} : memref<1x8x8x576xbf16, #tpu.memory_space<vmem>>, vector<1x8x8x64xbf16>,
    %c0_71 = arith.constant 0 : index
    %c2 = arith.constant 2 : index
    %c7_72 = arith.constant 7 : index
    %c0_73 = arith.constant 0 : index
    %53 = vector.load %arg9[%c0_71, %c2, %c7_72, %c0_73] : memref<1x10x17x64xbf16, #tpu.memory_space<vmem>>, vector<1x8x8x64xbf16>
    %c0_74 = arith.constant 0 : index
    %c0_75 = arith.constant 0 : index
    %c0_76 = arith.constant 0 : index
    %c384 = arith.constant 384 : index
    %54 = vector.load %arg10[%c0_74, %c0_75, %c0_76, %c384] : memref<1x8x8x576xbf16, #tpu.memory_space<vmem>>, vector<1x8x8x64xbf16>
    tpu.vector_store %arg10[%c0_74, %c0_75, %c0_76, %c384], %53 {strides = array<i32>} : memref<1x8x8x576xbf16, #tpu.memory_space<vmem>>, vector<1x8x8x64xbf16>,
    %c0_77 = arith.constant 0 : index
    %c2_78 = arith.constant 2 : index
    %c8_79 = arith.constant 8 : index
    %c0_80 = arith.constant 0 : index
    %55 = vector.load %arg9[%c0_77, %c2_78, %c8_79, %c0_80] : memref<1x10x17x64xbf16, #tpu.memory_space<vmem>>, vector<1x8x8x64xbf16>
    %c0_81 = arith.constant 0 : index
    %c0_82 = arith.constant 0 : index
    %c0_83 = arith.constant 0 : index
    %c448 = arith.constant 448 : index
    %56 = vector.load %arg10[%c0_81, %c0_82, %c0_83, %c448] : memref<1x8x8x576xbf16, #tpu.memory_space<vmem>>, vector<1x8x8x64xbf16>
    tpu.vector_store %arg10[%c0_81, %c0_82, %c0_83, %c448], %55 {strides = array<i32>} : memref<1x8x8x576xbf16, #tpu.memory_space<vmem>>, vector<1x8x8x64xbf16>,
    %c0_84 = arith.constant 0 : index
    %c2_85 = arith.constant 2 : index
    %c9_86 = arith.constant 9 : index
    %c0_87 = arith.constant 0 : index
    %57 = vector.load %arg9[%c0_84, %c2_85, %c9_86, %c0_87] : memref<1x10x17x64xbf16, #tpu.memory_space<vmem>>, vector<1x8x8x64xbf16>
    %c0_88 = arith.constant 0 : index
    %c0_89 = arith.constant 0 : index
    %c0_90 = arith.constant 0 : index
    %c512 = arith.constant 512 : index
    %58 = vector.load %arg10[%c0_88, %c0_89, %c0_90, %c512] : memref<1x8x8x576xbf16, #tpu.memory_space<vmem>>, vector<1x8x8x64xbf16>
    tpu.vector_store %arg10[%c0_88, %c0_89, %c0_90, %c512], %57 {strides = array<i32>} : memref<1x8x8x576xbf16, #tpu.memory_space<vmem>>, vector<1x8x8x64xbf16>,
    %c0_91 = arith.constant 0 : index
    %c0_92 = arith.constant 0 : index
    %c0_93 = arith.constant 0 : index
    %c0_94 = arith.constant 0 : index
    %59 = vector.load %arg10[%c0_91, %c0_92, %c0_93, %c0_94] : memref<1x8x8x576xbf16, #tpu.memory_space<vmem>>, vector<1x8x8x576xbf16>
    %60 = vector.shape_cast %59 : vector<1x8x8x576xbf16> to vector<64x576xbf16>
    %c0_95 = arith.constant 0 : index
    %c0_96 = arith.constant 0 : index
    %61 = vector.load %arg3[%c0_95, %c0_96] : memref<576x64xbf16, #tpu.memory_space<vmem>>, vector<576x64xbf16>
    %cst_97 = arith.constant dense<0.000000e+00> : vector<64x64xf32>
    %62 = tpu.matmul %60, %61, %cst_97 {dimension_numbers = #tpu.dot_dimension_numbers<[1], [0], [0], [1], [0, 0, 1, 1], [], []>} : vector<64x576xbf16>, vector<576x64xbf16>, vector<64x64xf32> -> vector<64x64xf32>
    %63 = vector.broadcast %31 : vector<1x64xf32> to vector<64x64xf32>
    %64 = arith.mulf %62, %63 : vector<64x64xf32>
    %65 = vector.broadcast %32 : vector<1x64xf32> to vector<64x64xf32>
    %66 = arith.addf %64, %65 : vector<64x64xf32>
    %cst_98 = arith.constant 0.000000e+00 : f32
    %67 = vector.broadcast %cst_98 : f32 to vector<64x64xf32>
    %68 = arith.cmpf ogt, %66, %67 : vector<64x64xf32>
    %cst_99 = arith.constant 2.000000e-01 : f32
    %69 = vector.broadcast %cst_99 : f32 to vector<64x64xf32>
    %70 = arith.mulf %69, %66 : vector<64x64xf32>
    %71 = arith.select %68, %66, %70 : vector<64x64xi1>, vector<64x64xf32>
    %72 = vector.shape_cast %71 : vector<64x64xf32> to vector<1x8x8x64xf32>
    %73 = vector.shape_cast %72 : vector<1x8x8x64xf32> to vector<4x2x8x64xf32>
    %74 = vector.extract_strided_slice %73 {offsets = [0, 0, 0, 0], sizes = [4, 1, 8, 64], strides = [1, 1, 1, 1]} : vector<4x2x8x64xf32> to vector<4x1x8x64xf32>
    %75 = vector.shape_cast %74 : vector<4x1x8x64xf32> to vector<4x8x64xf32>
    %76 = vector.extract_strided_slice %73 {offsets = [0, 1, 0, 0], sizes = [4, 1, 8, 64], strides = [1, 1, 1, 1]} : vector<4x2x8x64xf32> to vector<4x1x8x64xf32>
    %77 = vector.shape_cast %76 : vector<4x1x8x64xf32> to vector<4x8x64xf32>
    %78 = arith.maximumf %75, %77 : vector<4x8x64xf32>
    %79 = vector.shape_cast %78 : vector<4x8x64xf32> to vector<4x4x2x64xf32>
    %80 = vector.extract_strided_slice %79 {offsets = [0, 0, 0, 0], sizes = [4, 4, 1, 64], strides = [1, 1, 1, 1]} : vector<4x4x2x64xf32> to vector<4x4x1x64xf32>
    %81 = vector.shape_cast %80 : vector<4x4x1x64xf32> to vector<4x4x64xf32>
    %82 = vector.extract_strided_slice %79 {offsets = [0, 0, 1, 0], sizes = [4, 4, 1, 64], strides = [1, 1, 1, 1]} : vector<4x4x2x64xf32> to vector<4x4x1x64xf32>
    %83 = vector.shape_cast %82 : vector<4x4x1x64xf32> to vector<4x4x64xf32>
    %84 = arith.maximumf %81, %83 : vector<4x4x64xf32>
    %85 = vector.shape_cast %84 : vector<4x4x64xf32> to vector<1x4x4x64xf32>
    %86 = vector.extract_strided_slice %0 {offsets = [2, 0], sizes = [1, 64], strides = [1, 1]} : vector<4x64xf32> to vector<1x64xf32>
    %87 = vector.extract_strided_slice %1 {offsets = [2, 0], sizes = [1, 64], strides = [1, 1]} : vector<4x64xf32> to vector<1x64xf32>
    %88 = arith.truncf %85 : vector<1x4x4x64xf32> to vector<1x4x4x64xbf16>
    %c0_100 = arith.constant 0 : index
    %c1_101 = arith.constant 1 : index
    %c8_102 = arith.constant 8 : index
    %c0_103 = arith.constant 0 : index
    %89 = vector.load %arg9[%c0_100, %c1_101, %c8_102, %c0_103] : memref<1x10x17x64xbf16, #tpu.memory_space<vmem>>, vector<1x4x4x64xbf16>
    tpu.vector_store %arg9[%c0_100, %c1_101, %c8_102, %c0_103], %88 {strides = array<i32>} : memref<1x10x17x64xbf16, #tpu.memory_space<vmem>>, vector<1x4x4x64xbf16>,
    %cst_104 = arith.constant 0.000000e+00 : bf16
    %90 = vector.broadcast %cst_104 : bf16 to vector<1x1x6x64xbf16>
    %c0_105 = arith.constant 0 : index
    %c0_106 = arith.constant 0 : index
    %c7_107 = arith.constant 7 : index
    %c0_108 = arith.constant 0 : index
    %91 = vector.load %arg9[%c0_105, %c0_106, %c7_107, %c0_108] : memref<1x10x17x64xbf16, #tpu.memory_space<vmem>>, vector<1x1x6x64xbf16>
    tpu.vector_store %arg9[%c0_105, %c0_106, %c7_107, %c0_108], %90 {strides = array<i32>} : memref<1x10x17x64xbf16, #tpu.memory_space<vmem>>, vector<1x1x6x64xbf16>,
    %c0_109 = arith.constant 0 : index
    %c5 = arith.constant 5 : index
    %c7_110 = arith.constant 7 : index
    %c0_111 = arith.constant 0 : index
    %92 = vector.load %arg9[%c0_109, %c5, %c7_110, %c0_111] : memref<1x10x17x64xbf16, #tpu.memory_space<vmem>>, vector<1x1x6x64xbf16>
    tpu.vector_store %arg9[%c0_109, %c5, %c7_110, %c0_111], %90 {strides = array<i32>} : memref<1x10x17x64xbf16, #tpu.memory_space<vmem>>, vector<1x1x6x64xbf16>,
    %cst_112 = arith.constant 0.000000e+00 : bf16
    %93 = vector.broadcast %cst_112 : bf16 to vector<1x4x1x64xbf16>
    %c0_113 = arith.constant 0 : index
    %c1_114 = arith.constant 1 : index
    %c7_115 = arith.constant 7 : index
    %c0_116 = arith.constant 0 : index
    %94 = vector.load %arg9[%c0_113, %c1_114, %c7_115, %c0_116] : memref<1x10x17x64xbf16, #tpu.memory_space<vmem>>, vector<1x4x1x64xbf16>
    tpu.vector_store %arg9[%c0_113, %c1_114, %c7_115, %c0_116], %93 {strides = array<i32>} : memref<1x10x17x64xbf16, #tpu.memory_space<vmem>>, vector<1x4x1x64xbf16>,
    %c0_117 = arith.constant 0 : index
    %c1_118 = arith.constant 1 : index
    %c12 = arith.constant 12 : index
    %c0_119 = arith.constant 0 : index
    %95 = vector.load %arg9[%c0_117, %c1_118, %c12, %c0_119] : memref<1x10x17x64xbf16, #tpu.memory_space<vmem>>, vector<1x4x1x64xbf16>
    tpu.vector_store %arg9[%c0_117, %c1_118, %c12, %c0_119], %93 {strides = array<i32>} : memref<1x10x17x64xbf16, #tpu.memory_space<vmem>>, vector<1x4x1x64xbf16>,
    %c0_120 = arith.constant 0 : index
    %c0_121 = arith.constant 0 : index
    %c7_122 = arith.constant 7 : index
    %c0_123 = arith.constant 0 : index
    %96 = vector.load %arg9[%c0_120, %c0_121, %c7_122, %c0_123] : memref<1x10x17x64xbf16, #tpu.memory_space<vmem>>, vector<1x4x4x64xbf16>
    %c0_124 = arith.constant 0 : index
    %c0_125 = arith.constant 0 : index
    %c0_126 = arith.constant 0 : index
    %c0_127 = arith.constant 0 : index
    %97 = vector.load %arg10[%c0_124, %c0_125, %c0_126, %c0_127] : memref<1x8x8x576xbf16, #tpu.memory_space<vmem>>, vector<1x4x4x64xbf16>
    tpu.vector_store %arg10[%c0_124, %c0_125, %c0_126, %c0_127], %96 {strides = array<i32>} : memref<1x8x8x576xbf16, #tpu.memory_space<vmem>>, vector<1x4x4x64xbf16>,
    %c0_128 = arith.constant 0 : index
    %c0_129 = arith.constant 0 : index
    %c8_130 = arith.constant 8 : index
    %c0_131 = arith.constant 0 : index
    %98 = vector.load %arg9[%c0_128, %c0_129, %c8_130, %c0_131] : memref<1x10x17x64xbf16, #tpu.memory_space<vmem>>, vector<1x4x4x64xbf16>
    %c0_132 = arith.constant 0 : index
    %c0_133 = arith.constant 0 : index
    %c0_134 = arith.constant 0 : index
    %c64_135 = arith.constant 64 : index
    %99 = vector.load %arg10[%c0_132, %c0_133, %c0_134, %c64_135] : memref<1x8x8x576xbf16, #tpu.memory_space<vmem>>, vector<1x4x4x64xbf16>
    tpu.vector_store %arg10[%c0_132, %c0_133, %c0_134, %c64_135], %98 {strides = array<i32>} : memref<1x8x8x576xbf16, #tpu.memory_space<vmem>>, vector<1x4x4x64xbf16>,
    %c0_136 = arith.constant 0 : index
    %c0_137 = arith.constant 0 : index
    %c9_138 = arith.constant 9 : index
    %c0_139 = arith.constant 0 : index
    %100 = vector.load %arg9[%c0_136, %c0_137, %c9_138, %c0_139] : memref<1x10x17x64xbf16, #tpu.memory_space<vmem>>, vector<1x4x4x64xbf16>
    %c0_140 = arith.constant 0 : index
    %c0_141 = arith.constant 0 : index
    %c0_142 = arith.constant 0 : index
    %c128_143 = arith.constant 128 : index
    %101 = vector.load %arg10[%c0_140, %c0_141, %c0_142, %c128_143] : memref<1x8x8x576xbf16, #tpu.memory_space<vmem>>, vector<1x4x4x64xbf16>
    tpu.vector_store %arg10[%c0_140, %c0_141, %c0_142, %c128_143], %100 {strides = array<i32>} : memref<1x8x8x576xbf16, #tpu.memory_space<vmem>>, vector<1x4x4x64xbf16>,
    %c0_144 = arith.constant 0 : index
    %c1_145 = arith.constant 1 : index
    %c7_146 = arith.constant 7 : index
    %c0_147 = arith.constant 0 : index
    %102 = vector.load %arg9[%c0_144, %c1_145, %c7_146, %c0_147] : memref<1x10x17x64xbf16, #tpu.memory_space<vmem>>, vector<1x4x4x64xbf16>
    %c0_148 = arith.constant 0 : index
    %c0_149 = arith.constant 0 : index
    %c0_150 = arith.constant 0 : index
    %c192_151 = arith.constant 192 : index
    %103 = vector.load %arg10[%c0_148, %c0_149, %c0_150, %c192_151] : memref<1x8x8x576xbf16, #tpu.memory_space<vmem>>, vector<1x4x4x64xbf16>
    tpu.vector_store %arg10[%c0_148, %c0_149, %c0_150, %c192_151], %102 {strides = array<i32>} : memref<1x8x8x576xbf16, #tpu.memory_space<vmem>>, vector<1x4x4x64xbf16>,
    %c0_152 = arith.constant 0 : index
    %c1_153 = arith.constant 1 : index
    %c8_154 = arith.constant 8 : index
    %c0_155 = arith.constant 0 : index
    %104 = vector.load %arg9[%c0_152, %c1_153, %c8_154, %c0_155] : memref<1x10x17x64xbf16, #tpu.memory_space<vmem>>, vector<1x4x4x64xbf16>
    %c0_156 = arith.constant 0 : index
    %c0_157 = arith.constant 0 : index
    %c0_158 = arith.constant 0 : index
    %c256_159 = arith.constant 256 : index
    %105 = vector.load %arg10[%c0_156, %c0_157, %c0_158, %c256_159] : memref<1x8x8x576xbf16, #tpu.memory_space<vmem>>, vector<1x4x4x64xbf16>
    tpu.vector_store %arg10[%c0_156, %c0_157, %c0_158, %c256_159], %104 {strides = array<i32>} : memref<1x8x8x576xbf16, #tpu.memory_space<vmem>>, vector<1x4x4x64xbf16>,
    %c0_160 = arith.constant 0 : index
    %c1_161 = arith.constant 1 : index
    %c9_162 = arith.constant 9 : index
    %c0_163 = arith.constant 0 : index
    %106 = vector.load %arg9[%c0_160, %c1_161, %c9_162, %c0_163] : memref<1x10x17x64xbf16, #tpu.memory_space<vmem>>, vector<1x4x4x64xbf16>
    %c0_164 = arith.constant 0 : index
    %c0_165 = arith.constant 0 : index
    %c0_166 = arith.constant 0 : index
    %c320_167 = arith.constant 320 : index
    %107 = vector.load %arg10[%c0_164, %c0_165, %c0_166, %c320_167] : memref<1x8x8x576xbf16, #tpu.memory_space<vmem>>, vector<1x4x4x64xbf16>
    tpu.vector_store %arg10[%c0_164, %c0_165, %c0_166, %c320_167], %106 {strides = array<i32>} : memref<1x8x8x576xbf16, #tpu.memory_space<vmem>>, vector<1x4x4x64xbf16>,
    %c0_168 = arith.constant 0 : index
    %c2_169 = arith.constant 2 : index
    %c7_170 = arith.constant 7 : index
    %c0_171 = arith.constant 0 : index
    %108 = vector.load %arg9[%c0_168, %c2_169, %c7_170, %c0_171] : memref<1x10x17x64xbf16, #tpu.memory_space<vmem>>, vector<1x4x4x64xbf16>
    %c0_172 = arith.constant 0 : index
    %c0_173 = arith.constant 0 : index
    %c0_174 = arith.constant 0 : index
    %c384_175 = arith.constant 384 : index
    %109 = vector.load %arg10[%c0_172, %c0_173, %c0_174, %c384_175] : memref<1x8x8x576xbf16, #tpu.memory_space<vmem>>, vector<1x4x4x64xbf16>
    tpu.vector_store %arg10[%c0_172, %c0_173, %c0_174, %c384_175], %108 {strides = array<i32>} : memref<1x8x8x576xbf16, #tpu.memory_space<vmem>>, vector<1x4x4x64xbf16>,
    %c0_176 = arith.constant 0 : index
    %c2_177 = arith.constant 2 : index
    %c8_178 = arith.constant 8 : index
    %c0_179 = arith.constant 0 : index
    %110 = vector.load %arg9[%c0_176, %c2_177, %c8_178, %c0_179] : memref<1x10x17x64xbf16, #tpu.memory_space<vmem>>, vector<1x4x4x64xbf16>
    %c0_180 = arith.constant 0 : index
    %c0_181 = arith.constant 0 : index
    %c0_182 = arith.constant 0 : index
    %c448_183 = arith.constant 448 : index
    %111 = vector.load %arg10[%c0_180, %c0_181, %c0_182, %c448_183] : memref<1x8x8x576xbf16, #tpu.memory_space<vmem>>, vector<1x4x4x64xbf16>
    tpu.vector_store %arg10[%c0_180, %c0_181, %c0_182, %c448_183], %110 {strides = array<i32>} : memref<1x8x8x576xbf16, #tpu.memory_space<vmem>>, vector<1x4x4x64xbf16>,
    %c0_184 = arith.constant 0 : index
    %c2_185 = arith.constant 2 : index
    %c9_186 = arith.constant 9 : index
    %c0_187 = arith.constant 0 : index
    %112 = vector.load %arg9[%c0_184, %c2_185, %c9_186, %c0_187] : memref<1x10x17x64xbf16, #tpu.memory_space<vmem>>, vector<1x4x4x64xbf16>
    %c0_188 = arith.constant 0 : index
    %c0_189 = arith.constant 0 : index
    %c0_190 = arith.constant 0 : index
    %c512_191 = arith.constant 512 : index
    %113 = vector.load %arg10[%c0_188, %c0_189, %c0_190, %c512_191] : memref<1x8x8x576xbf16, #tpu.memory_space<vmem>>, vector<1x4x4x64xbf16>
    tpu.vector_store %arg10[%c0_188, %c0_189, %c0_190, %c512_191], %112 {strides = array<i32>} : memref<1x8x8x576xbf16, #tpu.memory_space<vmem>>, vector<1x4x4x64xbf16>,
    %c0_192 = arith.constant 0 : index
    %c0_193 = arith.constant 0 : index
    %c0_194 = arith.constant 0 : index
    %c0_195 = arith.constant 0 : index
    %114 = vector.load %arg10[%c0_192, %c0_193, %c0_194, %c0_195] : memref<1x8x8x576xbf16, #tpu.memory_space<vmem>>, vector<1x4x4x576xbf16>
    %115 = vector.shape_cast %114 : vector<1x4x4x576xbf16> to vector<16x576xbf16>
    %c0_196 = arith.constant 0 : index
    %c0_197 = arith.constant 0 : index
    %116 = vector.load %arg4[%c0_196, %c0_197] : memref<576x64xbf16, #tpu.memory_space<vmem>>, vector<576x64xbf16>
    %cst_198 = arith.constant dense<0.000000e+00> : vector<16x64xf32>
    %117 = tpu.matmul %115, %116, %cst_198 {dimension_numbers = #tpu.dot_dimension_numbers<[1], [0], [0], [1], [0, 0, 1, 1], [], []>} : vector<16x576xbf16>, vector<576x64xbf16>, vector<16x64xf32> -> vector<16x64xf32>
    %118 = vector.broadcast %86 : vector<1x64xf32> to vector<16x64xf32>
    %119 = arith.mulf %117, %118 : vector<16x64xf32>
    %120 = vector.broadcast %87 : vector<1x64xf32> to vector<16x64xf32>
    %121 = arith.addf %119, %120 : vector<16x64xf32>
    %cst_199 = arith.constant 0.000000e+00 : f32
    %122 = vector.broadcast %cst_199 : f32 to vector<16x64xf32>
    %123 = arith.cmpf ogt, %121, %122 : vector<16x64xf32>
    %cst_200 = arith.constant 2.000000e-01 : f32
    %124 = vector.broadcast %cst_200 : f32 to vector<16x64xf32>
    %125 = arith.mulf %124, %121 : vector<16x64xf32>
    %126 = arith.select %123, %121, %125 : vector<16x64xi1>, vector<16x64xf32>
    %127 = vector.shape_cast %126 : vector<16x64xf32> to vector<1x4x4x64xf32>
    %128 = vector.shape_cast %127 : vector<1x4x4x64xf32> to vector<2x2x4x64xf32>
    %129 = vector.extract_strided_slice %128 {offsets = [0, 0, 0, 0], sizes = [2, 1, 4, 64], strides = [1, 1, 1, 1]} : vector<2x2x4x64xf32> to vector<2x1x4x64xf32>
    %130 = vector.shape_cast %129 : vector<2x1x4x64xf32> to vector<2x4x64xf32>
    %131 = vector.extract_strided_slice %128 {offsets = [0, 1, 0, 0], sizes = [2, 1, 4, 64], strides = [1, 1, 1, 1]} : vector<2x2x4x64xf32> to vector<2x1x4x64xf32>
    %132 = vector.shape_cast %131 : vector<2x1x4x64xf32> to vector<2x4x64xf32>
    %133 = arith.maximumf %130, %132 : vector<2x4x64xf32>
    %134 = vector.shape_cast %133 : vector<2x4x64xf32> to vector<2x2x2x64xf32>
    %135 = vector.extract_strided_slice %134 {offsets = [0, 0, 0, 0], sizes = [2, 2, 1, 64], strides = [1, 1, 1, 1]} : vector<2x2x2x64xf32> to vector<2x2x1x64xf32>
    %136 = vector.shape_cast %135 : vector<2x2x1x64xf32> to vector<2x2x64xf32>
    %137 = vector.extract_strided_slice %134 {offsets = [0, 0, 1, 0], sizes = [2, 2, 1, 64], strides = [1, 1, 1, 1]} : vector<2x2x2x64xf32> to vector<2x2x1x64xf32>
    %138 = vector.shape_cast %137 : vector<2x2x1x64xf32> to vector<2x2x64xf32>
    %139 = arith.maximumf %136, %138 : vector<2x2x64xf32>
    %140 = vector.shape_cast %139 : vector<2x2x64xf32> to vector<1x2x2x64xf32>
    %141 = vector.extract_strided_slice %0 {offsets = [3, 0], sizes = [1, 64], strides = [1, 1]} : vector<4x64xf32> to vector<1x64xf32>
    %142 = vector.extract_strided_slice %1 {offsets = [3, 0], sizes = [1, 64], strides = [1, 1]} : vector<4x64xf32> to vector<1x64xf32>
    %143 = arith.truncf %140 : vector<1x2x2x64xf32> to vector<1x2x2x64xbf16>
    %c0_201 = arith.constant 0 : index
    %c1_202 = arith.constant 1 : index
    %c8_203 = arith.constant 8 : index
    %c0_204 = arith.constant 0 : index
    %144 = vector.load %arg9[%c0_201, %c1_202, %c8_203, %c0_204] : memref<1x10x17x64xbf16, #tpu.memory_space<vmem>>, vector<1x2x2x64xbf16>
    tpu.vector_store %arg9[%c0_201, %c1_202, %c8_203, %c0_204], %143 {strides = array<i32>} : memref<1x10x17x64xbf16, #tpu.memory_space<vmem>>, vector<1x2x2x64xbf16>,
    %cst_205 = arith.constant 0.000000e+00 : bf16
    %145 = vector.broadcast %cst_205 : bf16 to vector<1x1x4x64xbf16>
    %c0_206 = arith.constant 0 : index
    %c0_207 = arith.constant 0 : index
    %c7_208 = arith.constant 7 : index
    %c0_209 = arith.constant 0 : index
    %146 = vector.load %arg9[%c0_206, %c0_207, %c7_208, %c0_209] : memref<1x10x17x64xbf16, #tpu.memory_space<vmem>>, vector<1x1x4x64xbf16>
    tpu.vector_store %arg9[%c0_206, %c0_207, %c7_208, %c0_209], %145 {strides = array<i32>} : memref<1x10x17x64xbf16, #tpu.memory_space<vmem>>, vector<1x1x4x64xbf16>,
    %c0_210 = arith.constant 0 : index
    %c3 = arith.constant 3 : index
    %c7_211 = arith.constant 7 : index
    %c0_212 = arith.constant 0 : index
    %147 = vector.load %arg9[%c0_210, %c3, %c7_211, %c0_212] : memref<1x10x17x64xbf16, #tpu.memory_space<vmem>>, vector<1x1x4x64xbf16>
    tpu.vector_store %arg9[%c0_210, %c3, %c7_211, %c0_212], %145 {strides = array<i32>} : memref<1x10x17x64xbf16, #tpu.memory_space<vmem>>, vector<1x1x4x64xbf16>,
    %cst_213 = arith.constant 0.000000e+00 : bf16
    %148 = vector.broadcast %cst_213 : bf16 to vector<1x2x1x64xbf16>
    %c0_214 = arith.constant 0 : index
    %c1_215 = arith.constant 1 : index
    %c7_216 = arith.constant 7 : index
    %c0_217 = arith.constant 0 : index
    %149 = vector.load %arg9[%c0_214, %c1_215, %c7_216, %c0_217] : memref<1x10x17x64xbf16, #tpu.memory_space<vmem>>, vector<1x2x1x64xbf16>
    tpu.vector_store %arg9[%c0_214, %c1_215, %c7_216, %c0_217], %148 {strides = array<i32>} : memref<1x10x17x64xbf16, #tpu.memory_space<vmem>>, vector<1x2x1x64xbf16>,
    %c0_218 = arith.constant 0 : index
    %c1_219 = arith.constant 1 : index
    %c10 = arith.constant 10 : index
    %c0_220 = arith.constant 0 : index
    %150 = vector.load %arg9[%c0_218, %c1_219, %c10, %c0_220] : memref<1x10x17x64xbf16, #tpu.memory_space<vmem>>, vector<1x2x1x64xbf16>
    tpu.vector_store %arg9[%c0_218, %c1_219, %c10, %c0_220], %148 {strides = array<i32>} : memref<1x10x17x64xbf16, #tpu.memory_space<vmem>>, vector<1x2x1x64xbf16>,
    %c0_221 = arith.constant 0 : index
    %c0_222 = arith.constant 0 : index
    %c7_223 = arith.constant 7 : index
    %c0_224 = arith.constant 0 : index
    %151 = vector.load %arg9[%c0_221, %c0_222, %c7_223, %c0_224] : memref<1x10x17x64xbf16, #tpu.memory_space<vmem>>, vector<1x2x2x64xbf16>
    %c0_225 = arith.constant 0 : index
    %c0_226 = arith.constant 0 : index
    %c0_227 = arith.constant 0 : index
    %c0_228 = arith.constant 0 : index
    %152 = vector.load %arg10[%c0_225, %c0_226, %c0_227, %c0_228] : memref<1x8x8x576xbf16, #tpu.memory_space<vmem>>, vector<1x2x2x64xbf16>
    tpu.vector_store %arg10[%c0_225, %c0_226, %c0_227, %c0_228], %151 {strides = array<i32>} : memref<1x8x8x576xbf16, #tpu.memory_space<vmem>>, vector<1x2x2x64xbf16>,
    %c0_229 = arith.constant 0 : index
    %c0_230 = arith.constant 0 : index
    %c8_231 = arith.constant 8 : index
    %c0_232 = arith.constant 0 : index
    %153 = vector.load %arg9[%c0_229, %c0_230, %c8_231, %c0_232] : memref<1x10x17x64xbf16, #tpu.memory_space<vmem>>, vector<1x2x2x64xbf16>
    %c0_233 = arith.constant 0 : index
    %c0_234 = arith.constant 0 : index
    %c0_235 = arith.constant 0 : index
    %c64_236 = arith.constant 64 : index
    %154 = vector.load %arg10[%c0_233, %c0_234, %c0_235, %c64_236] : memref<1x8x8x576xbf16, #tpu.memory_space<vmem>>, vector<1x2x2x64xbf16>
    tpu.vector_store %arg10[%c0_233, %c0_234, %c0_235, %c64_236], %153 {strides = array<i32>} : memref<1x8x8x576xbf16, #tpu.memory_space<vmem>>, vector<1x2x2x64xbf16>,
    %c0_237 = arith.constant 0 : index
    %c0_238 = arith.constant 0 : index
    %c9_239 = arith.constant 9 : index
    %c0_240 = arith.constant 0 : index
    %155 = vector.load %arg9[%c0_237, %c0_238, %c9_239, %c0_240] : memref<1x10x17x64xbf16, #tpu.memory_space<vmem>>, vector<1x2x2x64xbf16>
    %c0_241 = arith.constant 0 : index
    %c0_242 = arith.constant 0 : index
    %c0_243 = arith.constant 0 : index
    %c128_244 = arith.constant 128 : index
    %156 = vector.load %arg10[%c0_241, %c0_242, %c0_243, %c128_244] : memref<1x8x8x576xbf16, #tpu.memory_space<vmem>>, vector<1x2x2x64xbf16>
    tpu.vector_store %arg10[%c0_241, %c0_242, %c0_243, %c128_244], %155 {strides = array<i32>} : memref<1x8x8x576xbf16, #tpu.memory_space<vmem>>, vector<1x2x2x64xbf16>,
    %c0_245 = arith.constant 0 : index
    %c1_246 = arith.constant 1 : index
    %c7_247 = arith.constant 7 : index
    %c0_248 = arith.constant 0 : index
    %157 = vector.load %arg9[%c0_245, %c1_246, %c7_247, %c0_248] : memref<1x10x17x64xbf16, #tpu.memory_space<vmem>>, vector<1x2x2x64xbf16>
    %c0_249 = arith.constant 0 : index
    %c0_250 = arith.constant 0 : index
    %c0_251 = arith.constant 0 : index
    %c192_252 = arith.constant 192 : index
    %158 = vector.load %arg10[%c0_249, %c0_250, %c0_251, %c192_252] : memref<1x8x8x576xbf16, #tpu.memory_space<vmem>>, vector<1x2x2x64xbf16>
    tpu.vector_store %arg10[%c0_249, %c0_250, %c0_251, %c192_252], %157 {strides = array<i32>} : memref<1x8x8x576xbf16, #tpu.memory_space<vmem>>, vector<1x2x2x64xbf16>,
    %c0_253 = arith.constant 0 : index
    %c1_254 = arith.constant 1 : index
    %c8_255 = arith.constant 8 : index
    %c0_256 = arith.constant 0 : index
    %159 = vector.load %arg9[%c0_253, %c1_254, %c8_255, %c0_256] : memref<1x10x17x64xbf16, #tpu.memory_space<vmem>>, vector<1x2x2x64xbf16>
    %c0_257 = arith.constant 0 : index
    %c0_258 = arith.constant 0 : index
    %c0_259 = arith.constant 0 : index
    %c256_260 = arith.constant 256 : index
    %160 = vector.load %arg10[%c0_257, %c0_258, %c0_259, %c256_260] : memref<1x8x8x576xbf16, #tpu.memory_space<vmem>>, vector<1x2x2x64xbf16>
    tpu.vector_store %arg10[%c0_257, %c0_258, %c0_259, %c256_260], %159 {strides = array<i32>} : memref<1x8x8x576xbf16, #tpu.memory_space<vmem>>, vector<1x2x2x64xbf16>,
    %c0_261 = arith.constant 0 : index
    %c1_262 = arith.constant 1 : index
    %c9_263 = arith.constant 9 : index
    %c0_264 = arith.constant 0 : index
    %161 = vector.load %arg9[%c0_261, %c1_262, %c9_263, %c0_264] : memref<1x10x17x64xbf16, #tpu.memory_space<vmem>>, vector<1x2x2x64xbf16>
    %c0_265 = arith.constant 0 : index
    %c0_266 = arith.constant 0 : index
    %c0_267 = arith.constant 0 : index
    %c320_268 = arith.constant 320 : index
    %162 = vector.load %arg10[%c0_265, %c0_266, %c0_267, %c320_268] : memref<1x8x8x576xbf16, #tpu.memory_space<vmem>>, vector<1x2x2x64xbf16>
    tpu.vector_store %arg10[%c0_265, %c0_266, %c0_267, %c320_268], %161 {strides = array<i32>} : memref<1x8x8x576xbf16, #tpu.memory_space<vmem>>, vector<1x2x2x64xbf16>,
    %c0_269 = arith.constant 0 : index
    %c2_270 = arith.constant 2 : index
    %c7_271 = arith.constant 7 : index
    %c0_272 = arith.constant 0 : index
    %163 = vector.load %arg9[%c0_269, %c2_270, %c7_271, %c0_272] : memref<1x10x17x64xbf16, #tpu.memory_space<vmem>>, vector<1x2x2x64xbf16>
    %c0_273 = arith.constant 0 : index
    %c0_274 = arith.constant 0 : index
    %c0_275 = arith.constant 0 : index
    %c384_276 = arith.constant 384 : index
    %164 = vector.load %arg10[%c0_273, %c0_274, %c0_275, %c384_276] : memref<1x8x8x576xbf16, #tpu.memory_space<vmem>>, vector<1x2x2x64xbf16>
    tpu.vector_store %arg10[%c0_273, %c0_274, %c0_275, %c384_276], %163 {strides = array<i32>} : memref<1x8x8x576xbf16, #tpu.memory_space<vmem>>, vector<1x2x2x64xbf16>,
    %c0_277 = arith.constant 0 : index
    %c2_278 = arith.constant 2 : index
    %c8_279 = arith.constant 8 : index
    %c0_280 = arith.constant 0 : index
    %165 = vector.load %arg9[%c0_277, %c2_278, %c8_279, %c0_280] : memref<1x10x17x64xbf16, #tpu.memory_space<vmem>>, vector<1x2x2x64xbf16>
    %c0_281 = arith.constant 0 : index
    %c0_282 = arith.constant 0 : index
    %c0_283 = arith.constant 0 : index
    %c448_284 = arith.constant 448 : index
    %166 = vector.load %arg10[%c0_281, %c0_282, %c0_283, %c448_284] : memref<1x8x8x576xbf16, #tpu.memory_space<vmem>>, vector<1x2x2x64xbf16>
    tpu.vector_store %arg10[%c0_281, %c0_282, %c0_283, %c448_284], %165 {strides = array<i32>} : memref<1x8x8x576xbf16, #tpu.memory_space<vmem>>, vector<1x2x2x64xbf16>,
    %c0_285 = arith.constant 0 : index
    %c2_286 = arith.constant 2 : index
    %c9_287 = arith.constant 9 : index
    %c0_288 = arith.constant 0 : index
    %167 = vector.load %arg9[%c0_285, %c2_286, %c9_287, %c0_288] : memref<1x10x17x64xbf16, #tpu.memory_space<vmem>>, vector<1x2x2x64xbf16>
    %c0_289 = arith.constant 0 : index
    %c0_290 = arith.constant 0 : index
    %c0_291 = arith.constant 0 : index
    %c512_292 = arith.constant 512 : index
    %168 = vector.load %arg10[%c0_289, %c0_290, %c0_291, %c512_292] : memref<1x8x8x576xbf16, #tpu.memory_space<vmem>>, vector<1x2x2x64xbf16>
    tpu.vector_store %arg10[%c0_289, %c0_290, %c0_291, %c512_292], %167 {strides = array<i32>} : memref<1x8x8x576xbf16, #tpu.memory_space<vmem>>, vector<1x2x2x64xbf16>,
    %c0_293 = arith.constant 0 : index
    %c0_294 = arith.constant 0 : index
    %c0_295 = arith.constant 0 : index
    %c0_296 = arith.constant 0 : index
    %169 = vector.load %arg10[%c0_293, %c0_294, %c0_295, %c0_296] : memref<1x8x8x576xbf16, #tpu.memory_space<vmem>>, vector<1x2x2x576xbf16>
    %170 = vector.shape_cast %169 : vector<1x2x2x576xbf16> to vector<4x576xbf16>
    %c0_297 = arith.constant 0 : index
    %c0_298 = arith.constant 0 : index
    %171 = vector.load %arg5[%c0_297, %c0_298] : memref<576x64xbf16, #tpu.memory_space<vmem>>, vector<576x64xbf16>
    %cst_299 = arith.constant dense<0.000000e+00> : vector<4x64xf32>
    %172 = tpu.matmul %170, %171, %cst_299 {dimension_numbers = #tpu.dot_dimension_numbers<[1], [0], [0], [1], [0, 0, 1, 1], [], []>} : vector<4x576xbf16>, vector<576x64xbf16>, vector<4x64xf32> -> vector<4x64xf32>
    %173 = vector.broadcast %141 : vector<1x64xf32> to vector<4x64xf32>
    %174 = arith.mulf %172, %173 : vector<4x64xf32>
    %175 = vector.broadcast %142 : vector<1x64xf32> to vector<4x64xf32>
    %176 = arith.addf %174, %175 : vector<4x64xf32>
    %cst_300 = arith.constant 0.000000e+00 : f32
    %177 = vector.broadcast %cst_300 : f32 to vector<4x64xf32>
    %178 = arith.cmpf ogt, %176, %177 : vector<4x64xf32>
    %cst_301 = arith.constant 2.000000e-01 : f32
    %179 = vector.broadcast %cst_301 : f32 to vector<4x64xf32>
    %180 = arith.mulf %179, %176 : vector<4x64xf32>
    %181 = arith.select %178, %176, %180 : vector<4x64xi1>, vector<4x64xf32>
    %182 = vector.shape_cast %181 : vector<4x64xf32> to vector<1x2x2x64xf32>
    %183 = vector.extract_strided_slice %182 {offsets = [0, 0, 0, 0], sizes = [1, 1, 2, 64], strides = [1, 1, 1, 1]} : vector<1x2x2x64xf32> to vector<1x1x2x64xf32>
    %184 = vector.shape_cast %183 : vector<1x1x2x64xf32> to vector<1x2x64xf32>
    %185 = vector.extract_strided_slice %182 {offsets = [0, 1, 0, 0], sizes = [1, 1, 2, 64], strides = [1, 1, 1, 1]} : vector<1x2x2x64xf32> to vector<1x1x2x64xf32>
    %186 = vector.shape_cast %185 : vector<1x1x2x64xf32> to vector<1x2x64xf32>
    %187 = arith.maximumf %184, %186 : vector<1x2x64xf32>
    %188 = vector.shape_cast %187 : vector<1x2x64xf32> to vector<1x1x2x64xf32>
    %189 = vector.extract_strided_slice %188 {offsets = [0, 0, 0, 0], sizes = [1, 1, 1, 64], strides = [1, 1, 1, 1]} : vector<1x1x2x64xf32> to vector<1x1x1x64xf32>
    %190 = vector.shape_cast %189 : vector<1x1x1x64xf32> to vector<1x1x64xf32>
    %191 = vector.extract_strided_slice %188 {offsets = [0, 0, 1, 0], sizes = [1, 1, 1, 64], strides = [1, 1, 1, 1]} : vector<1x1x2x64xf32> to vector<1x1x1x64xf32>
    %192 = vector.shape_cast %191 : vector<1x1x1x64xf32> to vector<1x1x64xf32>
    %193 = arith.maximumf %190, %192 : vector<1x1x64xf32>
    %194 = vector.shape_cast %193 : vector<1x1x64xf32> to vector<1x1x1x64xf32>
    %c0_302 = arith.constant 0 : index
    %c0_303 = arith.constant 0 : index
    %c0_304 = arith.constant 0 : index
    %c0_305 = arith.constant 0 : index
    %195 = vector.load %arg8[%c0_302, %c0_303, %c0_304, %c0_305] : memref<1x1x1x64xf32, #tpu.memory_space<vmem>>, vector<1x1x1x64xf32>
    tpu.vector_store %arg8[%c0_302, %c0_303, %c0_304, %c0_305], %194 {strides = array<i32>} : memref<1x1x1x64xf32, #tpu.memory_space<vmem>>, vector<1x1x1x64xf32>,
    return
  }
  func.func @transform_0(%arg0: i32) -> (i32, i32, i32, i32) {
    %c0_i32 = arith.constant 0 : i32
    %c0_i32_0 = arith.constant 0 : i32
    %c0_i32_1 = arith.constant 0 : i32
    %c0_i32_2 = arith.constant 0 : i32
    return %arg0, %c0_i32, %c0_i32_0, %c0_i32_1 : i32, i32, i32, i32
  }
  func.func @transform_1(%arg0: i32) -> (i32, i32) {
    %c0_i32 = arith.constant 0 : i32
    %c0_i32_0 = arith.constant 0 : i32
    %c0_i32_1 = arith.constant 0 : i32
    return %c0_i32, %c0_i32_0 : i32, i32
  }
  func.func @transform_2(%arg0: i32) -> (i32, i32) {
    %c0_i32 = arith.constant 0 : i32
    %c0_i32_0 = arith.constant 0 : i32
    %c0_i32_1 = arith.constant 0 : i32
    return %c0_i32, %c0_i32_0 : i32, i32
  }
  func.func @transform_3(%arg0: i32) -> (i32, i32) {
    %c0_i32 = arith.constant 0 : i32
    %c0_i32_0 = arith.constant 0 : i32
    %c0_i32_1 = arith.constant 0 : i32
    return %c0_i32, %c0_i32_0 : i32, i32
  }
  func.func @transform_4(%arg0: i32) -> (i32, i32) {
    %c0_i32 = arith.constant 0 : i32
    %c0_i32_0 = arith.constant 0 : i32
    %c0_i32_1 = arith.constant 0 : i32
    return %c0_i32, %c0_i32_0 : i32, i32
  }
  func.func @transform_5(%arg0: i32) -> (i32, i32) {
    %c0_i32 = arith.constant 0 : i32
    %c0_i32_0 = arith.constant 0 : i32
    %c0_i32_1 = arith.constant 0 : i32
    return %c0_i32, %c0_i32_0 : i32, i32
  }
  func.func @transform_6(%arg0: i32) -> (i32, i32) {
    %c0_i32 = arith.constant 0 : i32
    %c0_i32_0 = arith.constant 0 : i32
    %c0_i32_1 = arith.constant 0 : i32
    return %c0_i32, %c0_i32_0 : i32, i32
  }
  func.func @transform_7(%arg0: i32) -> (i32, i32, i32, i32) {
    %c0_i32 = arith.constant 0 : i32
    %c0_i32_0 = arith.constant 0 : i32
    %c0_i32_1 = arith.constant 0 : i32
    %c0_i32_2 = arith.constant 0 : i32
    return %arg0, %c0_i32, %c0_i32_0, %c0_i32_1 : i32, i32, i32, i32
  }
}

</mosaic_0001>

<llo_original>
// kernel: conv64f_mcl_forward.1
$region0: #{conv64f_mcl_forward.1}
  #allocation0 [shape = 'u32[]', space=smem, size = 0x4, offset = 0x4, fixed_abs, tag = 'smem constant byte address 0x4 - core index']
  #allocation1 [shape = 'u32[72,128]{1,0:T(1,128)}', space=vmem, size = 0x9000, scoped, tag = 'internal scratch']
  #allocation2 [shape = 'bf16[1,10,17,64]{3,2,1,0:T(8,128)(2,1)}', space=vmem, size = 0xf000, scoped, tag = 'scratch operand']
  #allocation3 [shape = 'bf16[1,8,8,576]{3,2,1,0:T(8,128)(2,1)}', space=vmem, size = 0x14000, scoped, tag = 'scratch operand']
  %s0 = inlined_call_operand.vmem [shape: bf16[2,16,16,32], index: 0, kind: input, shape index: {}]
  %s1 = inlined_call_operand.vmem [shape: bf16[32,64], index: 1, kind: input, shape index: {}]
  %s2 = inlined_call_operand.vmem [shape: bf16[576,64], index: 2, kind: input, shape index: {}]
  %s3 = inlined_call_operand.vmem [shape: bf16[576,64], index: 3, kind: input, shape index: {}]
  %s4 = inlined_call_operand.vmem [shape: bf16[576,64], index: 4, kind: input, shape index: {}]
  %s5 = inlined_call_operand.vmem [shape: f32[4,64], index: 5, kind: input, shape index: {}]
  %s6 = inlined_call_operand.vmem [shape: f32[4,64], index: 6, kind: input, shape index: {}]
  %s7 = inlined_call_operand.hbm [shape: f32[2,1,1,64], index: 7, kind: output, shape index: {}]
  %s8 = sld [smem:[#allocation0]]
  $region61: #{conv64f_mcl_forward.1} parent=0
    _
  %s10 = ssub.s32 1, %s8
  %s11 = scalar_select 0, %s10, %s8
  $region1: #{conv64f_mcl_forward.1} parent=0
    #allocation4 [shape = 'u8[1024]{0}', space=vmem, size = 0x400, scoped, tag = 'output window, operand 0']
    #allocation5 [shape = 's32[2]{0}', space=sflag, size = 0x8, scoped, tag = 'scoped memory for conv64f_mcl_forward.1']
    %12 = vsyncpa [#allocation5], 0
    %s13 = scalar_lea.sflag [#allocation5], 1
    %14 = vsyncpa %s13, 0
    loop: start=0, step=1, limit=4
    $region2: #{conv64f_mcl_forward.1} parent=1 // loop_pre_header
      _
    $region3: #{conv64f_mcl_forward.1} parent=1 // loop_header
      %s16 = sphi 0, %s20
      %p17 = scmp.ge.s32.totalorder %s16, 4
      %s26 = sphi 0, %s28
      %s29 = sphi 0, %s26
      %s30 = sphi 0, %s29
      %s46 = sphi 0, %s30
      %s50 = sphi 0, %s50
      %s52 = sphi 0, %s50
      %s53 = sphi 0, %s52
      %s67 = sphi 0, %s53
      %s71 = sphi 0, %s71
      %s73 = sphi 0, %s71
      %s74 = sphi 0, %s73
      %s88 = sphi 0, %s74
      %s92 = sphi 0, %s92
      %s94 = sphi 0, %s92
      %s95 = sphi 0, %s94
      %s109 = sphi 0, %s95
      %s113 = sphi 0, %s113
      %s115 = sphi 0, %s113
      %s116 = sphi 0, %s115
      %s130 = sphi 0, %s116
      %s134 = sphi 0, %s134
      %s136 = sphi 0, %s134
      %s137 = sphi 0, %s136
      %s151 = sphi 0, %s137
      %s155 = sphi 0, %s155
      %s157 = sphi 0, %s155
      %s158 = sphi 0, %s157
      %s172 = sphi 0, %s158
      %s178 = sphi 0, %s180
      %s181 = sphi 0, %s178
      %s182 = sphi 0, %s181
      %s198 = sphi 0, %s182
    $region4: #{conv64f_mcl_forward.1} parent=1 // loop_header_branch
      %19 = sbr.rel (%p17) target = $region8
    $region5: #{conv64f_mcl_forward.1} parent=1 // loop_body
      %s21 = ssub.s32 %s16, 1
      %s22 = ssub.s32 %s16, 2
      %s23 = sadd.s32 %s16, 1
      %s24 = ssub.s32 %s16, %s23
      %p25 = scmp.eq.s32.totalorder %s24, 0
      %s27 = sadd.s32 %s26, 1
      %s28 = scalar_select %p25, %s26, %s27
      %p31 = pneg %p25
      %p32 = scmp.eq.s32.totalorder %s16, 1
      %p33 = por %p31, %p32
      %p34 = scmp.ne.s32.totalorder %s26, %s29
      %p35 = scmp.eq.s32.totalorder %s16, 0
      %p36 = por %p34, %p35
      %p37 = scmp.ne.s32.totalorder %s26, %s29
      %p38 = scmp.eq.s32.totalorder %s21, 1
      %p39 = por %p37, %p38
      %p40 = scmp.ne.s32.totalorder %s29, %s30
      %p41 = scmp.eq.s32.totalorder %s21, 0
      %p42 = por %p40, %p41
      %p43 = scmp.ne.s32.totalorder %s29, %s30
      %p44 = scmp.eq.s32.totalorder %s22, 1
      %p45 = por %p43, %p44
      %p47 = scmp.ne.s32.totalorder %s30, %s46
      %p48 = scmp.eq.s32.totalorder %s22, 0
      %p49 = por %p47, %p48
      %s51 = sadd.s32 %s50, 1
      %p54 = scmp.eq.s32.totalorder %s16, 1
      %p55 = scmp.ne.s32.totalorder %s50, %s52
      %p56 = scmp.eq.s32.totalorder %s16, 0
      %p57 = por %p55, %p56
      %p58 = scmp.ne.s32.totalorder %s50, %s52
      %p59 = scmp.eq.s32.totalorder %s21, 1
      %p60 = por %p58, %p59
      %p61 = scmp.ne.s32.totalorder %s52, %s53
      %p62 = scmp.eq.s32.totalorder %s21, 0
      %p63 = por %p61, %p62
      %p64 = scmp.ne.s32.totalorder %s52, %s53
      %p65 = scmp.eq.s32.totalorder %s22, 1
      %p66 = por %p64, %p65
      %p68 = scmp.ne.s32.totalorder %s53, %s67
      %p69 = scmp.eq.s32.totalorder %s22, 0
      %p70 = por %p68, %p69
      %s72 = sadd.s32 %s71, 1
      %p75 = scmp.eq.s32.totalorder %s16, 1
      %p76 = scmp.ne.s32.totalorder %s71, %s73
      %p77 = scmp.eq.s32.totalorder %s16, 0
      %p78 = por %p76, %p77
      %p79 = scmp.ne.s32.totalorder %s71, %s73
      %p80 = scmp.eq.s32.totalorder %s21, 1
      %p81 = por %p79, %p80
      %p82 = scmp.ne.s32.totalorder %s73, %s74
      %p83 = scmp.eq.s32.totalorder %s21, 0
      %p84 = por %p82, %p83
      %p85 = scmp.ne.s32.totalorder %s73, %s74
      %p86 = scmp.eq.s32.totalorder %s22, 1
      %p87 = por %p85, %p86
      %p89 = scmp.ne.s32.totalorder %s74, %s88
      %p90 = scmp.eq.s32.totalorder %s22, 0
      %p91 = por %p89, %p90
      %s93 = sadd.s32 %s92, 1
      %p96 = scmp.eq.s32.totalorder %s16, 1
      %p97 = scmp.ne.s32.totalorder %s92, %s94
      %p98 = scmp.eq.s32.totalorder %s16, 0
      %p99 = por %p97, %p98
      %p100 = scmp.ne.s32.totalorder %s92, %s94
      %p101 = scmp.eq.s32.totalorder %s21, 1
      %p102 = por %p100, %p101
      %p103 = scmp.ne.s32.totalorder %s94, %s95
      %p104 = scmp.eq.s32.totalorder %s21, 0
      %p105 = por %p103, %p104
      %p106 = scmp.ne.s32.totalorder %s94, %s95
      %p107 = scmp.eq.s32.totalorder %s22, 1
      %p108 = por %p106, %p107
      %p110 = scmp.ne.s32.totalorder %s95, %s109
      %p111 = scmp.eq.s32.totalorder %s22, 0
      %p112 = por %p110, %p111
      %s114 = sadd.s32 %s113, 1
      %p117 = scmp.eq.s32.totalorder %s16, 1
      %p118 = scmp.ne.s32.totalorder %s113, %s115
      %p119 = scmp.eq.s32.totalorder %s16, 0
      %p120 = por %p118, %p119
      %p121 = scmp.ne.s32.totalorder %s113, %s115
      %p122 = scmp.eq.s32.totalorder %s21, 1
      %p123 = por %p121, %p122
      %p124 = scmp.ne.s32.totalorder %s115, %s116
      %p125 = scmp.eq.s32.totalorder %s21, 0
      %p126 = por %p124, %p125
      %p127 = scmp.ne.s32.totalorder %s115, %s116
      %p128 = scmp.eq.s32.totalorder %s22, 1
      %p129 = por %p127, %p128
      %p131 = scmp.ne.s32.totalorder %s116, %s130
      %p132 = scmp.eq.s32.totalorder %s22, 0
      %p133 = por %p131, %p132
      %s135 = sadd.s32 %s134, 1
      %p138 = scmp.eq.s32.totalorder %s16, 1
      %p139 = scmp.ne.s32.totalorder %s134, %s136
      %p140 = scmp.eq.s32.totalorder %s16, 0
      %p141 = por %p139, %p140
      %p142 = scmp.ne.s32.totalorder %s134, %s136
      %p143 = scmp.eq.s32.totalorder %s21, 1
      %p144 = por %p142, %p143
      %p145 = scmp.ne.s32.totalorder %s136, %s137
      %p146 = scmp.eq.s32.totalorder %s21, 0
      %p147 = por %p145, %p146
      %p148 = scmp.ne.s32.totalorder %s136, %s137
      %p149 = scmp.eq.s32.totalorder %s22, 1
      %p150 = por %p148, %p149
      %p152 = scmp.ne.s32.totalorder %s137, %s151
      %p153 = scmp.eq.s32.totalorder %s22, 0
      %p154 = por %p152, %p153
      %s156 = sadd.s32 %s155, 1
      %p159 = scmp.eq.s32.totalorder %s16, 1
      %p160 = scmp.ne.s32.totalorder %s155, %s157
      %p161 = scmp.eq.s32.totalorder %s16, 0
      %p162 = por %p160, %p161
      %p163 = scmp.ne.s32.totalorder %s155, %s157
      %p164 = scmp.eq.s32.totalorder %s21, 1
      %p165 = por %p163, %p164
      %p166 = scmp.ne.s32.totalorder %s157, %s158
      %p167 = scmp.eq.s32.totalorder %s21, 0
      %p168 = por %p166, %p167
      %p169 = scmp.ne.s32.totalorder %s157, %s158
      %p170 = scmp.eq.s32.totalorder %s22, 1
      %p171 = por %p169, %p170
      %p173 = scmp.ne.s32.totalorder %s158, %s172
      %p174 = scmp.eq.s32.totalorder %s22, 0
      %p175 = por %p173, %p174
      %s176 = ssub.s32 %s16, %s23
      %p177 = scmp.eq.s32.totalorder %s176, 0
      %s179 = sadd.s32 %s178, 1
      %s180 = scalar_select %p177, %s178, %s179
      %p183 = pneg %p177
      %p184 = scmp.eq.s32.totalorder %s16, 1
      %p185 = por %p183, %p184
      %p186 = scmp.ne.s32.totalorder %s178, %s181
      %p187 = scmp.eq.s32.totalorder %s16, 0
      %p188 = por %p186, %p187
      %p189 = scmp.ne.s32.totalorder %s178, %s181
      %p190 = scmp.eq.s32.totalorder %s21, 1
      %p191 = por %p189, %p190
      %p192 = scmp.ne.s32.totalorder %s181, %s182
      %p193 = scmp.eq.s32.totalorder %s21, 0
      %p194 = por %p192, %p193
      %p195 = scmp.ne.s32.totalorder %s181, %s182
      %p196 = scmp.eq.s32.totalorder %s22, 1
      %p197 = por %p195, %p196
      %p199 = scmp.ne.s32.totalorder %s182, %s198
      %p200 = scmp.eq.s32.totalorder %s22, 0
      %p201 = por %p199, %p200
      %p202 = scmp.le.s32.totalorder 1, %s16
      %p203 = scmp.lt.s32.totalorder %s16, 3
      %p204 = pnand %p202, %p203
      %p205 = pneg %p204
      // Predicated region
      $region9: #{conv64f_mcl_forward.1} parent=5 // pred_check
        _
      $region10: #{conv64f_mcl_forward.1} parent=5 // pred_check_branch
        %207 = sbr.rel (%p204) target = $region12
      $region11: #{conv64f_mcl_forward.1} parent=5 // pred_region
        %s208 = ssub.s32 %s16, 1
        // Predicated region
        $region13: #{conv64f_mcl_forward.1} parent=11 // pred_check
          %p209 = pneg %p63
        $region14: #{conv64f_mcl_forward.1} parent=11 // pred_check_branch
          %211 = sbr.rel (%p209) target = $region16
        $region15: #{conv64f_mcl_forward.1} parent=11 // pred_region
          _
        $region16: #{conv64f_mcl_forward.1} parent=11 // pred_fallthru
          _
        // Predicated region
        $region17: #{conv64f_mcl_forward.1} parent=11 // pred_check
          %p212 = pneg %p84
        $region18: #{conv64f_mcl_forward.1} parent=11 // pred_check_branch
          %214 = sbr.rel (%p212) target = $region20
        $region19: #{conv64f_mcl_forward.1} parent=11 // pred_region
          _
        $region20: #{conv64f_mcl_forward.1} parent=11 // pred_fallthru
          _
        // Predicated region
        $region21: #{conv64f_mcl_forward.1} parent=11 // pred_check
          %p215 = pneg %p105
        $region22: #{conv64f_mcl_forward.1} parent=11 // pred_check_branch
          %217 = sbr.rel (%p215) target = $region24
        $region23: #{conv64f_mcl_forward.1} parent=11 // pred_region
          _
        $region24: #{conv64f_mcl_forward.1} parent=11 // pred_fallthru
          _
        // Predicated region
        $region25: #{conv64f_mcl_forward.1} parent=11 // pred_check
          %p218 = pneg %p126
        $region26: #{conv64f_mcl_forward.1} parent=11 // pred_check_branch
          %220 = sbr.rel (%p218) target = $region28
        $region27: #{conv64f_mcl_forward.1} parent=11 // pred_region
          _
        $region28: #{conv64f_mcl_forward.1} parent=11 // pred_fallthru
          _
        // Predicated region
        $region29: #{conv64f_mcl_forward.1} parent=11 // pred_check
          %p221 = pneg %p147
        $region30: #{conv64f_mcl_forward.1} parent=11 // pred_check_branch
          %223 = sbr.rel (%p221) target = $region32
        $region31: #{conv64f_mcl_forward.1} parent=11 // pred_region
          _
        $region32: #{conv64f_mcl_forward.1} parent=11 // pred_fallthru
          _
        // Predicated region
        $region33: #{conv64f_mcl_forward.1} parent=11 // pred_check
          %p224 = pneg %p168
        $region34: #{conv64f_mcl_forward.1} parent=11 // pred_check_branch
          %226 = sbr.rel (%p224) target = $region36
        $region35: #{conv64f_mcl_forward.1} parent=11 // pred_region
          _
        $region36: #{conv64f_mcl_forward.1} parent=11 // pred_fallthru
          _
      $region12: #{conv64f_mcl_forward.1} parent=5 // pred_fallthru
        _
      %p227 = scmp.lt.s32.totalorder %s16, 2
      // Predicated region
      $region37: #{conv64f_mcl_forward.1} parent=5 // pred_check
        %p228 = pneg %p227
      $region38: #{conv64f_mcl_forward.1} parent=5 // pred_check_branch
        %230 = sbr.rel (%p228) target = $region40
      $region39: #{conv64f_mcl_forward.1} parent=5 // pred_region
        // Predicated region
        $region41: #{conv64f_mcl_forward.1} parent=39 // pred_check
          %p231 = pneg %p36
        $region42: #{conv64f_mcl_forward.1} parent=39 // pred_check_branch
          %233 = sbr.rel (%p231) target = $region44
        $region43: #{conv64f_mcl_forward.1} parent=39 // pred_region
          %p234 = scmp.lt.s32.totalorder %s16, 1
          %s235 = scalar_select %p234, %s16, 1
          %s236 = smul.addr %s235, 32
          %s237 = smul.addr %s236, 4
          %s238 = scalar_lea.vmem %s0, %s237
        $region44: #{conv64f_mcl_forward.1} parent=39 // pred_fallthru
          _
      $region40: #{conv64f_mcl_forward.1} parent=5 // pred_fallthru
        _
      %p239 = scmp.le.s32.totalorder 1, %s16
      %p240 = scmp.lt.s32.totalorder %s16, 3
      %p241 = pnand %p239, %p240
      %p242 = pneg %p241
      // Predicated region
      $region45: #{conv64f_mcl_forward.1} parent=5 // pred_check
        _
      $region46: #{conv64f_mcl_forward.1} parent=5 // pred_check_branch
        %244 = sbr.rel (%p241) target = $region48
      $region47: #{conv64f_mcl_forward.1} parent=5 // pred_region
        %s245 = ssub.s32 %s16, 1
        %p246 = scmp.lt.s32.totalorder %s21, 1
        %s247 = scalar_select %p246, %s21, 1
        %s248 = smul.addr %s247, 32
        %s249 = smul.addr %s248, 4
        %s250 = scalar_lea.vmem %s0, %s249
        %p251 = pneg %p42
        %p252 = pneg %p39
        %p253 = pneg %p63
        %p254 = pneg %p60
        %p255 = pneg %p84
        %p256 = pneg %p81
        %p257 = pneg %p105
        %p258 = pneg %p102
        %p259 = pneg %p126
        %p260 = pneg %p123
        %p261 = pneg %p147
        %p262 = pneg %p144
        %p263 = pneg %p168
        %p264 = pneg %p165
        %p265 = pneg %p194
        %p266 = pneg %p191
        %s267 = sand.u32 %s181, 1
        %s268 = scalar_lea.sflag [#allocation5], %s267
        %s269 = sand.u32 %s181, 1
        %s270 = scalar_lea.vmem [#allocation4], %s269
        %p271 = scmp.lt.s32.totalorder %s21, 1
        %s272 = scalar_select %p271, %s21, 1
        %s273 = smul.addr %s272, 32
        %s274 = smul.addr %s273, 4
        %s275 = scalar_lea.vmem %s0, %s274
        %v277 = vld [vmem:[%s5] sm:$0xf]
        %v278 = vld [vmem:[%s6] sm:$0xf]
        %v279 = vld [vmem:[%s275] sm:$0xf]
        %v280 = vld [vmem:[%s275 + $0x4] sm:$0xf]
        %v281 = vld [vmem:[%s275 + $0x8] sm:$0xf]
        %v282 = vld [vmem:[%s275 + $0xc] sm:$0xf]
        %v283 = vld [vmem:[%s275 + $0x10] sm:$0xf]
        %v284 = vld [vmem:[%s275 + $0x14] sm:$0xf]
        %v285 = vld [vmem:[%s275 + $0x18] sm:$0xf]
        %v286 = vld [vmem:[%s275 + $0x1c] sm:$0xf]
        %v287 = vld [vmem:[%s275 + $0x20] sm:$0xf]
        %v288 = vld [vmem:[%s275 + $0x24] sm:$0xf]
        %v289 = vld [vmem:[%s275 + $0x28] sm:$0xf]
        %v290 = vld [vmem:[%s275 + $0x2c] sm:$0xf]
        %v291 = vld [vmem:[%s275 + $0x30] sm:$0xf]
        %v292 = vld [vmem:[%s275 + $0x34] sm:$0xf]
        %v293 = vld [vmem:[%s275 + $0x38] sm:$0xf]
        %v294 = vld [vmem:[%s275 + $0x3c] sm:$0xf]
        %v295 = vld [vmem:[%s275 + $0x40] sm:$0xf]
        %v296 = vld [vmem:[%s275 + $0x44] sm:$0xf]
        %v297 = vld [vmem:[%s275 + $0x48] sm:$0xf]
        %v298 = vld [vmem:[%s275 + $0x4c] sm:$0xf]
        %v299 = vld [vmem:[%s275 + $0x50] sm:$0xf]
        %v300 = vld [vmem:[%s275 + $0x54] sm:$0xf]
        %v301 = vld [vmem:[%s275 + $0x58] sm:$0xf]
        %v302 = vld [vmem:[%s275 + $0x5c] sm:$0xf]
        %v303 = vld [vmem:[%s275 + $0x60] sm:$0xf]
        %v304 = vld [vmem:[%s275 + $0x64] sm:$0xf]
        %v305 = vld [vmem:[%s275 + $0x68] sm:$0xf]
        %v306 = vld [vmem:[%s275 + $0x6c] sm:$0xf]
        %v307 = vld [vmem:[%s275 + $0x70] sm:$0xf]
        %v308 = vld [vmem:[%s275 + $0x74] sm:$0xf]
        %v309 = vld [vmem:[%s275 + $0x78] sm:$0xf]
        %v310 = vld [vmem:[%s275 + $0x7c] sm:$0xf]
        %v311 = vld [vmem:[%s1] sm:$0xf]
        %v312 = vld [vmem:[%s1 + $0x4] sm:$0xf]
        %v313 = vld [vmem:[%s1 + $0x8] sm:$0xf]
        %v314 = vld [vmem:[%s1 + $0xc] sm:$0xf]
        %v347 = vunpack.c.l.b16 %v279
        %v348 = vunpack.c.l.b16 %v280
        %v349 = vunpack.c.l.b16 %v281
        %v350 = vunpack.c.l.b16 %v282
        %v351 = vunpack.c.l.b16 %v283
        %v352 = vunpack.c.l.b16 %v284
        %v353 = vunpack.c.l.b16 %v285
        %v354 = vunpack.c.l.b16 %v286
        %v355 = vunpack.c.l.b16 %v287
        %v356 = vunpack.c.l.b16 %v288
        %v357 = vunpack.c.l.b16 %v289
        %v358 = vunpack.c.l.b16 %v290
        %v359 = vunpack.c.l.b16 %v291
        %v360 = vunpack.c.l.b16 %v292
        %v361 = vunpack.c.l.b16 %v293
        %v362 = vunpack.c.l.b16 %v294
        %v363 = vunpack.c.l.b16 %v295
        %v364 = vunpack.c.l.b16 %v296
        %v365 = vunpack.c.l.b16 %v297
        %v366 = vunpack.c.l.b16 %v298
        %v367 = vunpack.c.l.b16 %v299
        %v368 = vunpack.c.l.b16 %v300
        %v369 = vunpack.c.l.b16 %v301
        %v370 = vunpack.c.l.b16 %v302
        %v371 = vunpack.c.l.b16 %v303
        %v372 = vunpack.c.l.b16 %v304
        %v373 = vunpack.c.l.b16 %v305
        %v374 = vunpack.c.l.b16 %v306
        %v375 = vunpack.c.l.b16 %v307
        %v376 = vunpack.c.l.b16 %v308
        %v377 = vunpack.c.l.b16 %v309
        %v378 = vunpack.c.l.b16 %v310
        %v379 = vpack.c.b16 %v348, %v347
        %v380 = vpack.c.b16 %v350, %v349
        %v381 = vpack.c.b16 %v352, %v351
        %v382 = vpack.c.b16 %v354, %v353
        %v383 = vpack.c.b16 %v356, %v355
        %v384 = vpack.c.b16 %v358, %v357
        %v385 = vpack.c.b16 %v360, %v359
        %v386 = vpack.c.b16 %v362, %v361
        %v387 = vpack.c.b16 %v364, %v363
        %v388 = vpack.c.b16 %v366, %v365
        %v389 = vpack.c.b16 %v368, %v367
        %v390 = vpack.c.b16 %v370, %v369
        %v391 = vpack.c.b16 %v372, %v371
        %v392 = vpack.c.b16 %v374, %v373
        %v393 = vpack.c.b16 %v376, %v375
        %v394 = vpack.c.b16 %v378, %v377
        %v399 = vunpack.c.l.b16 %v311
        %v400 = vunpack.c.l.b16 %v312
        %v401 = vunpack.c.l.b16 %v313
        %v402 = vunpack.c.l.b16 %v314
        %v403 = vpack.c.b16 %v400, %v399
        %v404 = vpack.c.b16 %v402, %v401
        %vm407 = vcmask 261120
        %v409 = vsel %vm407, %v379, 0
        %v412 = vsel %vm407, %v380, 0
        %v415 = vsel %vm407, %v381, 0
        %v418 = vsel %vm407, %v382, 0
        %v421 = vsel %vm407, %v383, 0
        %v424 = vsel %vm407, %v384, 0
        %v427 = vsel %vm407, %v385, 0
        %v430 = vsel %vm407, %v386, 0
        %v433 = vsel %vm407, %v387, 0
        %v436 = vsel %vm407, %v388, 0
        %v439 = vsel %vm407, %v389, 0
        %v442 = vsel %vm407, %v390, 0
        %v445 = vsel %vm407, %v391, 0
        %v448 = vsel %vm407, %v392, 0
        %v451 = vsel %vm407, %v393, 0
        %v454 = vsel %vm407, %v394, 0
        %456 = vmatpush.bf16.msra.mxu0 0
        %457 = vmatpush.bf16.msra.mxu0 0
        %458 = vmatpush.bf16.msra.mxu0 0
        %459 = vmatpush.bf16.msra.mxu0 0
        %460 = vmatpush.bf16.msra.mxu0 0
        %461 = vmatpush.bf16.msra.mxu0 0
        %462 = vmatpush.bf16.msra.mxu0 %v404
        %463 = vmatpush.bf16.msra.mxu0 %v403
        %464 = vmatmul.bf16.gmra.mxu0 %v409
        %v465 = vpop.f32.mrf.mxu0
        %v466 = vadd.f32 0.0, %v465
        %v467 = vpop.f32.mrf.mxu0
        %v468 = vadd.f32 0.0, %v467
        %469 = vmatmul.bf16.gmra.mxu0 %v412
        %v470 = vpop.f32.mrf.mxu0
        %v471 = vadd.f32 0.0, %v470
        %v472 = vpop.f32.mrf.mxu0
        %v473 = vadd.f32 0.0, %v472
        %474 = vmatmul.bf16.gmra.mxu0 %v415
        %v475 = vpop.f32.mrf.mxu0
        %v476 = vadd.f32 0.0, %v475
        %v477 = vpop.f32.mrf.mxu0
        %v478 = vadd.f32 0.0, %v477
        %479 = vmatmul.bf16.gmra.mxu0 %v418
        %v480 = vpop.f32.mrf.mxu0
        %v481 = vadd.f32 0.0, %v480
        %v482 = vpop.f32.mrf.mxu0
        %v483 = vadd.f32 0.0, %v482
        %484 = vmatmul.bf16.gmra.mxu0 %v421
        %v485 = vpop.f32.mrf.mxu0
        %v486 = vadd.f32 0.0, %v485
        %v487 = vpop.f32.mrf.mxu0
        %v488 = vadd.f32 0.0, %v487
        %489 = vmatmul.bf16.gmra.mxu0 %v424
        %v490 = vpop.f32.mrf.mxu0
        %v491 = vadd.f32 0.0, %v490
        %v492 = vpop.f32.mrf.mxu0
        %v493 = vadd.f32 0.0, %v492
        %494 = vmatmul.bf16.gmra.mxu0 %v427
        %v495 = vpop.f32.mrf.mxu0
        %v496 = vadd.f32 0.0, %v495
        %v497 = vpop.f32.mrf.mxu0
        %v498 = vadd.f32 0.0, %v497
        %499 = vmatmul.bf16.gmra.mxu0 %v430
        %v500 = vpop.f32.mrf.mxu0
        %v501 = vadd.f32 0.0, %v500
        %v502 = vpop.f32.mrf.mxu0
        %v503 = vadd.f32 0.0, %v502
        %504 = vmatmul.bf16.gmra.mxu0 %v433
        %v505 = vpop.f32.mrf.mxu0
        %v506 = vadd.f32 0.0, %v505
        %v507 = vpop.f32.mrf.mxu0
        %v508 = vadd.f32 0.0, %v507
        %509 = vmatmul.bf16.gmra.mxu0 %v436
        %v510 = vpop.f32.mrf.mxu0
        %v511 = vadd.f32 0.0, %v510
        %v512 = vpop.f32.mrf.mxu0
        %v513 = vadd.f32 0.0, %v512
        %514 = vmatmul.bf16.gmra.mxu0 %v439
        %v515 = vpop.f32.mrf.mxu0
        %v516 = vadd.f32 0.0, %v515
        %v517 = vpop.f32.mrf.mxu0
        %v518 = vadd.f32 0.0, %v517
        %519 = vmatmul.bf16.gmra.mxu0 %v442
        %v520 = vpop.f32.mrf.mxu0
        %v521 = vadd.f32 0.0, %v520
        %v522 = vpop.f32.mrf.mxu0
        %v523 = vadd.f32 0.0, %v522
        %524 = vmatmul.bf16.gmra.mxu0 %v445
        %v525 = vpop.f32.mrf.mxu0
        %v526 = vadd.f32 0.0, %v525
        %v527 = vpop.f32.mrf.mxu0
        %v528 = vadd.f32 0.0, %v527
        %529 = vmatmul.bf16.gmra.mxu0 %v448
        %v530 = vpop.f32.mrf.mxu0
        %v531 = vadd.f32 0.0, %v530
        %v532 = vpop.f32.mrf.mxu0
        %v533 = vadd.f32 0.0, %v532
        %534 = vmatmul.bf16.gmra.mxu0 %v451
        %v535 = vpop.f32.mrf.mxu0
        %v536 = vadd.f32 0.0, %v535
        %v537 = vpop.f32.mrf.mxu0
        %v538 = vadd.f32 0.0, %v537
        %539 = vmatmul.bf16.gmra.mxu0 %v454
        %v540 = vpop.f32.mrf.mxu0
        %v541 = vadd.f32 0.0, %v540
        %v542 = vpop.f32.mrf.mxu0
        %v543 = vadd.f32 0.0, %v542
        %544 = vdwg.mxu0
        %v545 = vperm.slane %v277, 0
        %v546 = vmul.f32 %v466, %v545
        %v547 = vmul.f32 %v468, %v545
        %v548 = vmul.f32 %v471, %v545
        %v549 = vmul.f32 %v473, %v545
        %v550 = vmul.f32 %v476, %v545
        %v551 = vmul.f32 %v478, %v545
        %v552 = vmul.f32 %v481, %v545
        %v553 = vmul.f32 %v483, %v545
        %v554 = vmul.f32 %v486, %v545
        %v555 = vmul.f32 %v488, %v545
        %v556 = vmul.f32 %v491, %v545
        %v557 = vmul.f32 %v493, %v545
        %v558 = vmul.f32 %v496, %v545
        %v559 = vmul.f32 %v498, %v545
        %v560 = vmul.f32 %v501, %v545
        %v561 = vmul.f32 %v503, %v545
        %v562 = vmul.f32 %v506, %v545
        %v563 = vmul.f32 %v508, %v545
        %v564 = vmul.f32 %v511, %v545
        %v565 = vmul.f32 %v513, %v545
        %v566 = vmul.f32 %v516, %v545
        %v567 = vmul.f32 %v518, %v545
        %v568 = vmul.f32 %v521, %v545
        %v569 = vmul.f32 %v523, %v545
        %v570 = vmul.f32 %v526, %v545
        %v571 = vmul.f32 %v528, %v545
        %v572 = vmul.f32 %v531, %v545
        %v573 = vmul.f32 %v533, %v545
        %v574 = vmul.f32 %v536, %v545
        %v575 = vmul.f32 %v538, %v545
        %v576 = vmul.f32 %v541, %v545
        %v577 = vmul.f32 %v543, %v545
        %v578 = vperm.slane %v278, 0
        %v579 = vadd.f32 %v546, %v578
        %v580 = vadd.f32 %v547, %v578
        %v581 = vadd.f32 %v548, %v578
        %v582 = vadd.f32 %v549, %v578
        %v583 = vadd.f32 %v550, %v578
        %v584 = vadd.f32 %v551, %v578
        %v585 = vadd.f32 %v552, %v578
        %v586 = vadd.f32 %v553, %v578
        %v587 = vadd.f32 %v554, %v578
        %v588 = vadd.f32 %v555, %v578
        %v589 = vadd.f32 %v556, %v578
        %v590 = vadd.f32 %v557, %v578
        %v591 = vadd.f32 %v558, %v578
        %v592 = vadd.f32 %v559, %v578
        %v593 = vadd.f32 %v560, %v578
        %v594 = vadd.f32 %v561, %v578
        %v595 = vadd.f32 %v562, %v578
        %v596 = vadd.f32 %v563, %v578
        %v597 = vadd.f32 %v564, %v578
        %v598 = vadd.f32 %v565, %v578
        %v599 = vadd.f32 %v566, %v578
        %v600 = vadd.f32 %v567, %v578
        %v601 = vadd.f32 %v568, %v578
        %v602 = vadd.f32 %v569, %v578
        %v603 = vadd.f32 %v570, %v578
        %v604 = vadd.f32 %v571, %v578
        %v605 = vadd.f32 %v572, %v578
        %v606 = vadd.f32 %v573, %v578
        %v607 = vadd.f32 %v574, %v578
        %v608 = vadd.f32 %v575, %v578
        %v609 = vadd.f32 %v576, %v578
        %v610 = vadd.f32 %v577, %v578
        %vm611 = vcmp.gt.f32.partialorder %v579, 0.0
        %vm612 = vcmp.gt.f32.partialorder %v580, 0.0
        %vm613 = vcmp.gt.f32.partialorder %v581, 0.0
        %vm614 = vcmp.gt.f32.partialorder %v582, 0.0
        %vm615 = vcmp.gt.f32.partialorder %v583, 0.0
        %vm616 = vcmp.gt.f32.partialorder %v584, 0.0
        %vm617 = vcmp.gt.f32.partialorder %v585, 0.0
        %vm618 = vcmp.gt.f32.partialorder %v586, 0.0
        %vm619 = vcmp.gt.f32.partialorder %v587, 0.0
        %vm620 = vcmp.gt.f32.partialorder %v588, 0.0
        %vm621 = vcmp.gt.f32.partialorder %v589, 0.0
        %vm622 = vcmp.gt.f32.partialorder %v590, 0.0
        %vm623 = vcmp.gt.f32.partialorder %v591, 0.0
        %vm624 = vcmp.gt.f32.partialorder %v592, 0.0
        %vm625 = vcmp.gt.f32.partialorder %v593, 0.0
        %vm626 = vcmp.gt.f32.partialorder %v594, 0.0
        %vm627 = vcmp.gt.f32.partialorder %v595, 0.0
        %vm628 = vcmp.gt.f32.partialorder %v596, 0.0
        %vm629 = vcmp.gt.f32.partialorder %v597, 0.0
        %vm630 = vcmp.gt.f32.partialorder %v598, 0.0
        %vm631 = vcmp.gt.f32.partialorder %v599, 0.0
        %vm632 = vcmp.gt.f32.partialorder %v600, 0.0
        %vm633 = vcmp.gt.f32.partialorder %v601, 0.0
        %vm634 = vcmp.gt.f32.partialorder %v602, 0.0
        %vm635 = vcmp.gt.f32.partialorder %v603, 0.0
        %vm636 = vcmp.gt.f32.partialorder %v604, 0.0
        %vm637 = vcmp.gt.f32.partialorder %v605, 0.0
        %vm638 = vcmp.gt.f32.partialorder %v606, 0.0
        %vm639 = vcmp.gt.f32.partialorder %v607, 0.0
        %vm640 = vcmp.gt.f32.partialorder %v608, 0.0
        %vm641 = vcmp.gt.f32.partialorder %v609, 0.0
        %vm642 = vcmp.gt.f32.partialorder %v610, 0.0
        %v643 = vmul.f32 %v579, 0.2
        %v644 = vmul.f32 %v580, 0.2
        %v645 = vmul.f32 %v581, 0.2
        %v646 = vmul.f32 %v582, 0.2
        %v647 = vmul.f32 %v583, 0.2
        %v648 = vmul.f32 %v584, 0.2
        %v649 = vmul.f32 %v585, 0.2
        %v650 = vmul.f32 %v586, 0.2
        %v651 = vmul.f32 %v587, 0.2
        %v652 = vmul.f32 %v588, 0.2
        %v653 = vmul.f32 %v589, 0.2
        %v654 = vmul.f32 %v590, 0.2
        %v655 = vmul.f32 %v591, 0.2
        %v656 = vmul.f32 %v592, 0.2
        %v657 = vmul.f32 %v593, 0.2
        %v658 = vmul.f32 %v594, 0.2
        %v659 = vmul.f32 %v595, 0.2
        %v660 = vmul.f32 %v596, 0.2
        %v661 = vmul.f32 %v597, 0.2
        %v662 = vmul.f32 %v598, 0.2
        %v663 = vmul.f32 %v599, 0.2
        %v664 = vmul.f32 %v600, 0.2
        %v665 = vmul.f32 %v601, 0.2
        %v666 = vmul.f32 %v602, 0.2
        %v667 = vmul.f32 %v603, 0.2
        %v668 = vmul.f32 %v604, 0.2
        %v669 = vmul.f32 %v605, 0.2
        %v670 = vmul.f32 %v606, 0.2
        %v671 = vmul.f32 %v607, 0.2
        %v672 = vmul.f32 %v608, 0.2
        %v673 = vmul.f32 %v609, 0.2
        %v674 = vmul.f32 %v610, 0.2
        %v675 = vsel %vm611, %v579, %v643
        %v676 = vsel %vm612, %v580, %v644
        %v677 = vsel %vm613, %v581, %v645
        %v678 = vsel %vm614, %v582, %v646
        %v679 = vsel %vm615, %v583, %v647
        %v680 = vsel %vm616, %v584, %v648
        %v681 = vsel %vm617, %v585, %v649
        %v682 = vsel %vm618, %v586, %v650
        %v683 = vsel %vm619, %v587, %v651
        %v684 = vsel %vm620, %v588, %v652
        %v685 = vsel %vm621, %v589, %v653
        %v686 = vsel %vm622, %v590, %v654
        %v687 = vsel %vm623, %v591, %v655
        %v688 = vsel %vm624, %v592, %v656
        %v689 = vsel %vm625, %v593, %v657
        %v690 = vsel %vm626, %v594, %v658
        %v691 = vsel %vm627, %v595, %v659
        %v692 = vsel %vm628, %v596, %v660
        %v693 = vsel %vm629, %v597, %v661
        %v694 = vsel %vm630, %v598, %v662
        %v695 = vsel %vm631, %v599, %v663
        %v696 = vsel %vm632, %v600, %v664
        %v697 = vsel %vm633, %v601, %v665
        %v698 = vsel %vm634, %v602, %v666
        %v699 = vsel %vm635, %v603, %v667
        %v700 = vsel %vm636, %v604, %v668
        %v701 = vsel %vm637, %v605, %v669
        %v702 = vsel %vm638, %v606, %v670
        %v703 = vsel %vm639, %v607, %v671
        %v704 = vsel %vm640, %v608, %v672
        %v705 = vsel %vm641, %v609, %v673
        %v706 = vsel %vm642, %v610, %v674
        %v707 = vmax.f32 %v675, %v677
        %v708 = vmax.f32 %v676, %v678
        %v709 = vmax.f32 %v679, %v681
        %v710 = vmax.f32 %v680, %v682
        %v711 = vmax.f32 %v683, %v685
        %v712 = vmax.f32 %v684, %v686
        %v713 = vmax.f32 %v687, %v689
        %v714 = vmax.f32 %v688, %v690
        %v715 = vmax.f32 %v691, %v693
        %v716 = vmax.f32 %v692, %v694
        %v717 = vmax.f32 %v695, %v697
        %v718 = vmax.f32 %v696, %v698
        %v719 = vmax.f32 %v699, %v701
        %v720 = vmax.f32 %v700, %v702
        %v721 = vmax.f32 %v703, %v705
        %v722 = vmax.f32 %v704, %v706
        %v739 = vrot.slane %v707, 2
        %v740 = vrot.slane %v707, 4
        %v741 = vrot.slane %v707, 6
        %v742 = vrot.slane %v708, 2
        %v743 = vrot.slane %v708, 4
        %v744 = vrot.slane %v708, 6
        %v745 = vrot.slane %v709, 2
        %v746 = vrot.slane %v709, 4
        %v747 = vrot.slane %v709, 6
        %v748 = vrot.slane %v710, 2
        %v749 = vrot.slane %v710, 4
        %v750 = vrot.slane %v710, 6
        %v751 = vrot.slane %v711, 2
        %v752 = vrot.slane %v711, 4
        %v753 = vrot.slane %v711, 6
        %v754 = vrot.slane %v712, 2
        %v755 = vrot.slane %v712, 4
        %v756 = vrot.slane %v712, 6
        %v757 = vrot.slane %v713, 2
        %v758 = vrot.slane %v713, 4
        %v759 = vrot.slane %v713, 6
        %v760 = vrot.slane %v714, 2
        %v761 = vrot.slane %v714, 4
        %v762 = vrot.slane %v714, 6
        %v763 = vrot.slane %v715, 2
        %v764 = vrot.slane %v715, 4
        %v765 = vrot.slane %v715, 6
        %v766 = vrot.slane %v716, 2
        %v767 = vrot.slane %v716, 4
        %v768 = vrot.slane %v716, 6
        %v769 = vrot.slane %v717, 2
        %v770 = vrot.slane %v717, 4
        %v771 = vrot.slane %v717, 6
        %v772 = vrot.slane %v718, 2
        %v773 = vrot.slane %v718, 4
        %v774 = vrot.slane %v718, 6
        %v775 = vrot.slane %v719, 2
        %v776 = vrot.slane %v719, 4
        %v777 = vrot.slane %v719, 6
        %v778 = vrot.slane %v720, 2
        %v779 = vrot.slane %v720, 4
        %v780 = vrot.slane %v720, 6
        %v781 = vrot.slane %v721, 2
        %v782 = vrot.slane %v721, 4
        %v783 = vrot.slane %v721, 6
        %v784 = vrot.slane %v722, 2
        %v785 = vrot.slane %v722, 4
        %v786 = vrot.slane %v722, 6
        %v835 = vrot.slane %v707, 7
        %v836 = vrot.slane %v835, 2
        %v837 = vrot.slane %v739, 7
        %v838 = vrot.slane %v837, 2
        %v839 = vrot.slane %v740, 7
        %v840 = vrot.slane %v839, 2
        %v841 = vrot.slane %v741, 7
        %v842 = vrot.slane %v841, 2
        %v843 = vrot.slane %v708, 7
        %v844 = vrot.slane %v843, 2
        %v845 = vrot.slane %v742, 7
        %v846 = vrot.slane %v845, 2
        %v847 = vrot.slane %v743, 7
        %v848 = vrot.slane %v847, 2
        %v849 = vrot.slane %v744, 7
        %v850 = vrot.slane %v849, 2
        %v851 = vrot.slane %v709, 7
        %v852 = vrot.slane %v851, 2
        %v853 = vrot.slane %v745, 7
        %v854 = vrot.slane %v853, 2
        %v855 = vrot.slane %v746, 7
        %v856 = vrot.slane %v855, 2
        %v857 = vrot.slane %v747, 7
        %v858 = vrot.slane %v857, 2
        %v859 = vrot.slane %v710, 7
        %v860 = vrot.slane %v859, 2
        %v861 = vrot.slane %v748, 7
        %v862 = vrot.slane %v861, 2
        %v863 = vrot.slane %v749, 7
        %v864 = vrot.slane %v863, 2
        %v865 = vrot.slane %v750, 7
        %v866 = vrot.slane %v865, 2
        %v867 = vrot.slane %v711, 7
        %v868 = vrot.slane %v867, 2
        %v869 = vrot.slane %v751, 7
        %v870 = vrot.slane %v869, 2
        %v871 = vrot.slane %v752, 7
        %v872 = vrot.slane %v871, 2
        %v873 = vrot.slane %v753, 7
        %v874 = vrot.slane %v873, 2
        %v875 = vrot.slane %v712, 7
        %v876 = vrot.slane %v875, 2
        %v877 = vrot.slane %v754, 7
        %v878 = vrot.slane %v877, 2
        %v879 = vrot.slane %v755, 7
        %v880 = vrot.slane %v879, 2
        %v881 = vrot.slane %v756, 7
        %v882 = vrot.slane %v881, 2
        %v883 = vrot.slane %v713, 7
        %v884 = vrot.slane %v883, 2
        %v885 = vrot.slane %v757, 7
        %v886 = vrot.slane %v885, 2
        %v887 = vrot.slane %v758, 7
        %v888 = vrot.slane %v887, 2
        %v889 = vrot.slane %v759, 7
        %v890 = vrot.slane %v889, 2
        %v891 = vrot.slane %v714, 7
        %v892 = vrot.slane %v891, 2
        %v893 = vrot.slane %v760, 7
        %v894 = vrot.slane %v893, 2
        %v895 = vrot.slane %v761, 7
        %v896 = vrot.slane %v895, 2
        %v897 = vrot.slane %v762, 7
        %v898 = vrot.slane %v897, 2
        %v899 = vrot.slane %v715, 7
        %v900 = vrot.slane %v899, 2
        %v901 = vrot.slane %v763, 7
        %v902 = vrot.slane %v901, 2
        %v903 = vrot.slane %v764, 7
        %v904 = vrot.slane %v903, 2
        %v905 = vrot.slane %v765, 7
        %v906 = vrot.slane %v905, 2
        %v907 = vrot.slane %v716, 7
        %v908 = vrot.slane %v907, 2
        %v909 = vrot.slane %v766, 7
        %v910 = vrot.slane %v909, 2
        %v911 = vrot.slane %v767, 7
        %v912 = vrot.slane %v911, 2
        %v913 = vrot.slane %v768, 7
        %v914 = vrot.slane %v913, 2
        %v915 = vrot.slane %v717, 7
        %v916 = vrot.slane %v915, 2
        %v917 = vrot.slane %v769, 7
        %v918 = vrot.slane %v917, 2
        %v919 = vrot.slane %v770, 7
        %v920 = vrot.slane %v919, 2
        %v921 = vrot.slane %v771, 7
        %v922 = vrot.slane %v921, 2
        %v923 = vrot.slane %v718, 7
        %v924 = vrot.slane %v923, 2
        %v925 = vrot.slane %v772, 7
        %v926 = vrot.slane %v925, 2
        %v927 = vrot.slane %v773, 7
        %v928 = vrot.slane %v927, 2
        %v929 = vrot.slane %v774, 7
        %v930 = vrot.slane %v929, 2
        %v931 = vrot.slane %v719, 7
        %v932 = vrot.slane %v931, 2
        %v933 = vrot.slane %v775, 7
        %v934 = vrot.slane %v933, 2
        %v935 = vrot.slane %v776, 7
        %v936 = vrot.slane %v935, 2
        %v937 = vrot.slane %v777, 7
        %v938 = vrot.slane %v937, 2
        %v939 = vrot.slane %v720, 7
        %v940 = vrot.slane %v939, 2
        %v941 = vrot.slane %v778, 7
        %v942 = vrot.slane %v941, 2
        %v943 = vrot.slane %v779, 7
        %v944 = vrot.slane %v943, 2
        %v945 = vrot.slane %v780, 7
        %v946 = vrot.slane %v945, 2
        %v947 = vrot.slane %v721, 7
        %v948 = vrot.slane %v947, 2
        %v949 = vrot.slane %v781, 7
        %v950 = vrot.slane %v949, 2
        %v951 = vrot.slane %v782, 7
        %v952 = vrot.slane %v951, 2
        %v953 = vrot.slane %v783, 7
        %v954 = vrot.slane %v953, 2
        %v955 = vrot.slane %v722, 7
        %v956 = vrot.slane %v955, 2
        %v957 = vrot.slane %v784, 7
        %v958 = vrot.slane %v957, 2
        %v959 = vrot.slane %v785, 7
        %v960 = vrot.slane %v959, 2
        %v961 = vrot.slane %v786, 7
        %v962 = vrot.slane %v961, 2
        %v1027 = vmax.f32 %v707, %v836
        %v1028 = vmax.f32 %v739, %v838
        %v1029 = vmax.f32 %v740, %v840
        %v1030 = vmax.f32 %v741, %v842
        %v1031 = vmax.f32 %v708, %v844
        %v1032 = vmax.f32 %v742, %v846
        %v1033 = vmax.f32 %v743, %v848
        %v1034 = vmax.f32 %v744, %v850
        %v1035 = vmax.f32 %v709, %v852
        %v1036 = vmax.f32 %v745, %v854
        %v1037 = vmax.f32 %v746, %v856
        %v1038 = vmax.f32 %v747, %v858
        %v1039 = vmax.f32 %v710, %v860
        %v1040 = vmax.f32 %v748, %v862
        %v1041 = vmax.f32 %v749, %v864
        %v1042 = vmax.f32 %v750, %v866
        %v1043 = vmax.f32 %v711, %v868
        %v1044 = vmax.f32 %v751, %v870
        %v1045 = vmax.f32 %v752, %v872
        %v1046 = vmax.f32 %v753, %v874
        %v1047 = vmax.f32 %v712, %v876
        %v1048 = vmax.f32 %v754, %v878
        %v1049 = vmax.f32 %v755, %v880
        %v1050 = vmax.f32 %v756, %v882
        %v1051 = vmax.f32 %v713, %v884
        %v1052 = vmax.f32 %v757, %v886
        %v1053 = vmax.f32 %v758, %v888
        %v1054 = vmax.f32 %v759, %v890
        %v1055 = vmax.f32 %v714, %v892
        %v1056 = vmax.f32 %v760, %v894
        %v1057 = vmax.f32 %v761, %v896
        %v1058 = vmax.f32 %v762, %v898
        %v1059 = vmax.f32 %v715, %v900
        %v1060 = vmax.f32 %v763, %v902
        %v1061 = vmax.f32 %v764, %v904
        %v1062 = vmax.f32 %v765, %v906
        %v1063 = vmax.f32 %v716, %v908
        %v1064 = vmax.f32 %v766, %v910
        %v1065 = vmax.f32 %v767, %v912
        %v1066 = vmax.f32 %v768, %v914
        %v1067 = vmax.f32 %v717, %v916
        %v1068 = vmax.f32 %v769, %v918
        %v1069 = vmax.f32 %v770, %v920
        %v1070 = vmax.f32 %v771, %v922
        %v1071 = vmax.f32 %v718, %v924
        %v1072 = vmax.f32 %v772, %v926
        %v1073 = vmax.f32 %v773, %v928
        %v1074 = vmax.f32 %v774, %v930
        %v1075 = vmax.f32 %v719, %v932
        %v1076 = vmax.f32 %v775, %v934
        %v1077 = vmax.f32 %v776, %v936
        %v1078 = vmax.f32 %v777, %v938
        %v1079 = vmax.f32 %v720, %v940
        %v1080 = vmax.f32 %v778, %v942
        %v1081 = vmax.f32 %v779, %v944
        %v1082 = vmax.f32 %v780, %v946
        %v1083 = vmax.f32 %v721, %v948
        %v1084 = vmax.f32 %v781, %v950
        %v1085 = vmax.f32 %v782, %v952
        %v1086 = vmax.f32 %v783, %v954
        %v1087 = vmax.f32 %v722, %v956
        %v1088 = vmax.f32 %v784, %v958
        %v1089 = vmax.f32 %v785, %v960
        %v1090 = vmax.f32 %v786, %v962
        %v1091 = vpack.c.bf16 %v1027, %v1027
        %v1092 = vpack.c.bf16 %v1028, %v1028
        %v1093 = vpack.c.bf16 %v1029, %v1029
        %v1094 = vpack.c.bf16 %v1030, %v1030
        %v1095 = vpack.c.bf16 %v1031, %v1031
        %v1096 = vpack.c.bf16 %v1032, %v1032
        %v1097 = vpack.c.bf16 %v1033, %v1033
        %v1098 = vpack.c.bf16 %v1034, %v1034
        %v1099 = vpack.c.bf16 %v1035, %v1035
        %v1100 = vpack.c.bf16 %v1036, %v1036
        %v1101 = vpack.c.bf16 %v1037, %v1037
        %v1102 = vpack.c.bf16 %v1038, %v1038
        %v1103 = vpack.c.bf16 %v1039, %v1039
        %v1104 = vpack.c.bf16 %v1040, %v1040
        %v1105 = vpack.c.bf16 %v1041, %v1041
        %v1106 = vpack.c.bf16 %v1042, %v1042
        %v1107 = vpack.c.bf16 %v1043, %v1043
        %v1108 = vpack.c.bf16 %v1044, %v1044
        %v1109 = vpack.c.bf16 %v1045, %v1045
        %v1110 = vpack.c.bf16 %v1046, %v1046
        %v1111 = vpack.c.bf16 %v1047, %v1047
        %v1112 = vpack.c.bf16 %v1048, %v1048
        %v1113 = vpack.c.bf16 %v1049, %v1049
        %v1114 = vpack.c.bf16 %v1050, %v1050
        %v1115 = vpack.c.bf16 %v1051, %v1051
        %v1116 = vpack.c.bf16 %v1052, %v1052
        %v1117 = vpack.c.bf16 %v1053, %v1053
        %v1118 = vpack.c.bf16 %v1054, %v1054
        %v1119 = vpack.c.bf16 %v1055, %v1055
        %v1120 = vpack.c.bf16 %v1056, %v1056
        %v1121 = vpack.c.bf16 %v1057, %v1057
        %v1122 = vpack.c.bf16 %v1058, %v1058
        %v1123 = vpack.c.bf16 %v1059, %v1059
        %v1124 = vpack.c.bf16 %v1060, %v1060
        %v1125 = vpack.c.bf16 %v1061, %v1061
        %v1126 = vpack.c.bf16 %v1062, %v1062
        %v1127 = vpack.c.bf16 %v1063, %v1063
        %v1128 = vpack.c.bf16 %v1064, %v1064
        %v1129 = vpack.c.bf16 %v1065, %v1065
        %v1130 = vpack.c.bf16 %v1066, %v1066
        %v1131 = vpack.c.bf16 %v1067, %v1067
        %v1132 = vpack.c.bf16 %v1068, %v1068
        %v1133 = vpack.c.bf16 %v1069, %v1069
        %v1134 = vpack.c.bf16 %v1070, %v1070
        %v1135 = vpack.c.bf16 %v1071, %v1071
        %v1136 = vpack.c.bf16 %v1072, %v1072
        %v1137 = vpack.c.bf16 %v1073, %v1073
        %v1138 = vpack.c.bf16 %v1074, %v1074
        %v1139 = vpack.c.bf16 %v1075, %v1075
        %v1140 = vpack.c.bf16 %v1076, %v1076
        %v1141 = vpack.c.bf16 %v1077, %v1077
        %v1142 = vpack.c.bf16 %v1078, %v1078
        %v1143 = vpack.c.bf16 %v1079, %v1079
        %v1144 = vpack.c.bf16 %v1080, %v1080
        %v1145 = vpack.c.bf16 %v1081, %v1081
        %v1146 = vpack.c.bf16 %v1082, %v1082
        %v1147 = vpack.c.bf16 %v1083, %v1083
        %v1148 = vpack.c.bf16 %v1084, %v1084
        %v1149 = vpack.c.bf16 %v1085, %v1085
        %v1150 = vpack.c.bf16 %v1086, %v1086
        %v1151 = vpack.c.bf16 %v1087, %v1087
        %v1152 = vpack.c.bf16 %v1088, %v1088
        %v1153 = vpack.c.bf16 %v1089, %v1089
        %v1154 = vpack.c.bf16 %v1090, %v1090
        %v1219 = vunpack.c.l.b16 %v1091
        %v1220 = vunpack.c.l.b16 %v1092
        %v1221 = vunpack.c.l.b16 %v1093
        %v1222 = vunpack.c.l.b16 %v1094
        %v1223 = vunpack.c.l.b16 %v1095
        %v1224 = vunpack.c.l.b16 %v1096
        %v1225 = vunpack.c.l.b16 %v1097
        %v1226 = vunpack.c.l.b16 %v1098
        %v1227 = vunpack.c.l.b16 %v1099
        %v1228 = vunpack.c.l.b16 %v1100
        %v1229 = vunpack.c.l.b16 %v1101
        %v1230 = vunpack.c.l.b16 %v1102
        %v1231 = vunpack.c.l.b16 %v1103
        %v1232 = vunpack.c.l.b16 %v1104
        %v1233 = vunpack.c.l.b16 %v1105
        %v1234 = vunpack.c.l.b16 %v1106
        %v1235 = vunpack.c.l.b16 %v1107
        %v1236 = vunpack.c.l.b16 %v1108
        %v1237 = vunpack.c.l.b16 %v1109
        %v1238 = vunpack.c.l.b16 %v1110
        %v1239 = vunpack.c.l.b16 %v1111
        %v1240 = vunpack.c.l.b16 %v1112
        %v1241 = vunpack.c.l.b16 %v1113
        %v1242 = vunpack.c.l.b16 %v1114
        %v1243 = vunpack.c.l.b16 %v1115
        %v1244 = vunpack.c.l.b16 %v1116
        %v1245 = vunpack.c.l.b16 %v1117
        %v1246 = vunpack.c.l.b16 %v1118
        %v1247 = vunpack.c.l.b16 %v1119
        %v1248 = vunpack.c.l.b16 %v1120
        %v1249 = vunpack.c.l.b16 %v1121
        %v1250 = vunpack.c.l.b16 %v1122
        %v1251 = vunpack.c.l.b16 %v1123
        %v1252 = vunpack.c.l.b16 %v1124
        %v1253 = vunpack.c.l.b16 %v1125
        %v1254 = vunpack.c.l.b16 %v1126
        %v1255 = vunpack.c.l.b16 %v1127
        %v1256 = vunpack.c.l.b16 %v1128
        %v1257 = vunpack.c.l.b16 %v1129
        %v1258 = vunpack.c.l.b16 %v1130
        %v1259 = vunpack.c.l.b16 %v1131
        %v1260 = vunpack.c.l.b16 %v1132
        %v1261 = vunpack.c.l.b16 %v1133
        %v1262 = vunpack.c.l.b16 %v1134
        %v1263 = vunpack.c.l.b16 %v1135
        %v1264 = vunpack.c.l.b16 %v1136
        %v1265 = vunpack.c.l.b16 %v1137
        %v1266 = vunpack.c.l.b16 %v1138
        %v1267 = vunpack.c.l.b16 %v1139
        %v1268 = vunpack.c.l.b16 %v1140
        %v1269 = vunpack.c.l.b16 %v1141
        %v1270 = vunpack.c.l.b16 %v1142
        %v1271 = vunpack.c.l.b16 %v1143
        %v1272 = vunpack.c.l.b16 %v1144
        %v1273 = vunpack.c.l.b16 %v1145
        %v1274 = vunpack.c.l.b16 %v1146
        %v1275 = vunpack.c.l.b16 %v1147
        %v1276 = vunpack.c.l.b16 %v1148
        %v1277 = vunpack.c.l.b16 %v1149
        %v1278 = vunpack.c.l.b16 %v1150
        %v1279 = vunpack.c.l.b16 %v1151
        %v1280 = vunpack.c.l.b16 %v1152
        %v1281 = vunpack.c.l.b16 %v1153
        %v1282 = vunpack.c.l.b16 %v1154
        %v1283 = vrot.slane %v1220, 7
        %vm1284 = vcmask 1041409
        %v1285 = vsel %vm1284, %v1283, %v1219
        %v1286 = vrot.slane %v1221, 6
        %vm1287 = vcmask 1042434
        %v1288 = vsel %vm1287, %v1286, %v1285
        %v1289 = vrot.slane %v1222, 5
        %vm1290 = vcmask 1043459
        %v1291 = vsel %vm1290, %v1289, %v1288
        %v1292 = vrot.slane %v1223, 4
        %vm1293 = vcmask 1044484
        %v1294 = vsel %vm1293, %v1292, %v1291
        %v1295 = vrot.slane %v1224, 3
        %vm1296 = vcmask 1045509
        %v1297 = vsel %vm1296, %v1295, %v1294
        %v1298 = vrot.slane %v1225, 2
        %vm1299 = vcmask 1046534
        %v1300 = vsel %vm1299, %v1298, %v1297
        %v1301 = vrot.slane %v1226, 1
        %vm1302 = vcmask 1047559
        %v1303 = vsel %vm1302, %v1301, %v1300
        %v1304 = vrot.slane %v1228, 7
        %v1305 = vsel %vm1284, %v1304, %v1227
        %v1306 = vrot.slane %v1229, 6
        %v1307 = vsel %vm1287, %v1306, %v1305
        %v1308 = vrot.slane %v1230, 5
        %v1309 = vsel %vm1290, %v1308, %v1307
        %v1310 = vrot.slane %v1231, 4
        %v1311 = vsel %vm1293, %v1310, %v1309
        %v1312 = vrot.slane %v1232, 3
        %v1313 = vsel %vm1296, %v1312, %v1311
        %v1314 = vrot.slane %v1233, 2
        %v1315 = vsel %vm1299, %v1314, %v1313
        %v1316 = vrot.slane %v1234, 1
        %v1317 = vsel %vm1302, %v1316, %v1315
        %v1318 = vrot.slane %v1236, 7
        %v1319 = vsel %vm1284, %v1318, %v1235
        %v1320 = vrot.slane %v1237, 6
        %v1321 = vsel %vm1287, %v1320, %v1319
        %v1322 = vrot.slane %v1238, 5
        %v1323 = vsel %vm1290, %v1322, %v1321
        %v1324 = vrot.slane %v1239, 4
        %v1325 = vsel %vm1293, %v1324, %v1323
        %v1326 = vrot.slane %v1240, 3
        %v1327 = vsel %vm1296, %v1326, %v1325
        %v1328 = vrot.slane %v1241, 2
        %v1329 = vsel %vm1299, %v1328, %v1327
        %v1330 = vrot.slane %v1242, 1
        %v1331 = vsel %vm1302, %v1330, %v1329
        %v1332 = vrot.slane %v1244, 7
        %v1333 = vsel %vm1284, %v1332, %v1243
        %v1334 = vrot.slane %v1245, 6
        %v1335 = vsel %vm1287, %v1334, %v1333
        %v1336 = vrot.slane %v1246, 5
        %v1337 = vsel %vm1290, %v1336, %v1335
        %v1338 = vrot.slane %v1247, 4
        %v1339 = vsel %vm1293, %v1338, %v1337
        %v1340 = vrot.slane %v1248, 3
        %v1341 = vsel %vm1296, %v1340, %v1339
        %v1342 = vrot.slane %v1249, 2
        %v1343 = vsel %vm1299, %v1342, %v1341
        %v1344 = vrot.slane %v1250, 1
        %v1345 = vsel %vm1302, %v1344, %v1343
        %v1346 = vrot.slane %v1252, 7
        %v1347 = vsel %vm1284, %v1346, %v1251
        %v1348 = vrot.slane %v1253, 6
        %v1349 = vsel %vm1287, %v1348, %v1347
        %v1350 = vrot.slane %v1254, 5
        %v1351 = vsel %vm1290, %v1350, %v1349
        %v1352 = vrot.slane %v1255, 4
        %v1353 = vsel %vm1293, %v1352, %v1351
        %v1354 = vrot.slane %v1256, 3
        %v1355 = vsel %vm1296, %v1354, %v1353
        %v1356 = vrot.slane %v1257, 2
        %v1357 = vsel %vm1299, %v1356, %v1355
        %v1358 = vrot.slane %v1258, 1
        %v1359 = vsel %vm1302, %v1358, %v1357
        %v1360 = vrot.slane %v1260, 7
        %v1361 = vsel %vm1284, %v1360, %v1259
        %v1362 = vrot.slane %v1261, 6
        %v1363 = vsel %vm1287, %v1362, %v1361
        %v1364 = vrot.slane %v1262, 5
        %v1365 = vsel %vm1290, %v1364, %v1363
        %v1366 = vrot.slane %v1263, 4
        %v1367 = vsel %vm1293, %v1366, %v1365
        %v1368 = vrot.slane %v1264, 3
        %v1369 = vsel %vm1296, %v1368, %v1367
        %v1370 = vrot.slane %v1265, 2
        %v1371 = vsel %vm1299, %v1370, %v1369
        %v1372 = vrot.slane %v1266, 1
        %v1373 = vsel %vm1302, %v1372, %v1371
        %v1374 = vrot.slane %v1268, 7
        %v1375 = vsel %vm1284, %v1374, %v1267
        %v1376 = vrot.slane %v1269, 6
        %v1377 = vsel %vm1287, %v1376, %v1375
        %v1378 = vrot.slane %v1270, 5
        %v1379 = vsel %vm1290, %v1378, %v1377
        %v1380 = vrot.slane %v1271, 4
        %v1381 = vsel %vm1293, %v1380, %v1379
        %v1382 = vrot.slane %v1272, 3
        %v1383 = vsel %vm1296, %v1382, %v1381
        %v1384 = vrot.slane %v1273, 2
        %v1385 = vsel %vm1299, %v1384, %v1383
        %v1386 = vrot.slane %v1274, 1
        %v1387 = vsel %vm1302, %v1386, %v1385
        %v1388 = vrot.slane %v1276, 7
        %v1389 = vsel %vm1284, %v1388, %v1275
        %v1390 = vrot.slane %v1277, 6
        %v1391 = vsel %vm1287, %v1390, %v1389
        %v1392 = vrot.slane %v1278, 5
        %v1393 = vsel %vm1290, %v1392, %v1391
        %v1394 = vrot.slane %v1279, 4
        %v1395 = vsel %vm1293, %v1394, %v1393
        %v1396 = vrot.slane %v1280, 3
        %v1397 = vsel %vm1296, %v1396, %v1395
        %v1398 = vrot.slane %v1281, 2
        %v1399 = vsel %vm1299, %v1398, %v1397
        %v1400 = vrot.slane %v1282, 1
        %v1401 = vsel %vm1302, %v1400, %v1399
        %v1402 = vpack.c.b16 %v1303, %v1303
        %v1403 = vpack.c.b16 %v1317, %v1317
        %v1404 = vpack.c.b16 %v1331, %v1331
        %v1405 = vpack.c.b16 %v1345, %v1345
        %v1406 = vpack.c.b16 %v1359, %v1359
        %v1407 = vpack.c.b16 %v1373, %v1373
        %v1408 = vpack.c.b16 %v1387, %v1387
        %v1409 = vpack.c.b16 %v1401, %v1401
        %s1418 = scalar_lea.vmem [#allocation2], 12
        %vm1419 = vcmask 519168
        %1420 = vst.msk [vmem:[%s1418 + $0x4] sm:$0xf] %vm1419, %v1402
        %1421 = vst.msk [vmem:[%s1418 + $0x10] sm:$0xf] %vm1419, %v1403
        %1422 = vst.msk [vmem:[%s1418 + $0x1c] sm:$0xf] %vm1419, %v1404
        %1423 = vst.msk [vmem:[%s1418 + $0x28] sm:$0xf] %vm1419, %v1405
        %1424 = vst.msk [vmem:[%s1418 + $0x34] sm:$0xf] %vm1419, %v1406
        %1425 = vst.msk [vmem:[%s1418 + $0x40] sm:$0xf] %vm1419, %v1407
        %1426 = vst.msk [vmem:[%s1418 + $0x4c] sm:$0xf] %vm1419, %v1408
        %1427 = vst.msk [vmem:[%s1418 + $0x58] sm:$0xf] %vm1419, %v1409
        %vm1428 = vcmask 519171
        %vm1429 = vsmask.f32 7950
        %vm1430 = vmand %vm1428, %vm1429
        %v1431 = vld [vmem:[#allocation2] sm:$0x8]
        %v1432 = vsel %vm1430, 0, %v1431
        %1433 = vst [vmem:[#allocation2] sm:$0x8] %v1432
        %1434 = vst.msk [vmem:[#allocation2 + $0x4] sm:$0xf] %vm1419, 0
        %vm1435 = vcmask 516096
        %vm1436 = vsmask.f32 256
        %vm1437 = vmand %vm1435, %vm1436
        %v1438 = vld [vmem:[#allocation2 + $0x8] sm:$0x1]
        %v1439 = vsel %vm1437, 0, %v1438
        %1440 = vst [vmem:[#allocation2 + $0x8] sm:$0x1] %v1439
        %s1441 = scalar_lea.vmem [#allocation2], 108
        %v1442 = vld [vmem:[%s1441] sm:$0x8]
        %v1443 = vsel %vm1430, 0, %v1442
        %1444 = vst [vmem:[%s1441] sm:$0x8] %v1443
        %1445 = vst.msk [vmem:[%s1441 + $0x4] sm:$0xf] %vm1419, 0
        %v1446 = vld [vmem:[%s1441 + $0x8] sm:$0x1]
        %v1447 = vsel %vm1437, 0, %v1446
        %1448 = vst [vmem:[%s1441 + $0x8] sm:$0x1] %v1447
        %v1449 = vld [vmem:[%s1418] sm:$0x8]
        %v1450 = vsel %vm1430, 0, %v1449
        %1451 = vst [vmem:[%s1418] sm:$0x8] %v1450
        %v1452 = vld [vmem:[%s1418 + $0xc] sm:$0x8]
        %v1453 = vsel %vm1430, 0, %v1452
        %1454 = vst [vmem:[%s1418 + $0xc] sm:$0x8] %v1453
        %v1455 = vld [vmem:[%s1418 + $0x18] sm:$0x8]
        %v1456 = vsel %vm1430, 0, %v1455
        %1457 = vst [vmem:[%s1418 + $0x18] sm:$0x8] %v1456
        %v1458 = vld [vmem:[%s1418 + $0x24] sm:$0x8]
        %v1459 = vsel %vm1430, 0, %v1458
        %1460 = vst [vmem:[%s1418 + $0x24] sm:$0x8] %v1459
        %v1461 = vld [vmem:[%s1418 + $0x30] sm:$0x8]
        %v1462 = vsel %vm1430, 0, %v1461
        %1463 = vst [vmem:[%s1418 + $0x30] sm:$0x8] %v1462
        %v1464 = vld [vmem:[%s1418 + $0x3c] sm:$0x8]
        %v1465 = vsel %vm1430, 0, %v1464
        %1466 = vst [vmem:[%s1418 + $0x3c] sm:$0x8] %v1465
        %v1467 = vld [vmem:[%s1418 + $0x48] sm:$0x8]
        %v1468 = vsel %vm1430, 0, %v1467
        %1469 = vst [vmem:[%s1418 + $0x48] sm:$0x8] %v1468
        %v1470 = vld [vmem:[%s1418 + $0x54] sm:$0x8]
        %v1471 = vsel %vm1430, 0, %v1470
        %1472 = vst [vmem:[%s1418 + $0x54] sm:$0x8] %v1471
        %v1473 = vld [vmem:[%s1418 + $0x8] sm:$0x1]
        %v1474 = vsel %vm1437, 0, %v1473
        %1475 = vst [vmem:[%s1418 + $0x8] sm:$0x1] %v1474
        %v1476 = vld [vmem:[%s1418 + $0x14] sm:$0x1]
        %v1477 = vsel %vm1437, 0, %v1476
        %1478 = vst [vmem:[%s1418 + $0x14] sm:$0x1] %v1477
        %v1479 = vld [vmem:[%s1418 + $0x20] sm:$0x1]
        %v1480 = vsel %vm1437, 0, %v1479
        %1481 = vst [vmem:[%s1418 + $0x20] sm:$0x1] %v1480
        %v1482 = vld [vmem:[%s1418 + $0x2c] sm:$0x1]
        %v1483 = vsel %vm1437, 0, %v1482
        %1484 = vst [vmem:[%s1418 + $0x2c] sm:$0x1] %v1483
        %v1485 = vld [vmem:[%s1418 + $0x38] sm:$0x1]
        %v1486 = vsel %vm1437, 0, %v1485
        %1487 = vst [vmem:[%s1418 + $0x38] sm:$0x1] %v1486
        %v1488 = vld [vmem:[%s1418 + $0x44] sm:$0x1]
        %v1489 = vsel %vm1437, 0, %v1488
        %1490 = vst [vmem:[%s1418 + $0x44] sm:$0x1] %v1489
        %v1491 = vld [vmem:[%s1418 + $0x50] sm:$0x1]
        %v1492 = vsel %vm1437, 0, %v1491
        %1493 = vst [vmem:[%s1418 + $0x50] sm:$0x1] %v1492
        %v1494 = vld [vmem:[%s1418 + $0x5c] sm:$0x1]
        %v1495 = vsel %vm1437, 0, %v1494
        %1496 = vst [vmem:[%s1418 + $0x5c] sm:$0x1] %v1495
        %v1497 = vld [vmem:[#allocation2] sm:$0x8]
        %v1498 = vld [vmem:[#allocation2 + $0x4] sm:$0xf]
        %v1499 = vld [vmem:[#allocation2 + $0xc] sm:$0x8]
        %v1500 = vld [vmem:[#allocation2 + $0x10] sm:$0xf]
        %v1501 = vld [vmem:[#allocation2 + $0x18] sm:$0x8]
        %v1502 = vld [vmem:[#allocation2 + $0x1c] sm:$0xf]
        %v1503 = vld [vmem:[#allocation2 + $0x24] sm:$0x8]
        %v1504 = vld [vmem:[#allocation2 + $0x28] sm:$0xf]
        %v1505 = vld [vmem:[#allocation2 + $0x30] sm:$0x8]
        %v1506 = vld [vmem:[#allocation2 + $0x34] sm:$0xf]
        %v1507 = vld [vmem:[#allocation2 + $0x3c] sm:$0x8]
        %v1508 = vld [vmem:[#allocation2 + $0x40] sm:$0xf]
        %v1509 = vld [vmem:[#allocation2 + $0x48] sm:$0x8]
        %v1510 = vld [vmem:[#allocation2 + $0x4c] sm:$0xf]
        %v1511 = vld [vmem:[#allocation2 + $0x54] sm:$0x8]
        %v1512 = vld [vmem:[#allocation2 + $0x58] sm:$0xf]
        %vm1513 = vsmask.f32 4368
        %vm1514 = vmor %vm1436, %vm1513
        %v1516 = vshrl.u32 %v1497, 16
        %v1518 = vrot.slane %v1516, 7
        %v1519 = vrot.slane %v1518, 4
        %v1521 = vshrl.u32 %v1498, 16
        %v1523 = vrot.slane %v1521, 7
        %v1524 = vshll.u32 %v1498, 16
        %v1526 = vor.u32 %v1523, %v1524
        %v1527 = vsel %vm1514, %v1519, %v1526
        %v1529 = vshrl.u32 %v1499, 16
        %v1531 = vrot.slane %v1529, 7
        %v1532 = vrot.slane %v1531, 4
        %v1534 = vshrl.u32 %v1500, 16
        %v1536 = vrot.slane %v1534, 7
        %v1537 = vshll.u32 %v1500, 16
        %v1539 = vor.u32 %v1536, %v1537
        %v1540 = vsel %vm1514, %v1532, %v1539
        %v1542 = vshrl.u32 %v1501, 16
        %v1544 = vrot.slane %v1542, 7
        %v1545 = vrot.slane %v1544, 4
        %v1547 = vshrl.u32 %v1502, 16
        %v1549 = vrot.slane %v1547, 7
        %v1550 = vshll.u32 %v1502, 16
        %v1552 = vor.u32 %v1549, %v1550
        %v1553 = vsel %vm1514, %v1545, %v1552
        %v1555 = vshrl.u32 %v1503, 16
        %v1557 = vrot.slane %v1555, 7
        %v1558 = vrot.slane %v1557, 4
        %v1560 = vshrl.u32 %v1504, 16
        %v1562 = vrot.slane %v1560, 7
        %v1563 = vshll.u32 %v1504, 16
        %v1565 = vor.u32 %v1562, %v1563
        %v1566 = vsel %vm1514, %v1558, %v1565
        %v1568 = vshrl.u32 %v1505, 16
        %v1570 = vrot.slane %v1568, 7
        %v1571 = vrot.slane %v1570, 4
        %v1573 = vshrl.u32 %v1506, 16
        %v1575 = vrot.slane %v1573, 7
        %v1576 = vshll.u32 %v1506, 16
        %v1578 = vor.u32 %v1575, %v1576
        %v1579 = vsel %vm1514, %v1571, %v1578
        %v1581 = vshrl.u32 %v1507, 16
        %v1583 = vrot.slane %v1581, 7
        %v1584 = vrot.slane %v1583, 4
        %v1586 = vshrl.u32 %v1508, 16
        %v1588 = vrot.slane %v1586, 7
        %v1589 = vshll.u32 %v1508, 16
        %v1591 = vor.u32 %v1588, %v1589
        %v1592 = vsel %vm1514, %v1584, %v1591
        %v1594 = vshrl.u32 %v1509, 16
        %v1596 = vrot.slane %v1594, 7
        %v1597 = vrot.slane %v1596, 4
        %v1599 = vshrl.u32 %v1510, 16
        %v1601 = vrot.slane %v1599, 7
        %v1602 = vshll.u32 %v1510, 16
        %v1604 = vor.u32 %v1601, %v1602
        %v1605 = vsel %vm1514, %v1597, %v1604
        %v1607 = vshrl.u32 %v1511, 16
        %v1609 = vrot.slane %v1607, 7
        %v1610 = vrot.slane %v1609, 4
        %v1612 = vshrl.u32 %v1512, 16
        %v1614 = vrot.slane %v1612, 7
        %v1615 = vshll.u32 %v1512, 16
        %v1617 = vor.u32 %v1614, %v1615
        %v1618 = vsel %vm1514, %v1610, %v1617
        %1627 = vst.msk [vmem:[#allocation3] sm:$0xf] %vm1419, %v1527
        %1628 = vst.msk [vmem:[#allocation3 + $0x14] sm:$0xf] %vm1419, %v1540
        %1629 = vst.msk [vmem:[#allocation3 + $0x28] sm:$0xf] %vm1419, %v1553
        %1630 = vst.msk [vmem:[#allocation3 + $0x3c] sm:$0xf] %vm1419, %v1566
        %1631 = vst.msk [vmem:[#allocation3 + $0x50] sm:$0xf] %vm1419, %v1579
        %1632 = vst.msk [vmem:[#allocation3 + $0x64] sm:$0xf] %vm1419, %v1592
        %1633 = vst.msk [vmem:[#allocation3 + $0x78] sm:$0xf] %vm1419, %v1605
        %1634 = vst.msk [vmem:[#allocation3 + $0x8c] sm:$0xf] %vm1419, %v1618
        %v1635 = vld [vmem:[#allocation2 + $0x4] sm:$0xf]
        %v1636 = vld [vmem:[#allocation2 + $0x10] sm:$0xf]
        %v1637 = vld [vmem:[#allocation2 + $0x1c] sm:$0xf]
        %v1638 = vld [vmem:[#allocation2 + $0x28] sm:$0xf]
        %v1639 = vld [vmem:[#allocation2 + $0x34] sm:$0xf]
        %v1640 = vld [vmem:[#allocation2 + $0x40] sm:$0xf]
        %v1641 = vld [vmem:[#allocation2 + $0x4c] sm:$0xf]
        %v1642 = vld [vmem:[#allocation2 + $0x58] sm:$0xf]
        %1651 = vrot.lane.b32.xlu0 %v1635, 64
        %v1652 = vpop.permute.xlu0 %1651
        %1653 = vrot.lane.b32.xlu0 %v1636, 64
        %v1654 = vpop.permute.xlu0 %1653
        %1655 = vrot.lane.b32.xlu0 %v1637, 64
        %v1656 = vpop.permute.xlu0 %1655
        %1657 = vrot.lane.b32.xlu0 %v1638, 64
        %v1658 = vpop.permute.xlu0 %1657
        %1659 = vrot.lane.b32.xlu0 %v1639, 64
        %v1660 = vpop.permute.xlu0 %1659
        %1661 = vrot.lane.b32.xlu0 %v1640, 64
        %v1662 = vpop.permute.xlu0 %1661
        %1663 = vrot.lane.b32.xlu0 %v1641, 64
        %v1664 = vpop.permute.xlu0 %1663
        %1665 = vrot.lane.b32.xlu0 %v1642, 64
        %v1666 = vpop.permute.xlu0 %1665
        %vm1675 = vcmask 1043968
        %1676 = vst.msk [vmem:[#allocation3] sm:$0xf] %vm1675, %v1652
        %1677 = vst.msk [vmem:[#allocation3 + $0x14] sm:$0xf] %vm1675, %v1654
        %1678 = vst.msk [vmem:[#allocation3 + $0x28] sm:$0xf] %vm1675, %v1656
        %1679 = vst.msk [vmem:[#allocation3 + $0x3c] sm:$0xf] %vm1675, %v1658
        %1680 = vst.msk [vmem:[#allocation3 + $0x50] sm:$0xf] %vm1675, %v1660
        %1681 = vst.msk [vmem:[#allocation3 + $0x64] sm:$0xf] %vm1675, %v1662
        %1682 = vst.msk [vmem:[#allocation3 + $0x78] sm:$0xf] %vm1675, %v1664
        %1683 = vst.msk [vmem:[#allocation3 + $0x8c] sm:$0xf] %vm1675, %v1666
        %v1684 = vld [vmem:[#allocation2 + $0x4] sm:$0xf]
        %v1685 = vld [vmem:[#allocation2 + $0x8] sm:$0x1]
        %v1686 = vld [vmem:[#allocation2 + $0x10] sm:$0xf]
        %v1687 = vld [vmem:[#allocation2 + $0x14] sm:$0x1]
        %v1688 = vld [vmem:[#allocation2 + $0x1c] sm:$0xf]
        %v1689 = vld [vmem:[#allocation2 + $0x20] sm:$0x1]
        %v1690 = vld [vmem:[#allocation2 + $0x28] sm:$0xf]
        %v1691 = vld [vmem:[#allocation2 + $0x2c] sm:$0x1]
        %v1692 = vld [vmem:[#allocation2 + $0x34] sm:$0xf]
        %v1693 = vld [vmem:[#allocation2 + $0x38] sm:$0x1]
        %v1694 = vld [vmem:[#allocation2 + $0x40] sm:$0xf]
        %v1695 = vld [vmem:[#allocation2 + $0x44] sm:$0x1]
        %v1696 = vld [vmem:[#allocation2 + $0x4c] sm:$0xf]
        %v1697 = vld [vmem:[#allocation2 + $0x50] sm:$0x1]
        %v1698 = vld [vmem:[#allocation2 + $0x58] sm:$0xf]
        %v1699 = vld [vmem:[#allocation2 + $0x5c] sm:$0x1]
        %vm1700 = vsmask.f32 3328
        %vm1701 = vsmask.f32 7440
        %vm1702 = vmor %vm1700, %vm1701
        %v1704 = vshrl.u32 %v1684, 16
        %v1706 = vrot.slane %v1704, 4
        %v1707 = vshll.u32 %v1684, 16
        %v1709 = vrot.slane %v1707, 5
        %v1710 = vor.u32 %v1706, %v1709
        %v1711 = vrot.slane %v1710, 4
        %v1713 = vshll.u32 %v1685, 16
        %v1715 = vrot.slane %v1713, 5
        %v1716 = vsel %vm1702, %v1711, %v1715
        %v1718 = vshrl.u32 %v1686, 16
        %v1720 = vrot.slane %v1718, 4
        %v1721 = vshll.u32 %v1686, 16
        %v1723 = vrot.slane %v1721, 5
        %v1724 = vor.u32 %v1720, %v1723
        %v1725 = vrot.slane %v1724, 4
        %v1727 = vshll.u32 %v1687, 16
        %v1729 = vrot.slane %v1727, 5
        %v1730 = vsel %vm1702, %v1725, %v1729
        %v1732 = vshrl.u32 %v1688, 16
        %v1734 = vrot.slane %v1732, 4
        %v1735 = vshll.u32 %v1688, 16
        %v1737 = vrot.slane %v1735, 5
        %v1738 = vor.u32 %v1734, %v1737
        %v1739 = vrot.slane %v1738, 4
        %v1741 = vshll.u32 %v1689, 16
        %v1743 = vrot.slane %v1741, 5
        %v1744 = vsel %vm1702, %v1739, %v1743
        %v1746 = vshrl.u32 %v1690, 16
        %v1748 = vrot.slane %v1746, 4
        %v1749 = vshll.u32 %v1690, 16
        %v1751 = vrot.slane %v1749, 5
        %v1752 = vor.u32 %v1748, %v1751
        %v1753 = vrot.slane %v1752, 4
        %v1755 = vshll.u32 %v1691, 16
        %v1757 = vrot.slane %v1755, 5
        %v1758 = vsel %vm1702, %v1753, %v1757
        %v1760 = vshrl.u32 %v1692, 16
        %v1762 = vrot.slane %v1760, 4
        %v1763 = vshll.u32 %v1692, 16
        %v1765 = vrot.slane %v1763, 5
        %v1766 = vor.u32 %v1762, %v1765
        %v1767 = vrot.slane %v1766, 4
        %v1769 = vshll.u32 %v1693, 16
        %v1771 = vrot.slane %v1769, 5
        %v1772 = vsel %vm1702, %v1767, %v1771
        %v1774 = vshrl.u32 %v1694, 16
        %v1776 = vrot.slane %v1774, 4
        %v1777 = vshll.u32 %v1694, 16
        %v1779 = vrot.slane %v1777, 5
        %v1780 = vor.u32 %v1776, %v1779
        %v1781 = vrot.slane %v1780, 4
        %v1783 = vshll.u32 %v1695, 16
        %v1785 = vrot.slane %v1783, 5
        %v1786 = vsel %vm1702, %v1781, %v1785
        %v1788 = vshrl.u32 %v1696, 16
        %v1790 = vrot.slane %v1788, 4
        %v1791 = vshll.u32 %v1696, 16
        %v1793 = vrot.slane %v1791, 5
        %v1794 = vor.u32 %v1790, %v1793
        %v1795 = vrot.slane %v1794, 4
        %v1797 = vshll.u32 %v1697, 16
        %v1799 = vrot.slane %v1797, 5
        %v1800 = vsel %vm1702, %v1795, %v1799
        %v1802 = vshrl.u32 %v1698, 16
        %v1804 = vrot.slane %v1802, 4
        %v1805 = vshll.u32 %v1698, 16
        %v1807 = vrot.slane %v1805, 5
        %v1808 = vor.u32 %v1804, %v1807
        %v1809 = vrot.slane %v1808, 4
        %v1811 = vshll.u32 %v1699, 16
        %v1813 = vrot.slane %v1811, 5
        %v1814 = vsel %vm1702, %v1809, %v1813
        %1823 = vst.msk [vmem:[#allocation3 + $0x4] sm:$0xf] %vm1419, %v1716
        %1824 = vst.msk [vmem:[#allocation3 + $0x18] sm:$0xf] %vm1419, %v1730
        %1825 = vst.msk [vmem:[#allocation3 + $0x2c] sm:$0xf] %vm1419, %v1744
        %1826 = vst.msk [vmem:[#allocation3 + $0x40] sm:$0xf] %vm1419, %v1758
        %1827 = vst.msk [vmem:[#allocation3 + $0x54] sm:$0xf] %vm1419, %v1772
        %1828 = vst.msk [vmem:[#allocation3 + $0x68] sm:$0xf] %vm1419, %v1786
        %1829 = vst.msk [vmem:[#allocation3 + $0x7c] sm:$0xf] %vm1419, %v1800
        %1830 = vst.msk [vmem:[#allocation3 + $0x90] sm:$0xf] %vm1419, %v1814
        %v1831 = vld [vmem:[%s1418] sm:$0x8]
        %v1832 = vld [vmem:[%s1418 + $0x4] sm:$0xf]
        %v1833 = vld [vmem:[%s1418 + $0xc] sm:$0x8]
        %v1834 = vld [vmem:[%s1418 + $0x10] sm:$0xf]
        %v1835 = vld [vmem:[%s1418 + $0x18] sm:$0x8]
        %v1836 = vld [vmem:[%s1418 + $0x1c] sm:$0xf]
        %v1837 = vld [vmem:[%s1418 + $0x24] sm:$0x8]
        %v1838 = vld [vmem:[%s1418 + $0x28] sm:$0xf]
        %v1839 = vld [vmem:[%s1418 + $0x30] sm:$0x8]
        %v1840 = vld [vmem:[%s1418 + $0x34] sm:$0xf]
        %v1841 = vld [vmem:[%s1418 + $0x3c] sm:$0x8]
        %v1842 = vld [vmem:[%s1418 + $0x40] sm:$0xf]
        %v1843 = vld [vmem:[%s1418 + $0x48] sm:$0x8]
        %v1844 = vld [vmem:[%s1418 + $0x4c] sm:$0xf]
        %v1845 = vld [vmem:[%s1418 + $0x54] sm:$0x8]
        %v1846 = vld [vmem:[%s1418 + $0x58] sm:$0xf]
        %v1848 = vshrl.u32 %v1831, 16
        %v1850 = vrot.slane %v1848, 7
        %v1851 = vrot.slane %v1850, 4
        %v1853 = vshrl.u32 %v1832, 16
        %v1855 = vrot.slane %v1853, 7
        %v1856 = vshll.u32 %v1832, 16
        %v1858 = vor.u32 %v1855, %v1856
        %v1859 = vsel %vm1514, %v1851, %v1858
        %v1861 = vshrl.u32 %v1833, 16
        %v1863 = vrot.slane %v1861, 7
        %v1864 = vrot.slane %v1863, 4
        %v1866 = vshrl.u32 %v1834, 16
        %v1868 = vrot.slane %v1866, 7
        %v1869 = vshll.u32 %v1834, 16
        %v1871 = vor.u32 %v1868, %v1869
        %v1872 = vsel %vm1514, %v1864, %v1871
        %v1874 = vshrl.u32 %v1835, 16
        %v1876 = vrot.slane %v1874, 7
        %v1877 = vrot.slane %v1876, 4
        %v1879 = vshrl.u32 %v1836, 16
        %v1881 = vrot.slane %v1879, 7
        %v1882 = vshll.u32 %v1836, 16
        %v1884 = vor.u32 %v1881, %v1882
        %v1885 = vsel %vm1514, %v1877, %v1884
        %v1887 = vshrl.u32 %v1837, 16
        %v1889 = vrot.slane %v1887, 7
        %v1890 = vrot.slane %v1889, 4
        %v1892 = vshrl.u32 %v1838, 16
        %v1894 = vrot.slane %v1892, 7
        %v1895 = vshll.u32 %v1838, 16
        %v1897 = vor.u32 %v1894, %v1895
        %v1898 = vsel %vm1514, %v1890, %v1897
        %v1900 = vshrl.u32 %v1839, 16
        %v1902 = vrot.slane %v1900, 7
        %v1903 = vrot.slane %v1902, 4
        %v1905 = vshrl.u32 %v1840, 16
        %v1907 = vrot.slane %v1905, 7
        %v1908 = vshll.u32 %v1840, 16
        %v1910 = vor.u32 %v1907, %v1908
        %v1911 = vsel %vm1514, %v1903, %v1910
        %v1913 = vshrl.u32 %v1841, 16
        %v1915 = vrot.slane %v1913, 7
        %v1916 = vrot.slane %v1915, 4
        %v1918 = vshrl.u32 %v1842, 16
        %v1920 = vrot.slane %v1918, 7
        %v1921 = vshll.u32 %v1842, 16
        %v1923 = vor.u32 %v1920, %v1921
        %v1924 = vsel %vm1514, %v1916, %v1923
        %v1926 = vshrl.u32 %v1843, 16
        %v1928 = vrot.slane %v1926, 7
        %v1929 = vrot.slane %v1928, 4
        %v1931 = vshrl.u32 %v1844, 16
        %v1933 = vrot.slane %v1931, 7
        %v1934 = vshll.u32 %v1844, 16
        %v1936 = vor.u32 %v1933, %v1934
        %v1937 = vsel %vm1514, %v1929, %v1936
        %v1939 = vshrl.u32 %v1845, 16
        %v1941 = vrot.slane %v1939, 7
        %v1942 = vrot.slane %v1941, 4
        %v1944 = vshrl.u32 %v1846, 16
        %v1946 = vrot.slane %v1944, 7
        %v1947 = vshll.u32 %v1846, 16
        %v1949 = vor.u32 %v1946, %v1947
        %v1950 = vsel %vm1514, %v1942, %v1949
        %1951 = vrot.lane.b32.xlu0 %v1859, 64
        %v1952 = vpop.permute.xlu0 %1951
        %1953 = vrot.lane.b32.xlu0 %v1872, 64
        %v1954 = vpop.permute.xlu0 %1953
        %1955 = vrot.lane.b32.xlu0 %v1885, 64
        %v1956 = vpop.permute.xlu0 %1955
        %1957 = vrot.lane.b32.xlu0 %v1898, 64
        %v1958 = vpop.permute.xlu0 %1957
        %1959 = vrot.lane.b32.xlu0 %v1911, 64
        %v1960 = vpop.permute.xlu0 %1959
        %1961 = vrot.lane.b32.xlu0 %v1924, 64
        %v1962 = vpop.permute.xlu0 %1961
        %1963 = vrot.lane.b32.xlu0 %v1937, 64
        %v1964 = vpop.permute.xlu0 %1963
        %1965 = vrot.lane.b32.xlu0 %v1950, 64
        %v1966 = vpop.permute.xlu0 %1965
        %1975 = vst.msk [vmem:[#allocation3 + $0x4] sm:$0xf] %vm1675, %v1952
        %1976 = vst.msk [vmem:[#allocation3 + $0x18] sm:$0xf] %vm1675, %v1954
        %1977 = vst.msk [vmem:[#allocation3 + $0x2c] sm:$0xf] %vm1675, %v1956
        %1978 = vst.msk [vmem:[#allocation3 + $0x40] sm:$0xf] %vm1675, %v1958
        %1979 = vst.msk [vmem:[#allocation3 + $0x54] sm:$0xf] %vm1675, %v1960
        %1980 = vst.msk [vmem:[#allocation3 + $0x68] sm:$0xf] %vm1675, %v1962
        %1981 = vst.msk [vmem:[#allocation3 + $0x7c] sm:$0xf] %vm1675, %v1964
        %1982 = vst.msk [vmem:[#allocation3 + $0x90] sm:$0xf] %vm1675, %v1966
        %v1983 = vld [vmem:[%s1418 + $0x4] sm:$0xf]
        %v1984 = vld [vmem:[%s1418 + $0x10] sm:$0xf]
        %v1985 = vld [vmem:[%s1418 + $0x1c] sm:$0xf]
        %v1986 = vld [vmem:[%s1418 + $0x28] sm:$0xf]
        %v1987 = vld [vmem:[%s1418 + $0x34] sm:$0xf]
        %v1988 = vld [vmem:[%s1418 + $0x40] sm:$0xf]
        %v1989 = vld [vmem:[%s1418 + $0x4c] sm:$0xf]
        %v1990 = vld [vmem:[%s1418 + $0x58] sm:$0xf]
        %1991 = vst.msk [vmem:[#allocation3 + $0x8] sm:$0xf] %vm1419, %v1983
        %1992 = vst.msk [vmem:[#allocation3 + $0x1c] sm:$0xf] %vm1419, %v1984
        %1993 = vst.msk [vmem:[#allocation3 + $0x30] sm:$0xf] %vm1419, %v1985
        %1994 = vst.msk [vmem:[#allocation3 + $0x44] sm:$0xf] %vm1419, %v1986
        %1995 = vst.msk [vmem:[#allocation3 + $0x58] sm:$0xf] %vm1419, %v1987
        %1996 = vst.msk [vmem:[#allocation3 + $0x6c] sm:$0xf] %vm1419, %v1988
        %1997 = vst.msk [vmem:[#allocation3 + $0x80] sm:$0xf] %vm1419, %v1989
        %1998 = vst.msk [vmem:[#allocation3 + $0x94] sm:$0xf] %vm1419, %v1990
        %v1999 = vld [vmem:[%s1418 + $0x4] sm:$0xf]
        %v2000 = vld [vmem:[%s1418 + $0x8] sm:$0x1]
        %v2001 = vld [vmem:[%s1418 + $0x10] sm:$0xf]
        %v2002 = vld [vmem:[%s1418 + $0x14] sm:$0x1]
        %v2003 = vld [vmem:[%s1418 + $0x1c] sm:$0xf]
        %v2004 = vld [vmem:[%s1418 + $0x20] sm:$0x1]
        %v2005 = vld [vmem:[%s1418 + $0x28] sm:$0xf]
        %v2006 = vld [vmem:[%s1418 + $0x2c] sm:$0x1]
        %v2007 = vld [vmem:[%s1418 + $0x34] sm:$0xf]
        %v2008 = vld [vmem:[%s1418 + $0x38] sm:$0x1]
        %v2009 = vld [vmem:[%s1418 + $0x40] sm:$0xf]
        %v2010 = vld [vmem:[%s1418 + $0x44] sm:$0x1]
        %v2011 = vld [vmem:[%s1418 + $0x4c] sm:$0xf]
        %v2012 = vld [vmem:[%s1418 + $0x50] sm:$0x1]
        %v2013 = vld [vmem:[%s1418 + $0x58] sm:$0xf]
        %v2014 = vld [vmem:[%s1418 + $0x5c] sm:$0x1]
        %v2016 = vshrl.u32 %v1999, 16
        %v2018 = vrot.slane %v2016, 4
        %v2019 = vshll.u32 %v1999, 16
        %v2021 = vrot.slane %v2019, 5
        %v2022 = vor.u32 %v2018, %v2021
        %v2023 = vrot.slane %v2022, 4
        %v2025 = vshll.u32 %v2000, 16
        %v2027 = vrot.slane %v2025, 5
        %v2028 = vsel %vm1702, %v2023, %v2027
        %v2030 = vshrl.u32 %v2001, 16
        %v2032 = vrot.slane %v2030, 4
        %v2033 = vshll.u32 %v2001, 16
        %v2035 = vrot.slane %v2033, 5
        %v2036 = vor.u32 %v2032, %v2035
        %v2037 = vrot.slane %v2036, 4
        %v2039 = vshll.u32 %v2002, 16
        %v2041 = vrot.slane %v2039, 5
        %v2042 = vsel %vm1702, %v2037, %v2041
        %v2044 = vshrl.u32 %v2003, 16
        %v2046 = vrot.slane %v2044, 4
        %v2047 = vshll.u32 %v2003, 16
        %v2049 = vrot.slane %v2047, 5
        %v2050 = vor.u32 %v2046, %v2049
        %v2051 = vrot.slane %v2050, 4
        %v2053 = vshll.u32 %v2004, 16
        %v2055 = vrot.slane %v2053, 5
        %v2056 = vsel %vm1702, %v2051, %v2055
        %v2058 = vshrl.u32 %v2005, 16
        %v2060 = vrot.slane %v2058, 4
        %v2061 = vshll.u32 %v2005, 16
        %v2063 = vrot.slane %v2061, 5
        %v2064 = vor.u32 %v2060, %v2063
        %v2065 = vrot.slane %v2064, 4
        %v2067 = vshll.u32 %v2006, 16
        %v2069 = vrot.slane %v2067, 5
        %v2070 = vsel %vm1702, %v2065, %v2069
        %v2072 = vshrl.u32 %v2007, 16
        %v2074 = vrot.slane %v2072, 4
        %v2075 = vshll.u32 %v2007, 16
        %v2077 = vrot.slane %v2075, 5
        %v2078 = vor.u32 %v2074, %v2077
        %v2079 = vrot.slane %v2078, 4
        %v2081 = vshll.u32 %v2008, 16
        %v2083 = vrot.slane %v2081, 5
        %v2084 = vsel %vm1702, %v2079, %v2083
        %v2086 = vshrl.u32 %v2009, 16
        %v2088 = vrot.slane %v2086, 4
        %v2089 = vshll.u32 %v2009, 16
        %v2091 = vrot.slane %v2089, 5
        %v2092 = vor.u32 %v2088, %v2091
        %v2093 = vrot.slane %v2092, 4
        %v2095 = vshll.u32 %v2010, 16
        %v2097 = vrot.slane %v2095, 5
        %v2098 = vsel %vm1702, %v2093, %v2097
        %v2100 = vshrl.u32 %v2011, 16
        %v2102 = vrot.slane %v2100, 4
        %v2103 = vshll.u32 %v2011, 16
        %v2105 = vrot.slane %v2103, 5
        %v2106 = vor.u32 %v2102, %v2105
        %v2107 = vrot.slane %v2106, 4
        %v2109 = vshll.u32 %v2012, 16
        %v2111 = vrot.slane %v2109, 5
        %v2112 = vsel %vm1702, %v2107, %v2111
        %v2114 = vshrl.u32 %v2013, 16
        %v2116 = vrot.slane %v2114, 4
        %v2117 = vshll.u32 %v2013, 16
        %v2119 = vrot.slane %v2117, 5
        %v2120 = vor.u32 %v2116, %v2119
        %v2121 = vrot.slane %v2120, 4
        %v2123 = vshll.u32 %v2014, 16
        %v2125 = vrot.slane %v2123, 5
        %v2126 = vsel %vm1702, %v2121, %v2125
        %2127 = vrot.lane.b32.xlu0 %v2028, 64
        %v2128 = vpop.permute.xlu0 %2127
        %2129 = vrot.lane.b32.xlu0 %v2042, 64
        %v2130 = vpop.permute.xlu0 %2129
        %2131 = vrot.lane.b32.xlu0 %v2056, 64
        %v2132 = vpop.permute.xlu0 %2131
        %2133 = vrot.lane.b32.xlu0 %v2070, 64
        %v2134 = vpop.permute.xlu0 %2133
        %2135 = vrot.lane.b32.xlu0 %v2084, 64
        %v2136 = vpop.permute.xlu0 %2135
        %2137 = vrot.lane.b32.xlu0 %v2098, 64
        %v2138 = vpop.permute.xlu0 %2137
        %2139 = vrot.lane.b32.xlu0 %v2112, 64
        %v2140 = vpop.permute.xlu0 %2139
        %2141 = vrot.lane.b32.xlu0 %v2126, 64
        %v2142 = vpop.permute.xlu0 %2141
        %2151 = vst.msk [vmem:[#allocation3 + $0x8] sm:$0xf] %vm1675, %v2128
        %2152 = vst.msk [vmem:[#allocation3 + $0x1c] sm:$0xf] %vm1675, %v2130
        %2153 = vst.msk [vmem:[#allocation3 + $0x30] sm:$0xf] %vm1675, %v2132
        %2154 = vst.msk [vmem:[#allocation3 + $0x44] sm:$0xf] %vm1675, %v2134
        %2155 = vst.msk [vmem:[#allocation3 + $0x58] sm:$0xf] %vm1675, %v2136
        %2156 = vst.msk [vmem:[#allocation3 + $0x6c] sm:$0xf] %vm1675, %v2138
        %2157 = vst.msk [vmem:[#allocation3 + $0x80] sm:$0xf] %vm1675, %v2140
        %2158 = vst.msk [vmem:[#allocation3 + $0x94] sm:$0xf] %vm1675, %v2142
        %s2159 = scalar_lea.vmem [#allocation2], 24
        %v2160 = vld [vmem:[%s2159] sm:$0x8]
        %v2161 = vld [vmem:[%s2159 + $0x4] sm:$0xf]
        %v2162 = vld [vmem:[%s2159 + $0xc] sm:$0x8]
        %v2163 = vld [vmem:[%s2159 + $0x10] sm:$0xf]
        %v2164 = vld [vmem:[%s2159 + $0x18] sm:$0x8]
        %v2165 = vld [vmem:[%s2159 + $0x1c] sm:$0xf]
        %v2166 = vld [vmem:[%s2159 + $0x24] sm:$0x8]
        %v2167 = vld [vmem:[%s2159 + $0x28] sm:$0xf]
        %v2168 = vld [vmem:[%s2159 + $0x30] sm:$0x8]
        %v2169 = vld [vmem:[%s2159 + $0x34] sm:$0xf]
        %v2170 = vld [vmem:[%s2159 + $0x3c] sm:$0x8]
        %v2171 = vld [vmem:[%s2159 + $0x40] sm:$0xf]
        %v2172 = vld [vmem:[%s2159 + $0x48] sm:$0x8]
        %v2173 = vld [vmem:[%s2159 + $0x4c] sm:$0xf]
        %v2174 = vld [vmem:[%s2159 + $0x54] sm:$0x8]
        %v2175 = vld [vmem:[%s2159 + $0x58] sm:$0xf]
        %v2177 = vshrl.u32 %v2160, 16
        %v2179 = vrot.slane %v2177, 7
        %v2180 = vrot.slane %v2179, 4
        %v2182 = vshrl.u32 %v2161, 16
        %v2184 = vrot.slane %v2182, 7
        %v2185 = vshll.u32 %v2161, 16
        %v2187 = vor.u32 %v2184, %v2185
        %v2188 = vsel %vm1514, %v2180, %v2187
        %v2190 = vshrl.u32 %v2162, 16
        %v2192 = vrot.slane %v2190, 7
        %v2193 = vrot.slane %v2192, 4
        %v2195 = vshrl.u32 %v2163, 16
        %v2197 = vrot.slane %v2195, 7
        %v2198 = vshll.u32 %v2163, 16
        %v2200 = vor.u32 %v2197, %v2198
        %v2201 = vsel %vm1514, %v2193, %v2200
        %v2203 = vshrl.u32 %v2164, 16
        %v2205 = vrot.slane %v2203, 7
        %v2206 = vrot.slane %v2205, 4
        %v2208 = vshrl.u32 %v2165, 16
        %v2210 = vrot.slane %v2208, 7
        %v2211 = vshll.u32 %v2165, 16
        %v2213 = vor.u32 %v2210, %v2211
        %v2214 = vsel %vm1514, %v2206, %v2213
        %v2216 = vshrl.u32 %v2166, 16
        %v2218 = vrot.slane %v2216, 7
        %v2219 = vrot.slane %v2218, 4
        %v2221 = vshrl.u32 %v2167, 16
        %v2223 = vrot.slane %v2221, 7
        %v2224 = vshll.u32 %v2167, 16
        %v2226 = vor.u32 %v2223, %v2224
        %v2227 = vsel %vm1514, %v2219, %v2226
        %v2229 = vshrl.u32 %v2168, 16
        %v2231 = vrot.slane %v2229, 7
        %v2232 = vrot.slane %v2231, 4
        %v2234 = vshrl.u32 %v2169, 16
        %v2236 = vrot.slane %v2234, 7
        %v2237 = vshll.u32 %v2169, 16
        %v2239 = vor.u32 %v2236, %v2237
        %v2240 = vsel %vm1514, %v2232, %v2239
        %v2242 = vshrl.u32 %v2170, 16
        %v2244 = vrot.slane %v2242, 7
        %v2245 = vrot.slane %v2244, 4
        %v2247 = vshrl.u32 %v2171, 16
        %v2249 = vrot.slane %v2247, 7
        %v2250 = vshll.u32 %v2171, 16
        %v2252 = vor.u32 %v2249, %v2250
        %v2253 = vsel %vm1514, %v2245, %v2252
        %v2255 = vshrl.u32 %v2172, 16
        %v2257 = vrot.slane %v2255, 7
        %v2258 = vrot.slane %v2257, 4
        %v2260 = vshrl.u32 %v2173, 16
        %v2262 = vrot.slane %v2260, 7
        %v2263 = vshll.u32 %v2173, 16
        %v2265 = vor.u32 %v2262, %v2263
        %v2266 = vsel %vm1514, %v2258, %v2265
        %v2268 = vshrl.u32 %v2174, 16
        %v2270 = vrot.slane %v2268, 7
        %v2271 = vrot.slane %v2270, 4
        %v2273 = vshrl.u32 %v2175, 16
        %v2275 = vrot.slane %v2273, 7
        %v2276 = vshll.u32 %v2175, 16
        %v2278 = vor.u32 %v2275, %v2276
        %v2279 = vsel %vm1514, %v2271, %v2278
        %2288 = vst.msk [vmem:[#allocation3 + $0xc] sm:$0xf] %vm1419, %v2188
        %2289 = vst.msk [vmem:[#allocation3 + $0x20] sm:$0xf] %vm1419, %v2201
        %2290 = vst.msk [vmem:[#allocation3 + $0x34] sm:$0xf] %vm1419, %v2214
        %2291 = vst.msk [vmem:[#allocation3 + $0x48] sm:$0xf] %vm1419, %v2227
        %2292 = vst.msk [vmem:[#allocation3 + $0x5c] sm:$0xf] %vm1419, %v2240
        %2293 = vst.msk [vmem:[#allocation3 + $0x70] sm:$0xf] %vm1419, %v2253
        %2294 = vst.msk [vmem:[#allocation3 + $0x84] sm:$0xf] %vm1419, %v2266
        %2295 = vst.msk [vmem:[#allocation3 + $0x98] sm:$0xf] %vm1419, %v2279
        %v2296 = vld [vmem:[%s2159 + $0x4] sm:$0xf]
        %v2297 = vld [vmem:[%s2159 + $0x10] sm:$0xf]
        %v2298 = vld [vmem:[%s2159 + $0x1c] sm:$0xf]
        %v2299 = vld [vmem:[%s2159 + $0x28] sm:$0xf]
        %v2300 = vld [vmem:[%s2159 + $0x34] sm:$0xf]
        %v2301 = vld [vmem:[%s2159 + $0x40] sm:$0xf]
        %v2302 = vld [vmem:[%s2159 + $0x4c] sm:$0xf]
        %v2303 = vld [vmem:[%s2159 + $0x58] sm:$0xf]
        %2312 = vrot.lane.b32.xlu0 %v2296, 64
        %v2313 = vpop.permute.xlu0 %2312
        %2314 = vrot.lane.b32.xlu0 %v2297, 64
        %v2315 = vpop.permute.xlu0 %2314
        %2316 = vrot.lane.b32.xlu0 %v2298, 64
        %v2317 = vpop.permute.xlu0 %2316
        %2318 = vrot.lane.b32.xlu0 %v2299, 64
        %v2319 = vpop.permute.xlu0 %2318
        %2320 = vrot.lane.b32.xlu0 %v2300, 64
        %v2321 = vpop.permute.xlu0 %2320
        %2322 = vrot.lane.b32.xlu0 %v2301, 64
        %v2323 = vpop.permute.xlu0 %2322
        %2324 = vrot.lane.b32.xlu0 %v2302, 64
        %v2325 = vpop.permute.xlu0 %2324
        %2326 = vrot.lane.b32.xlu0 %v2303, 64
        %v2327 = vpop.permute.xlu0 %2326
        %2336 = vst.msk [vmem:[#allocation3 + $0xc] sm:$0xf] %vm1675, %v2313
        %2337 = vst.msk [vmem:[#allocation3 + $0x20] sm:$0xf] %vm1675, %v2315
        %2338 = vst.msk [vmem:[#allocation3 + $0x34] sm:$0xf] %vm1675, %v2317
        %2339 = vst.msk [vmem:[#allocation3 + $0x48] sm:$0xf] %vm1675, %v2319
        %2340 = vst.msk [vmem:[#allocation3 + $0x5c] sm:$0xf] %vm1675, %v2321
        %2341 = vst.msk [vmem:[#allocation3 + $0x70] sm:$0xf] %vm1675, %v2323
        %2342 = vst.msk [vmem:[#allocation3 + $0x84] sm:$0xf] %vm1675, %v2325
        %2343 = vst.msk [vmem:[#allocation3 + $0x98] sm:$0xf] %vm1675, %v2327
        %v2344 = vld [vmem:[%s2159 + $0x4] sm:$0xf]
        %v2345 = vld [vmem:[%s2159 + $0x8] sm:$0x1]
        %v2346 = vld [vmem:[%s2159 + $0x10] sm:$0xf]
        %v2347 = vld [vmem:[%s2159 + $0x14] sm:$0x1]
        %v2348 = vld [vmem:[%s2159 + $0x1c] sm:$0xf]
        %v2349 = vld [vmem:[%s2159 + $0x20] sm:$0x1]
        %v2350 = vld [vmem:[%s2159 + $0x28] sm:$0xf]
        %v2351 = vld [vmem:[%s2159 + $0x2c] sm:$0x1]
        %v2352 = vld [vmem:[%s2159 + $0x34] sm:$0xf]
        %v2353 = vld [vmem:[%s2159 + $0x38] sm:$0x1]
        %v2354 = vld [vmem:[%s2159 + $0x40] sm:$0xf]
        %v2355 = vld [vmem:[%s2159 + $0x44] sm:$0x1]
        %v2356 = vld [vmem:[%s2159 + $0x4c] sm:$0xf]
        %v2357 = vld [vmem:[%s2159 + $0x50] sm:$0x1]
        %v2358 = vld [vmem:[%s2159 + $0x58] sm:$0xf]
        %v2359 = vld [vmem:[%s2159 + $0x5c] sm:$0x1]
        %v2361 = vshrl.u32 %v2344, 16
        %v2363 = vrot.slane %v2361, 4
        %v2364 = vshll.u32 %v2344, 16
        %v2366 = vrot.slane %v2364, 5
        %v2367 = vor.u32 %v2363, %v2366
        %v2368 = vrot.slane %v2367, 4
        %v2370 = vshll.u32 %v2345, 16
        %v2372 = vrot.slane %v2370, 5
        %v2373 = vsel %vm1702, %v2368, %v2372
        %v2375 = vshrl.u32 %v2346, 16
        %v2377 = vrot.slane %v2375, 4
        %v2378 = vshll.u32 %v2346, 16
        %v2380 = vrot.slane %v2378, 5
        %v2381 = vor.u32 %v2377, %v2380
        %v2382 = vrot.slane %v2381, 4
        %v2384 = vshll.u32 %v2347, 16
        %v2386 = vrot.slane %v2384, 5
        %v2387 = vsel %vm1702, %v2382, %v2386
        %v2389 = vshrl.u32 %v2348, 16
        %v2391 = vrot.slane %v2389, 4
        %v2392 = vshll.u32 %v2348, 16
        %v2394 = vrot.slane %v2392, 5
        %v2395 = vor.u32 %v2391, %v2394
        %v2396 = vrot.slane %v2395, 4
        %v2398 = vshll.u32 %v2349, 16
        %v2400 = vrot.slane %v2398, 5
        %v2401 = vsel %vm1702, %v2396, %v2400
        %v2403 = vshrl.u32 %v2350, 16
        %v2405 = vrot.slane %v2403, 4
        %v2406 = vshll.u32 %v2350, 16
        %v2408 = vrot.slane %v2406, 5
        %v2409 = vor.u32 %v2405, %v2408
        %v2410 = vrot.slane %v2409, 4
        %v2412 = vshll.u32 %v2351, 16
        %v2414 = vrot.slane %v2412, 5
        %v2415 = vsel %vm1702, %v2410, %v2414
        %v2417 = vshrl.u32 %v2352, 16
        %v2419 = vrot.slane %v2417, 4
        %v2420 = vshll.u32 %v2352, 16
        %v2422 = vrot.slane %v2420, 5
        %v2423 = vor.u32 %v2419, %v2422
        %v2424 = vrot.slane %v2423, 4
        %v2426 = vshll.u32 %v2353, 16
        %v2428 = vrot.slane %v2426, 5
        %v2429 = vsel %vm1702, %v2424, %v2428
        %v2431 = vshrl.u32 %v2354, 16
        %v2433 = vrot.slane %v2431, 4
        %v2434 = vshll.u32 %v2354, 16
        %v2436 = vrot.slane %v2434, 5
        %v2437 = vor.u32 %v2433, %v2436
        %v2438 = vrot.slane %v2437, 4
        %v2440 = vshll.u32 %v2355, 16
        %v2442 = vrot.slane %v2440, 5
        %v2443 = vsel %vm1702, %v2438, %v2442
        %v2445 = vshrl.u32 %v2356, 16
        %v2447 = vrot.slane %v2445, 4
        %v2448 = vshll.u32 %v2356, 16
        %v2450 = vrot.slane %v2448, 5
        %v2451 = vor.u32 %v2447, %v2450
        %v2452 = vrot.slane %v2451, 4
        %v2454 = vshll.u32 %v2357, 16
        %v2456 = vrot.slane %v2454, 5
        %v2457 = vsel %vm1702, %v2452, %v2456
        %v2459 = vshrl.u32 %v2358, 16
        %v2461 = vrot.slane %v2459, 4
        %v2462 = vshll.u32 %v2358, 16
        %v2464 = vrot.slane %v2462, 5
        %v2465 = vor.u32 %v2461, %v2464
        %v2466 = vrot.slane %v2465, 4
        %v2468 = vshll.u32 %v2359, 16
        %v2470 = vrot.slane %v2468, 5
        %v2471 = vsel %vm1702, %v2466, %v2470
        %2480 = vst.msk [vmem:[#allocation3 + $0x10] sm:$0xf] %vm1419, %v2373
        %2481 = vst.msk [vmem:[#allocation3 + $0x24] sm:$0xf] %vm1419, %v2387
        %2482 = vst.msk [vmem:[#allocation3 + $0x38] sm:$0xf] %vm1419, %v2401
        %2483 = vst.msk [vmem:[#allocation3 + $0x4c] sm:$0xf] %vm1419, %v2415
        %2484 = vst.msk [vmem:[#allocation3 + $0x60] sm:$0xf] %vm1419, %v2429
        %2485 = vst.msk [vmem:[#allocation3 + $0x74] sm:$0xf] %vm1419, %v2443
        %2486 = vst.msk [vmem:[#allocation3 + $0x88] sm:$0xf] %vm1419, %v2457
        %2487 = vst.msk [vmem:[#allocation3 + $0x9c] sm:$0xf] %vm1419, %v2471
        %v2488 = vld [vmem:[#allocation3] sm:$0xff]
        %v2489 = vld [vmem:[#allocation3 + $0x8] sm:$0xff]
        %v2490 = vld [vmem:[#allocation3 + $0x10] sm:$0xf]
        %v2491 = vld [vmem:[#allocation3 + $0x14] sm:$0xff]
        %v2492 = vld [vmem:[#allocation3 + $0x1c] sm:$0xff]
        %v2493 = vld [vmem:[#allocation3 + $0x24] sm:$0xf]
        %v2494 = vld [vmem:[#allocation3 + $0x28] sm:$0xff]
        %v2495 = vld [vmem:[#allocation3 + $0x30] sm:$0xff]
        %v2496 = vld [vmem:[#allocation3 + $0x38] sm:$0xf]
        %v2497 = vld [vmem:[#allocation3 + $0x3c] sm:$0xff]
        %v2498 = vld [vmem:[#allocation3 + $0x44] sm:$0xff]
        %v2499 = vld [vmem:[#allocation3 + $0x4c] sm:$0xf]
        %v2500 = vld [vmem:[#allocation3 + $0x50] sm:$0xff]
        %v2501 = vld [vmem:[#allocation3 + $0x58] sm:$0xff]
        %v2502 = vld [vmem:[#allocation3 + $0x60] sm:$0xf]
        %v2503 = vld [vmem:[#allocation3 + $0x64] sm:$0xff]
        %v2504 = vld [vmem:[#allocation3 + $0x6c] sm:$0xff]
        %v2505 = vld [vmem:[#allocation3 + $0x74] sm:$0xf]
        %v2506 = vld [vmem:[#allocation3 + $0x78] sm:$0xff]
        %v2507 = vld [vmem:[#allocation3 + $0x80] sm:$0xff]
        %v2508 = vld [vmem:[#allocation3 + $0x88] sm:$0xf]
        %v2509 = vld [vmem:[#allocation3 + $0x8c] sm:$0xff]
        %v2510 = vld [vmem:[#allocation3 + $0x94] sm:$0xff]
        %v2511 = vld [vmem:[#allocation3 + $0x9c] sm:$0xf]
        %v2512 = vld [vmem:[%s2] sm:$0xf]
        %v2513 = vld [vmem:[%s2 + $0x4] sm:$0xf]
        %v2514 = vld [vmem:[%s2 + $0x8] sm:$0xf]
        %v2515 = vld [vmem:[%s2 + $0xc] sm:$0xf]
        %v2516 = vld [vmem:[%s2 + $0x10] sm:$0xf]
        %v2517 = vld [vmem:[%s2 + $0x14] sm:$0xf]
        %v2518 = vld [vmem:[%s2 + $0x18] sm:$0xf]
        %v2519 = vld [vmem:[%s2 + $0x1c] sm:$0xf]
        %v2520 = vld [vmem:[%s2 + $0x20] sm:$0xf]
        %v2521 = vld [vmem:[%s2 + $0x24] sm:$0xf]
        %v2522 = vld [vmem:[%s2 + $0x28] sm:$0xf]
        %v2523 = vld [vmem:[%s2 + $0x2c] sm:$0xf]
        %v2524 = vld [vmem:[%s2 + $0x30] sm:$0xf]
        %v2525 = vld [vmem:[%s2 + $0x34] sm:$0xf]
        %v2526 = vld [vmem:[%s2 + $0x38] sm:$0xf]
        %v2527 = vld [vmem:[%s2 + $0x3c] sm:$0xf]
        %v2528 = vld [vmem:[%s2 + $0x40] sm:$0xf]
        %v2529 = vld [vmem:[%s2 + $0x44] sm:$0xf]
        %v2530 = vld [vmem:[%s2 + $0x48] sm:$0xf]
        %v2531 = vld [vmem:[%s2 + $0x4c] sm:$0xf]
        %v2532 = vld [vmem:[%s2 + $0x50] sm:$0xf]
        %v2533 = vld [vmem:[%s2 + $0x54] sm:$0xf]
        %v2534 = vld [vmem:[%s2 + $0x58] sm:$0xf]
        %v2535 = vld [vmem:[%s2 + $0x5c] sm:$0xf]
        %v2536 = vld [vmem:[%s2 + $0x60] sm:$0xf]
        %v2537 = vld [vmem:[%s2 + $0x64] sm:$0xf]
        %v2538 = vld [vmem:[%s2 + $0x68] sm:$0xf]
        %v2539 = vld [vmem:[%s2 + $0x6c] sm:$0xf]
        %v2540 = vld [vmem:[%s2 + $0x70] sm:$0xf]
        %v2541 = vld [vmem:[%s2 + $0x74] sm:$0xf]
        %v2542 = vld [vmem:[%s2 + $0x78] sm:$0xf]
        %v2543 = vld [vmem:[%s2 + $0x7c] sm:$0xf]
        %v2544 = vld [vmem:[%s2 + $0x80] sm:$0xf]
        %v2545 = vld [vmem:[%s2 + $0x84] sm:$0xf]
        %v2546 = vld [vmem:[%s2 + $0x88] sm:$0xf]
        %v2547 = vld [vmem:[%s2 + $0x8c] sm:$0xf]
        %v2548 = vld [vmem:[%s2 + $0x90] sm:$0xf]
        %v2549 = vld [vmem:[%s2 + $0x94] sm:$0xf]
        %v2550 = vld [vmem:[%s2 + $0x98] sm:$0xf]
        %v2551 = vld [vmem:[%s2 + $0x9c] sm:$0xf]
        %v2552 = vld [vmem:[%s2 + $0xa0] sm:$0xf]
        %v2553 = vld [vmem:[%s2 + $0xa4] sm:$0xf]
        %v2554 = vld [vmem:[%s2 + $0xa8] sm:$0xf]
        %v2555 = vld [vmem:[%s2 + $0xac] sm:$0xf]
        %v2556 = vld [vmem:[%s2 + $0xb0] sm:$0xf]
        %v2557 = vld [vmem:[%s2 + $0xb4] sm:$0xf]
        %v2558 = vld [vmem:[%s2 + $0xb8] sm:$0xf]
        %v2559 = vld [vmem:[%s2 + $0xbc] sm:$0xf]
        %v2560 = vld [vmem:[%s2 + $0xc0] sm:$0xf]
        %v2561 = vld [vmem:[%s2 + $0xc4] sm:$0xf]
        %v2562 = vld [vmem:[%s2 + $0xc8] sm:$0xf]
        %v2563 = vld [vmem:[%s2 + $0xcc] sm:$0xf]
        %v2564 = vld [vmem:[%s2 + $0xd0] sm:$0xf]
        %v2565 = vld [vmem:[%s2 + $0xd4] sm:$0xf]
        %v2566 = vld [vmem:[%s2 + $0xd8] sm:$0xf]
        %v2567 = vld [vmem:[%s2 + $0xdc] sm:$0xf]
        %v2568 = vld [vmem:[%s2 + $0xe0] sm:$0xf]
        %v2569 = vld [vmem:[%s2 + $0xe4] sm:$0xf]
        %v2570 = vld [vmem:[%s2 + $0xe8] sm:$0xf]
        %v2571 = vld [vmem:[%s2 + $0xec] sm:$0xf]
        %v2572 = vld [vmem:[%s2 + $0xf0] sm:$0xf]
        %v2573 = vld [vmem:[%s2 + $0xf4] sm:$0xf]
        %v2574 = vld [vmem:[%s2 + $0xf8] sm:$0xf]
        %v2575 = vld [vmem:[%s2 + $0xfc] sm:$0xf]
        %v2576 = vld [vmem:[%s2 + $0x100] sm:$0xf]
        %v2577 = vld [vmem:[%s2 + $0x104] sm:$0xf]
        %v2578 = vld [vmem:[%s2 + $0x108] sm:$0xf]
        %v2579 = vld [vmem:[%s2 + $0x10c] sm:$0xf]
        %v2580 = vld [vmem:[%s2 + $0x110] sm:$0xf]
        %v2581 = vld [vmem:[%s2 + $0x114] sm:$0xf]
        %v2582 = vld [vmem:[%s2 + $0x118] sm:$0xf]
        %v2583 = vld [vmem:[%s2 + $0x11c] sm:$0xf]
        %v2608 = vunpack.c.l.b16 %v2488
        %v2609 = vunpack.c.h.b16 %v2488
        %v2610 = vunpack.c.l.b16 %v2489
        %v2611 = vunpack.c.h.b16 %v2489
        %v2612 = vunpack.c.l.b16 %v2490
        %v2613 = vunpack.c.l.b16 %v2491
        %v2614 = vunpack.c.h.b16 %v2491
        %v2615 = vunpack.c.l.b16 %v2492
        %v2616 = vunpack.c.h.b16 %v2492
        %v2617 = vunpack.c.l.b16 %v2493
        %v2618 = vunpack.c.l.b16 %v2494
        %v2619 = vunpack.c.h.b16 %v2494
        %v2620 = vunpack.c.l.b16 %v2495
        %v2621 = vunpack.c.h.b16 %v2495
        %v2622 = vunpack.c.l.b16 %v2496
        %v2623 = vunpack.c.l.b16 %v2497
        %v2624 = vunpack.c.h.b16 %v2497
        %v2625 = vunpack.c.l.b16 %v2498
        %v2626 = vunpack.c.h.b16 %v2498
        %v2627 = vunpack.c.l.b16 %v2499
        %v2628 = vunpack.c.l.b16 %v2500
        %v2629 = vunpack.c.h.b16 %v2500
        %v2630 = vunpack.c.l.b16 %v2501
        %v2631 = vunpack.c.h.b16 %v2501
        %v2632 = vunpack.c.l.b16 %v2502
        %v2633 = vunpack.c.l.b16 %v2503
        %v2634 = vunpack.c.h.b16 %v2503
        %v2635 = vunpack.c.l.b16 %v2504
        %v2636 = vunpack.c.h.b16 %v2504
        %v2637 = vunpack.c.l.b16 %v2505
        %v2638 = vunpack.c.l.b16 %v2506
        %v2639 = vunpack.c.h.b16 %v2506
        %v2640 = vunpack.c.l.b16 %v2507
        %v2641 = vunpack.c.h.b16 %v2507
        %v2642 = vunpack.c.l.b16 %v2508
        %v2643 = vunpack.c.l.b16 %v2509
        %v2644 = vunpack.c.h.b16 %v2509
        %v2645 = vunpack.c.l.b16 %v2510
        %v2646 = vunpack.c.h.b16 %v2510
        %v2647 = vunpack.c.l.b16 %v2511
        %v2648 = vpack.c.b16 %v2613, %v2608
        %v2649 = vpack.c.b16 %v2614, %v2609
        %v2650 = vpack.c.b16 %v2615, %v2610
        %v2651 = vpack.c.b16 %v2616, %v2611
        %v2652 = vpack.c.b16 %v2617, %v2612
        %v2653 = vpack.c.b16 %v2623, %v2618
        %v2654 = vpack.c.b16 %v2624, %v2619
        %v2655 = vpack.c.b16 %v2625, %v2620
        %v2656 = vpack.c.b16 %v2626, %v2621
        %v2657 = vpack.c.b16 %v2627, %v2622
        %v2658 = vpack.c.b16 %v2633, %v2628
        %v2659 = vpack.c.b16 %v2634, %v2629
        %v2660 = vpack.c.b16 %v2635, %v2630
        %v2661 = vpack.c.b16 %v2636, %v2631
        %v2662 = vpack.c.b16 %v2637, %v2632
        %v2663 = vpack.c.b16 %v2643, %v2638
        %v2664 = vpack.c.b16 %v2644, %v2639
        %v2665 = vpack.c.b16 %v2645, %v2640
        %v2666 = vpack.c.b16 %v2646, %v2641
        %v2667 = vpack.c.b16 %v2647, %v2642
        %v2756 = vunpack.c.l.b16 %v2512
        %v2757 = vunpack.c.l.b16 %v2513
        %v2758 = vunpack.c.l.b16 %v2514
        %v2759 = vunpack.c.l.b16 %v2515
        %v2760 = vunpack.c.l.b16 %v2516
        %v2761 = vunpack.c.l.b16 %v2517
        %v2762 = vunpack.c.l.b16 %v2518
        %v2763 = vunpack.c.l.b16 %v2519
        %v2764 = vunpack.c.l.b16 %v2520
        %v2765 = vunpack.c.l.b16 %v2521
        %v2766 = vunpack.c.l.b16 %v2522
        %v2767 = vunpack.c.l.b16 %v2523
        %v2768 = vunpack.c.l.b16 %v2524
        %v2769 = vunpack.c.l.b16 %v2525
        %v2770 = vunpack.c.l.b16 %v2526
        %v2771 = vunpack.c.l.b16 %v2527
        %v2772 = vunpack.c.l.b16 %v2528
        %v2773 = vunpack.c.l.b16 %v2529
        %v2774 = vunpack.c.l.b16 %v2530
        %v2775 = vunpack.c.l.b16 %v2531
        %v2776 = vunpack.c.l.b16 %v2532
        %v2777 = vunpack.c.l.b16 %v2533
        %v2778 = vunpack.c.l.b16 %v2534
        %v2779 = vunpack.c.l.b16 %v2535
        %v2780 = vunpack.c.l.b16 %v2536
        %v2781 = vunpack.c.l.b16 %v2537
        %v2782 = vunpack.c.l.b16 %v2538
        %v2783 = vunpack.c.l.b16 %v2539
        %v2784 = vunpack.c.l.b16 %v2540
        %v2785 = vunpack.c.l.b16 %v2541
        %v2786 = vunpack.c.l.b16 %v2542
        %v2787 = vunpack.c.l.b16 %v2543
        %v2788 = vunpack.c.l.b16 %v2544
        %v2789 = vunpack.c.l.b16 %v2545
        %v2790 = vunpack.c.l.b16 %v2546
        %v2791 = vunpack.c.l.b16 %v2547
        %v2792 = vunpack.c.l.b16 %v2548
        %v2793 = vunpack.c.l.b16 %v2549
        %v2794 = vunpack.c.l.b16 %v2550
        %v2795 = vunpack.c.l.b16 %v2551
        %v2796 = vunpack.c.l.b16 %v2552
        %v2797 = vunpack.c.l.b16 %v2553
        %v2798 = vunpack.c.l.b16 %v2554
        %v2799 = vunpack.c.l.b16 %v2555
        %v2800 = vunpack.c.l.b16 %v2556
        %v2801 = vunpack.c.l.b16 %v2557
        %v2802 = vunpack.c.l.b16 %v2558
        %v2803 = vunpack.c.l.b16 %v2559
        %v2804 = vunpack.c.l.b16 %v2560
        %v2805 = vunpack.c.l.b16 %v2561
        %v2806 = vunpack.c.l.b16 %v2562
        %v2807 = vunpack.c.l.b16 %v2563
        %v2808 = vunpack.c.l.b16 %v2564
        %v2809 = vunpack.c.l.b16 %v2565
        %v2810 = vunpack.c.l.b16 %v2566
        %v2811 = vunpack.c.l.b16 %v2567
        %v2812 = vunpack.c.l.b16 %v2568
        %v2813 = vunpack.c.l.b16 %v2569
        %v2814 = vunpack.c.l.b16 %v2570
        %v2815 = vunpack.c.l.b16 %v2571
        %v2816 = vunpack.c.l.b16 %v2572
        %v2817 = vunpack.c.l.b16 %v2573
        %v2818 = vunpack.c.l.b16 %v2574
        %v2819 = vunpack.c.l.b16 %v2575
        %v2820 = vunpack.c.l.b16 %v2576
        %v2821 = vunpack.c.l.b16 %v2577
        %v2822 = vunpack.c.l.b16 %v2578
        %v2823 = vunpack.c.l.b16 %v2579
        %v2824 = vunpack.c.l.b16 %v2580
        %v2825 = vunpack.c.l.b16 %v2581
        %v2826 = vunpack.c.l.b16 %v2582
        %v2827 = vunpack.c.l.b16 %v2583
        %v2828 = vpack.c.b16 %v2757, %v2756
        %v2829 = vpack.c.b16 %v2759, %v2758
        %v2830 = vpack.c.b16 %v2761, %v2760
        %v2831 = vpack.c.b16 %v2763, %v2762
        %v2832 = vpack.c.b16 %v2765, %v2764
        %v2833 = vpack.c.b16 %v2767, %v2766
        %v2834 = vpack.c.b16 %v2769, %v2768
        %v2835 = vpack.c.b16 %v2771, %v2770
        %v2836 = vpack.c.b16 %v2773, %v2772
        %v2837 = vpack.c.b16 %v2775, %v2774
        %v2838 = vpack.c.b16 %v2777, %v2776
        %v2839 = vpack.c.b16 %v2779, %v2778
        %v2840 = vpack.c.b16 %v2781, %v2780
        %v2841 = vpack.c.b16 %v2783, %v2782
        %v2842 = vpack.c.b16 %v2785, %v2784
        %v2843 = vpack.c.b16 %v2787, %v2786
        %v2844 = vpack.c.b16 %v2789, %v2788
        %v2845 = vpack.c.b16 %v2791, %v2790
        %v2846 = vpack.c.b16 %v2793, %v2792
        %v2847 = vpack.c.b16 %v2795, %v2794
        %v2848 = vpack.c.b16 %v2797, %v2796
        %v2849 = vpack.c.b16 %v2799, %v2798
        %v2850 = vpack.c.b16 %v2801, %v2800
        %v2851 = vpack.c.b16 %v2803, %v2802
        %v2852 = vpack.c.b16 %v2805, %v2804
        %v2853 = vpack.c.b16 %v2807, %v2806
        %v2854 = vpack.c.b16 %v2809, %v2808
        %v2855 = vpack.c.b16 %v2811, %v2810
        %v2856 = vpack.c.b16 %v2813, %v2812
        %v2857 = vpack.c.b16 %v2815, %v2814
        %v2858 = vpack.c.b16 %v2817, %v2816
        %v2859 = vpack.c.b16 %v2819, %v2818
        %v2860 = vpack.c.b16 %v2821, %v2820
        %v2861 = vpack.c.b16 %v2823, %v2822
        %v2862 = vpack.c.b16 %v2825, %v2824
        %v2863 = vpack.c.b16 %v2827, %v2826
        %vm2900 = vcmask 523264
        %v2902 = vsel %vm2900, %v2652, 0
        %v2905 = vsel %vm2900, %v2657, 0
        %v2908 = vsel %vm2900, %v2662, 0
        %v2911 = vsel %vm2900, %v2667, 0
        %2913 = vmatpush.bf16.msra.mxu0 %v2835
        %2914 = vmatpush.bf16.msra.mxu0 %v2834
        %2915 = vmatpush.bf16.msra.mxu0 %v2833
        %2916 = vmatpush.bf16.msra.mxu0 %v2832
        %2917 = vmatpush.bf16.msra.mxu0 %v2831
        %2918 = vmatpush.bf16.msra.mxu0 %v2830
        %2919 = vmatpush.bf16.msra.mxu0 %v2829
        %2920 = vmatpush.bf16.msra.mxu0 %v2828
        %2921 = vmatmul.bf16.gmra.mxu0 %v2648
        %v2922 = vpop.f32.mrf.mxu0
        %v2923 = vadd.f32 0.0, %v2922
        %v2924 = vpop.f32.mrf.mxu0
        %v2925 = vadd.f32 0.0, %v2924
        %2926 = vmatmul.bf16.gmra.mxu0 %v2653
        %v2927 = vpop.f32.mrf.mxu0
        %v2928 = vadd.f32 0.0, %v2927
        %v2929 = vpop.f32.mrf.mxu0
        %v2930 = vadd.f32 0.0, %v2929
        %2931 = vmatmul.bf16.gmra.mxu0 %v2658
        %v2932 = vpop.f32.mrf.mxu0
        %v2933 = vadd.f32 0.0, %v2932
        %v2934 = vpop.f32.mrf.mxu0
        %v2935 = vadd.f32 0.0, %v2934
        %2936 = vmatmul.bf16.gmra.mxu0 %v2663
        %v2937 = vpop.f32.mrf.mxu0
        %v2938 = vadd.f32 0.0, %v2937
        %v2939 = vpop.f32.mrf.mxu0
        %v2940 = vadd.f32 0.0, %v2939
        %2941 = vdwg.mxu0
        %2942 = vmatpush.bf16.msra.mxu0 %v2843
        %2943 = vmatpush.bf16.msra.mxu0 %v2842
        %2944 = vmatpush.bf16.msra.mxu0 %v2841
        %2945 = vmatpush.bf16.msra.mxu0 %v2840
        %2946 = vmatpush.bf16.msra.mxu0 %v2839
        %2947 = vmatpush.bf16.msra.mxu0 %v2838
        %2948 = vmatpush.bf16.msra.mxu0 %v2837
        %2949 = vmatpush.bf16.msra.mxu0 %v2836
        %2950 = vmatmul.bf16.gmra.mxu0 %v2649
        %v2951 = vpop.f32.mrf.mxu0
        %v2952 = vadd.f32 %v2923, %v2951
        %v2953 = vpop.f32.mrf.mxu0
        %v2954 = vadd.f32 %v2925, %v2953
        %2955 = vmatmul.bf16.gmra.mxu0 %v2654
        %v2956 = vpop.f32.mrf.mxu0
        %v2957 = vadd.f32 %v2928, %v2956
        %v2958 = vpop.f32.mrf.mxu0
        %v2959 = vadd.f32 %v2930, %v2958
        %2960 = vmatmul.bf16.gmra.mxu0 %v2659
        %v2961 = vpop.f32.mrf.mxu0
        %v2962 = vadd.f32 %v2933, %v2961
        %v2963 = vpop.f32.mrf.mxu0
        %v2964 = vadd.f32 %v2935, %v2963
        %2965 = vmatmul.bf16.gmra.mxu0 %v2664
        %v2966 = vpop.f32.mrf.mxu0
        %v2967 = vadd.f32 %v2938, %v2966
        %v2968 = vpop.f32.mrf.mxu0
        %v2969 = vadd.f32 %v2940, %v2968
        %2970 = vdwg.mxu0
        %2971 = vmatpush.bf16.msra.mxu0 %v2851
        %2972 = vmatpush.bf16.msra.mxu0 %v2850
        %2973 = vmatpush.bf16.msra.mxu0 %v2849
        %2974 = vmatpush.bf16.msra.mxu0 %v2848
        %2975 = vmatpush.bf16.msra.mxu0 %v2847
        %2976 = vmatpush.bf16.msra.mxu0 %v2846
        %2977 = vmatpush.bf16.msra.mxu0 %v2845
        %2978 = vmatpush.bf16.msra.mxu0 %v2844
        %2979 = vmatmul.bf16.gmra.mxu0 %v2650
        %v2980 = vpop.f32.mrf.mxu0
        %v2981 = vadd.f32 %v2952, %v2980
        %v2982 = vpop.f32.mrf.mxu0
        %v2983 = vadd.f32 %v2954, %v2982
        %2984 = vmatmul.bf16.gmra.mxu0 %v2655
        %v2985 = vpop.f32.mrf.mxu0
        %v2986 = vadd.f32 %v2957, %v2985
        %v2987 = vpop.f32.mrf.mxu0
        %v2988 = vadd.f32 %v2959, %v2987
        %2989 = vmatmul.bf16.gmra.mxu0 %v2660
        %v2990 = vpop.f32.mrf.mxu0
        %v2991 = vadd.f32 %v2962, %v2990
        %v2992 = vpop.f32.mrf.mxu0
        %v2993 = vadd.f32 %v2964, %v2992
        %2994 = vmatmul.bf16.gmra.mxu0 %v2665
        %v2995 = vpop.f32.mrf.mxu0
        %v2996 = vadd.f32 %v2967, %v2995
        %v2997 = vpop.f32.mrf.mxu0
        %v2998 = vadd.f32 %v2969, %v2997
        %2999 = vdwg.mxu0
        %3000 = vmatpush.bf16.msra.mxu0 %v2859
        %3001 = vmatpush.bf16.msra.mxu0 %v2858
        %3002 = vmatpush.bf16.msra.mxu0 %v2857
        %3003 = vmatpush.bf16.msra.mxu0 %v2856
        %3004 = vmatpush.bf16.msra.mxu0 %v2855
        %3005 = vmatpush.bf16.msra.mxu0 %v2854
        %3006 = vmatpush.bf16.msra.mxu0 %v2853
        %3007 = vmatpush.bf16.msra.mxu0 %v2852
        %3008 = vmatmul.bf16.gmra.mxu0 %v2651
        %v3009 = vpop.f32.mrf.mxu0
        %v3010 = vadd.f32 %v2981, %v3009
        %v3011 = vpop.f32.mrf.mxu0
        %v3012 = vadd.f32 %v2983, %v3011
        %3013 = vmatmul.bf16.gmra.mxu0 %v2656
        %v3014 = vpop.f32.mrf.mxu0
        %v3015 = vadd.f32 %v2986, %v3014
        %v3016 = vpop.f32.mrf.mxu0
        %v3017 = vadd.f32 %v2988, %v3016
        %3018 = vmatmul.bf16.gmra.mxu0 %v2661
        %v3019 = vpop.f32.mrf.mxu0
        %v3020 = vadd.f32 %v2991, %v3019
        %v3021 = vpop.f32.mrf.mxu0
        %v3022 = vadd.f32 %v2993, %v3021
        %3023 = vmatmul.bf16.gmra.mxu0 %v2666
        %v3024 = vpop.f32.mrf.mxu0
        %v3025 = vadd.f32 %v2996, %v3024
        %v3026 = vpop.f32.mrf.mxu0
        %v3027 = vadd.f32 %v2998, %v3026
        %3028 = vdwg.mxu0
        %3029 = vmatpush.bf16.msra.mxu0 0
        %3030 = vmatpush.bf16.msra.mxu0 0
        %3031 = vmatpush.bf16.msra.mxu0 0
        %3032 = vmatpush.bf16.msra.mxu0 0
        %3033 = vmatpush.bf16.msra.mxu0 %v2863
        %3034 = vmatpush.bf16.msra.mxu0 %v2862
        %3035 = vmatpush.bf16.msra.mxu0 %v2861
        %3036 = vmatpush.bf16.msra.mxu0 %v2860
        %3037 = vmatmul.bf16.gmra.mxu0 %v2902
        %v3038 = vpop.f32.mrf.mxu0
        %v3039 = vadd.f32 %v3010, %v3038
        %v3040 = vpop.f32.mrf.mxu0
        %v3041 = vadd.f32 %v3012, %v3040
        %3042 = vmatmul.bf16.gmra.mxu0 %v2905
        %v3043 = vpop.f32.mrf.mxu0
        %v3044 = vadd.f32 %v3015, %v3043
        %v3045 = vpop.f32.mrf.mxu0
        %v3046 = vadd.f32 %v3017, %v3045
        %3047 = vmatmul.bf16.gmra.mxu0 %v2908
        %v3048 = vpop.f32.mrf.mxu0
        %v3049 = vadd.f32 %v3020, %v3048
        %v3050 = vpop.f32.mrf.mxu0
        %v3051 = vadd.f32 %v3022, %v3050
        %3052 = vmatmul.bf16.gmra.mxu0 %v2911
        %v3053 = vpop.f32.mrf.mxu0
        %v3054 = vadd.f32 %v3025, %v3053
        %v3055 = vpop.f32.mrf.mxu0
        %v3056 = vadd.f32 %v3027, %v3055
        %3057 = vdwg.mxu0
        %v3058 = vperm.slane %v277, 1
        %v3059 = vmul.f32 %v3039, %v3058
        %v3060 = vmul.f32 %v3041, %v3058
        %v3061 = vmul.f32 %v3044, %v3058
        %v3062 = vmul.f32 %v3046, %v3058
        %v3063 = vmul.f32 %v3049, %v3058
        %v3064 = vmul.f32 %v3051, %v3058
        %v3065 = vmul.f32 %v3054, %v3058
        %v3066 = vmul.f32 %v3056, %v3058
        %v3067 = vperm.slane %v278, 1
        %v3068 = vadd.f32 %v3059, %v3067
        %v3069 = vadd.f32 %v3060, %v3067
        %v3070 = vadd.f32 %v3061, %v3067
        %v3071 = vadd.f32 %v3062, %v3067
        %v3072 = vadd.f32 %v3063, %v3067
        %v3073 = vadd.f32 %v3064, %v3067
        %v3074 = vadd.f32 %v3065, %v3067
        %v3075 = vadd.f32 %v3066, %v3067
        %vm3076 = vcmp.gt.f32.partialorder %v3068, 0.0
        %vm3077 = vcmp.gt.f32.partialorder %v3069, 0.0
        %vm3078 = vcmp.gt.f32.partialorder %v3070, 0.0
        %vm3079 = vcmp.gt.f32.partialorder %v3071, 0.0
        %vm3080 = vcmp.gt.f32.partialorder %v3072, 0.0
        %vm3081 = vcmp.gt.f32.partialorder %v3073, 0.0
        %vm3082 = vcmp.gt.f32.partialorder %v3074, 0.0
        %vm3083 = vcmp.gt.f32.partialorder %v3075, 0.0
        %v3084 = vmul.f32 %v3068, 0.2
        %v3085 = vmul.f32 %v3069, 0.2
        %v3086 = vmul.f32 %v3070, 0.2
        %v3087 = vmul.f32 %v3071, 0.2
        %v3088 = vmul.f32 %v3072, 0.2
        %v3089 = vmul.f32 %v3073, 0.2
        %v3090 = vmul.f32 %v3074, 0.2
        %v3091 = vmul.f32 %v3075, 0.2
        %v3092 = vsel %vm3076, %v3068, %v3084
        %v3093 = vsel %vm3077, %v3069, %v3085
        %v3094 = vsel %vm3078, %v3070, %v3086
        %v3095 = vsel %vm3079, %v3071, %v3087
        %v3096 = vsel %vm3080, %v3072, %v3088
        %v3097 = vsel %vm3081, %v3073, %v3089
        %v3098 = vsel %vm3082, %v3074, %v3090
        %v3099 = vsel %vm3083, %v3075, %v3091
        %v3100 = vmax.f32 %v3092, %v3093
        %v3101 = vmax.f32 %v3094, %v3095
        %v3102 = vmax.f32 %v3096, %v3097
        %v3103 = vmax.f32 %v3098, %v3099
        %v3108 = vrot.slane %v3100, 2
        %v3109 = vrot.slane %v3100, 4
        %v3110 = vrot.slane %v3100, 6
        %v3111 = vrot.slane %v3101, 2
        %v3112 = vrot.slane %v3101, 4
        %v3113 = vrot.slane %v3101, 6
        %v3114 = vrot.slane %v3102, 2
        %v3115 = vrot.slane %v3102, 4
        %v3116 = vrot.slane %v3102, 6
        %v3117 = vrot.slane %v3103, 2
        %v3118 = vrot.slane %v3103, 4
        %v3119 = vrot.slane %v3103, 6
        %v3132 = vrot.slane %v3100, 7
        %v3133 = vrot.slane %v3132, 2
        %v3134 = vrot.slane %v3108, 7
        %v3135 = vrot.slane %v3134, 2
        %v3136 = vrot.slane %v3109, 7
        %v3137 = vrot.slane %v3136, 2
        %v3138 = vrot.slane %v3110, 7
        %v3139 = vrot.slane %v3138, 2
        %v3140 = vrot.slane %v3101, 7
        %v3141 = vrot.slane %v3140, 2
        %v3142 = vrot.slane %v3111, 7
        %v3143 = vrot.slane %v3142, 2
        %v3144 = vrot.slane %v3112, 7
        %v3145 = vrot.slane %v3144, 2
        %v3146 = vrot.slane %v3113, 7
        %v3147 = vrot.slane %v3146, 2
        %v3148 = vrot.slane %v3102, 7
        %v3149 = vrot.slane %v3148, 2
        %v3150 = vrot.slane %v3114, 7
        %v3151 = vrot.slane %v3150, 2
        %v3152 = vrot.slane %v3115, 7
        %v3153 = vrot.slane %v3152, 2
        %v3154 = vrot.slane %v3116, 7
        %v3155 = vrot.slane %v3154, 2
        %v3156 = vrot.slane %v3103, 7
        %v3157 = vrot.slane %v3156, 2
        %v3158 = vrot.slane %v3117, 7
        %v3159 = vrot.slane %v3158, 2
        %v3160 = vrot.slane %v3118, 7
        %v3161 = vrot.slane %v3160, 2
        %v3162 = vrot.slane %v3119, 7
        %v3163 = vrot.slane %v3162, 2
        %v3180 = vmax.f32 %v3100, %v3133
        %v3181 = vmax.f32 %v3108, %v3135
        %v3182 = vmax.f32 %v3109, %v3137
        %v3183 = vmax.f32 %v3110, %v3139
        %v3184 = vmax.f32 %v3101, %v3141
        %v3185 = vmax.f32 %v3111, %v3143
        %v3186 = vmax.f32 %v3112, %v3145
        %v3187 = vmax.f32 %v3113, %v3147
        %v3188 = vmax.f32 %v3102, %v3149
        %v3189 = vmax.f32 %v3114, %v3151
        %v3190 = vmax.f32 %v3115, %v3153
        %v3191 = vmax.f32 %v3116, %v3155
        %v3192 = vmax.f32 %v3103, %v3157
        %v3193 = vmax.f32 %v3117, %v3159
        %v3194 = vmax.f32 %v3118, %v3161
        %v3195 = vmax.f32 %v3119, %v3163
        %v3196 = vpack.c.bf16 %v3180, %v3180
        %v3197 = vpack.c.bf16 %v3181, %v3181
        %v3198 = vpack.c.bf16 %v3182, %v3182
        %v3199 = vpack.c.bf16 %v3183, %v3183
        %v3200 = vpack.c.bf16 %v3184, %v3184
        %v3201 = vpack.c.bf16 %v3185, %v3185
        %v3202 = vpack.c.bf16 %v3186, %v3186
        %v3203 = vpack.c.bf16 %v3187, %v3187
        %v3204 = vpack.c.bf16 %v3188, %v3188
        %v3205 = vpack.c.bf16 %v3189, %v3189
        %v3206 = vpack.c.bf16 %v3190, %v3190
        %v3207 = vpack.c.bf16 %v3191, %v3191
        %v3208 = vpack.c.bf16 %v3192, %v3192
        %v3209 = vpack.c.bf16 %v3193, %v3193
        %v3210 = vpack.c.bf16 %v3194, %v3194
        %v3211 = vpack.c.bf16 %v3195, %v3195
        %v3228 = vunpack.c.l.b16 %v3196
        %v3229 = vunpack.c.l.b16 %v3197
        %v3230 = vunpack.c.l.b16 %v3198
        %v3231 = vunpack.c.l.b16 %v3199
        %v3232 = vunpack.c.l.b16 %v3200
        %v3233 = vunpack.c.l.b16 %v3201
        %v3234 = vunpack.c.l.b16 %v3202
        %v3235 = vunpack.c.l.b16 %v3203
        %v3236 = vunpack.c.l.b16 %v3204
        %v3237 = vunpack.c.l.b16 %v3205
        %v3238 = vunpack.c.l.b16 %v3206
        %v3239 = vunpack.c.l.b16 %v3207
        %v3240 = vunpack.c.l.b16 %v3208
        %v3241 = vunpack.c.l.b16 %v3209
        %v3242 = vunpack.c.l.b16 %v3210
        %v3243 = vunpack.c.l.b16 %v3211
        %v3244 = vrot.slane %v3229, 7
        %v3245 = vsel %vm1284, %v3244, %v3228
        %v3246 = vrot.slane %v3230, 6
        %v3247 = vsel %vm1287, %v3246, %v3245
        %v3248 = vrot.slane %v3231, 5
        %v3249 = vsel %vm1290, %v3248, %v3247
        %v3250 = vrot.slane %v3233, 7
        %v3251 = vsel %vm1284, %v3250, %v3232
        %v3252 = vrot.slane %v3234, 6
        %v3253 = vsel %vm1287, %v3252, %v3251
        %v3254 = vrot.slane %v3235, 5
        %v3255 = vsel %vm1290, %v3254, %v3253
        %v3256 = vrot.slane %v3237, 7
        %v3257 = vsel %vm1284, %v3256, %v3236
        %v3258 = vrot.slane %v3238, 6
        %v3259 = vsel %vm1287, %v3258, %v3257
        %v3260 = vrot.slane %v3239, 5
        %v3261 = vsel %vm1290, %v3260, %v3259
        %v3262 = vrot.slane %v3241, 7
        %v3263 = vsel %vm1284, %v3262, %v3240
        %v3264 = vrot.slane %v3242, 6
        %v3265 = vsel %vm1287, %v3264, %v3263
        %v3266 = vrot.slane %v3243, 5
        %v3267 = vsel %vm1290, %v3266, %v3265
        %v3268 = vpack.c.b16 %v3249, %v3249
        %v3269 = vpack.c.b16 %v3255, %v3255
        %v3270 = vpack.c.b16 %v3261, %v3261
        %v3271 = vpack.c.b16 %v3267, %v3267
        %vm3276 = vcmask 517120
        %3277 = vst.msk [vmem:[%s1418 + $0x4] sm:$0x3] %vm3276, %v3268
        %3278 = vst.msk [vmem:[%s1418 + $0x10] sm:$0x3] %vm3276, %v3269
        %3279 = vst.msk [vmem:[%s1418 + $0x1c] sm:$0x3] %vm3276, %v3270
        %3280 = vst.msk [vmem:[%s1418 + $0x28] sm:$0x3] %vm3276, %v3271
        %v3281 = vld [vmem:[#allocation2] sm:$0x8]
        %v3282 = vsel %vm1430, 0, %v3281
        %3283 = vst [vmem:[#allocation2] sm:$0x8] %v3282
        %vm3284 = vcmask 518144
        %vm3285 = vsmask.f32 2304
        %vm3286 = vmand %vm3284, %vm3285
        %v3287 = vld [vmem:[#allocation2 + $0x4] sm:$0x7]
        %v3288 = vsel %vm3286, 0, %v3287
        %3289 = vst [vmem:[#allocation2 + $0x4] sm:$0x7] %v3288
        %s3290 = scalar_lea.vmem [#allocation2], 60
        %v3291 = vld [vmem:[%s3290] sm:$0x8]
        %v3292 = vsel %vm1430, 0, %v3291
        %3293 = vst [vmem:[%s3290] sm:$0x8] %v3292
        %v3294 = vld [vmem:[%s3290 + $0x4] sm:$0x7]
        %v3295 = vsel %vm3286, 0, %v3294
        %3296 = vst [vmem:[%s3290 + $0x4] sm:$0x7] %v3295
        %v3297 = vld [vmem:[%s1418] sm:$0x8]
        %v3298 = vsel %vm1430, 0, %v3297
        %3299 = vst [vmem:[%s1418] sm:$0x8] %v3298
        %v3300 = vld [vmem:[%s1418 + $0xc] sm:$0x8]
        %v3301 = vsel %vm1430, 0, %v3300
        %3302 = vst [vmem:[%s1418 + $0xc] sm:$0x8] %v3301
        %v3303 = vld [vmem:[%s1418 + $0x18] sm:$0x8]
        %v3304 = vsel %vm1430, 0, %v3303
        %3305 = vst [vmem:[%s1418 + $0x18] sm:$0x8] %v3304
        %v3306 = vld [vmem:[%s1418 + $0x24] sm:$0x8]
        %v3307 = vsel %vm1430, 0, %v3306
        %3308 = vst [vmem:[%s1418 + $0x24] sm:$0x8] %v3307
        %vm3309 = vcmask 518146
        %vm3310 = vmand %vm3309, %vm3285
        %v3311 = vld [vmem:[%s1418 + $0x4] sm:$0x4]
        %v3312 = vsel %vm3310, 0, %v3311
        %3313 = vst [vmem:[%s1418 + $0x4] sm:$0x4] %v3312
        %v3314 = vld [vmem:[%s1418 + $0x10] sm:$0x4]
        %v3315 = vsel %vm3310, 0, %v3314
        %3316 = vst [vmem:[%s1418 + $0x10] sm:$0x4] %v3315
        %v3317 = vld [vmem:[%s1418 + $0x1c] sm:$0x4]
        %v3318 = vsel %vm3310, 0, %v3317
        %3319 = vst [vmem:[%s1418 + $0x1c] sm:$0x4] %v3318
        %v3320 = vld [vmem:[%s1418 + $0x28] sm:$0x4]
        %v3321 = vsel %vm3310, 0, %v3320
        %3322 = vst [vmem:[%s1418 + $0x28] sm:$0x4] %v3321
        %v3323 = vld [vmem:[#allocation2] sm:$0x8]
        %v3324 = vld [vmem:[#allocation2 + $0x4] sm:$0x3]
        %v3325 = vld [vmem:[#allocation2 + $0xc] sm:$0x8]
        %v3326 = vld [vmem:[#allocation2 + $0x10] sm:$0x3]
        %v3327 = vld [vmem:[#allocation2 + $0x18] sm:$0x8]
        %v3328 = vld [vmem:[#allocation2 + $0x1c] sm:$0x3]
        %v3329 = vld [vmem:[#allocation2 + $0x24] sm:$0x8]
        %v3330 = vld [vmem:[#allocation2 + $0x28] sm:$0x3]
        %v3332 = vshrl.u32 %v3323, 16
        %v3334 = vrot.slane %v3332, 7
        %v3335 = vrot.slane %v3334, 4
        %v3337 = vshrl.u32 %v3324, 16
        %v3339 = vrot.slane %v3337, 7
        %v3340 = vshll.u32 %v3324, 16
        %v3342 = vor.u32 %v3339, %v3340
        %v3343 = vsel %vm1514, %v3335, %v3342
        %v3345 = vshrl.u32 %v3325, 16
        %v3347 = vrot.slane %v3345, 7
        %v3348 = vrot.slane %v3347, 4
        %v3350 = vshrl.u32 %v3326, 16
        %v3352 = vrot.slane %v3350, 7
        %v3353 = vshll.u32 %v3326, 16
        %v3355 = vor.u32 %v3352, %v3353
        %v3356 = vsel %vm1514, %v3348, %v3355
        %v3358 = vshrl.u32 %v3327, 16
        %v3360 = vrot.slane %v3358, 7
        %v3361 = vrot.slane %v3360, 4
        %v3363 = vshrl.u32 %v3328, 16
        %v3365 = vrot.slane %v3363, 7
        %v3366 = vshll.u32 %v3328, 16
        %v3368 = vor.u32 %v3365, %v3366
        %v3369 = vsel %vm1514, %v3361, %v3368
        %v3371 = vshrl.u32 %v3329, 16
        %v3373 = vrot.slane %v3371, 7
        %v3374 = vrot.slane %v3373, 4
        %v3376 = vshrl.u32 %v3330, 16
        %v3378 = vrot.slane %v3376, 7
        %v3379 = vshll.u32 %v3330, 16
        %v3381 = vor.u32 %v3378, %v3379
        %v3382 = vsel %vm1514, %v3374, %v3381
        %3387 = vst.msk [vmem:[#allocation3] sm:$0x3] %vm3276, %v3343
        %3388 = vst.msk [vmem:[#allocation3 + $0x14] sm:$0x3] %vm3276, %v3356
        %3389 = vst.msk [vmem:[#allocation3 + $0x28] sm:$0x3] %vm3276, %v3369
        %3390 = vst.msk [vmem:[#allocation3 + $0x3c] sm:$0x3] %vm3276, %v3382
        %v3391 = vld [vmem:[#allocation2 + $0x4] sm:$0x3]
        %v3392 = vld [vmem:[#allocation2 + $0x10] sm:$0x3]
        %v3393 = vld [vmem:[#allocation2 + $0x1c] sm:$0x3]
        %v3394 = vld [vmem:[#allocation2 + $0x28] sm:$0x3]
        %3399 = vrot.lane.b32.xlu0 %v3391, 64
        %v3400 = vpop.permute.xlu0 %3399
        %3401 = vrot.lane.b32.xlu0 %v3392, 64
        %v3402 = vpop.permute.xlu0 %3401
        %3403 = vrot.lane.b32.xlu0 %v3393, 64
        %v3404 = vpop.permute.xlu0 %3403
        %3405 = vrot.lane.b32.xlu0 %v3394, 64
        %v3406 = vpop.permute.xlu0 %3405
        %vm3411 = vcmask 1041920
        %3412 = vst.msk [vmem:[#allocation3] sm:$0x3] %vm3411, %v3400
        %3413 = vst.msk [vmem:[#allocation3 + $0x14] sm:$0x3] %vm3411, %v3402
        %3414 = vst.msk [vmem:[#allocation3 + $0x28] sm:$0x3] %vm3411, %v3404
        %3415 = vst.msk [vmem:[#allocation3 + $0x3c] sm:$0x3] %vm3411, %v3406
        %v3416 = vld [vmem:[#allocation2 + $0x4] sm:$0x7]
        %v3417 = vld [vmem:[#allocation2 + $0x10] sm:$0x7]
        %v3418 = vld [vmem:[#allocation2 + $0x1c] sm:$0x7]
        %v3419 = vld [vmem:[#allocation2 + $0x28] sm:$0x7]
        %v3421 = vshrl.u32 %v3416, 16
        %v3423 = vrot.slane %v3421, 4
        %v3424 = vshll.u32 %v3416, 16
        %v3426 = vrot.slane %v3424, 5
        %v3427 = vor.u32 %v3423, %v3426
        %v3428 = vrot.slane %v3427, 4
        %v3430 = vshrl.u32 %v3417, 16
        %v3432 = vrot.slane %v3430, 4
        %v3433 = vshll.u32 %v3417, 16
        %v3435 = vrot.slane %v3433, 5
        %v3436 = vor.u32 %v3432, %v3435
        %v3437 = vrot.slane %v3436, 4
        %v3439 = vshrl.u32 %v3418, 16
        %v3441 = vrot.slane %v3439, 4
        %v3442 = vshll.u32 %v3418, 16
        %v3444 = vrot.slane %v3442, 5
        %v3445 = vor.u32 %v3441, %v3444
        %v3446 = vrot.slane %v3445, 4
        %v3448 = vshrl.u32 %v3419, 16
        %v3450 = vrot.slane %v3448, 4
        %v3451 = vshll.u32 %v3419, 16
        %v3453 = vrot.slane %v3451, 5
        %v3454 = vor.u32 %v3450, %v3453
        %v3455 = vrot.slane %v3454, 4
        %3460 = vst.msk [vmem:[#allocation3 + $0x4] sm:$0x3] %vm3276, %v3428
        %3461 = vst.msk [vmem:[#allocation3 + $0x18] sm:$0x3] %vm3276, %v3437
        %3462 = vst.msk [vmem:[#allocation3 + $0x2c] sm:$0x3] %vm3276, %v3446
        %3463 = vst.msk [vmem:[#allocation3 + $0x40] sm:$0x3] %vm3276, %v3455
        %v3464 = vld [vmem:[%s1418] sm:$0x8]
        %v3465 = vld [vmem:[%s1418 + $0x4] sm:$0x3]
        %v3466 = vld [vmem:[%s1418 + $0xc] sm:$0x8]
        %v3467 = vld [vmem:[%s1418 + $0x10] sm:$0x3]
        %v3468 = vld [vmem:[%s1418 + $0x18] sm:$0x8]
        %v3469 = vld [vmem:[%s1418 + $0x1c] sm:$0x3]
        %v3470 = vld [vmem:[%s1418 + $0x24] sm:$0x8]
        %v3471 = vld [vmem:[%s1418 + $0x28] sm:$0x3]
        %v3473 = vshrl.u32 %v3464, 16
        %v3475 = vrot.slane %v3473, 7
        %v3476 = vrot.slane %v3475, 4
        %v3478 = vshrl.u32 %v3465, 16
        %v3480 = vrot.slane %v3478, 7
        %v3481 = vshll.u32 %v3465, 16
        %v3483 = vor.u32 %v3480, %v3481
        %v3484 = vsel %vm1514, %v3476, %v3483
        %v3486 = vshrl.u32 %v3466, 16
        %v3488 = vrot.slane %v3486, 7
        %v3489 = vrot.slane %v3488, 4
        %v3491 = vshrl.u32 %v3467, 16
        %v3493 = vrot.slane %v3491, 7
        %v3494 = vshll.u32 %v3467, 16
        %v3496 = vor.u32 %v3493, %v3494
        %v3497 = vsel %vm1514, %v3489, %v3496
        %v3499 = vshrl.u32 %v3468, 16
        %v3501 = vrot.slane %v3499, 7
        %v3502 = vrot.slane %v3501, 4
        %v3504 = vshrl.u32 %v3469, 16
        %v3506 = vrot.slane %v3504, 7
        %v3507 = vshll.u32 %v3469, 16
        %v3509 = vor.u32 %v3506, %v3507
        %v3510 = vsel %vm1514, %v3502, %v3509
        %v3512 = vshrl.u32 %v3470, 16
        %v3514 = vrot.slane %v3512, 7
        %v3515 = vrot.slane %v3514, 4
        %v3517 = vshrl.u32 %v3471, 16
        %v3519 = vrot.slane %v3517, 7
        %v3520 = vshll.u32 %v3471, 16
        %v3522 = vor.u32 %v3519, %v3520
        %v3523 = vsel %vm1514, %v3515, %v3522
        %3524 = vrot.lane.b32.xlu0 %v3484, 64
        %v3525 = vpop.permute.xlu0 %3524
        %3526 = vrot.lane.b32.xlu0 %v3497, 64
        %v3527 = vpop.permute.xlu0 %3526
        %3528 = vrot.lane.b32.xlu0 %v3510, 64
        %v3529 = vpop.permute.xlu0 %3528
        %3530 = vrot.lane.b32.xlu0 %v3523, 64
        %v3531 = vpop.permute.xlu0 %3530
        %3536 = vst.msk [vmem:[#allocation3 + $0x4] sm:$0x3] %vm3411, %v3525
        %3537 = vst.msk [vmem:[#allocation3 + $0x18] sm:$0x3] %vm3411, %v3527
        %3538 = vst.msk [vmem:[#allocation3 + $0x2c] sm:$0x3] %vm3411, %v3529
        %3539 = vst.msk [vmem:[#allocation3 + $0x40] sm:$0x3] %vm3411, %v3531
        %v3540 = vld [vmem:[%s1418 + $0x4] sm:$0x3]
        %v3541 = vld [vmem:[%s1418 + $0x10] sm:$0x3]
        %v3542 = vld [vmem:[%s1418 + $0x1c] sm:$0x3]
        %v3543 = vld [vmem:[%s1418 + $0x28] sm:$0x3]
        %3544 = vst.msk [vmem:[#allocation3 + $0x8] sm:$0x3] %vm3276, %v3540
        %3545 = vst.msk [vmem:[#allocation3 + $0x1c] sm:$0x3] %vm3276, %v3541
        %3546 = vst.msk [vmem:[#allocation3 + $0x30] sm:$0x3] %vm3276, %v3542
        %3547 = vst.msk [vmem:[#allocation3 + $0x44] sm:$0x3] %vm3276, %v3543
        %v3548 = vld [vmem:[%s1418 + $0x4] sm:$0x7]
        %v3549 = vld [vmem:[%s1418 + $0x10] sm:$0x7]
        %v3550 = vld [vmem:[%s1418 + $0x1c] sm:$0x7]
        %v3551 = vld [vmem:[%s1418 + $0x28] sm:$0x7]
        %v3553 = vshrl.u32 %v3548, 16
        %v3555 = vrot.slane %v3553, 4
        %v3556 = vshll.u32 %v3548, 16
        %v3558 = vrot.slane %v3556, 5
        %v3559 = vor.u32 %v3555, %v3558
        %v3560 = vrot.slane %v3559, 4
        %v3562 = vshrl.u32 %v3549, 16
        %v3564 = vrot.slane %v3562, 4
        %v3565 = vshll.u32 %v3549, 16
        %v3567 = vrot.slane %v3565, 5
        %v3568 = vor.u32 %v3564, %v3567
        %v3569 = vrot.slane %v3568, 4
        %v3571 = vshrl.u32 %v3550, 16
        %v3573 = vrot.slane %v3571, 4
        %v3574 = vshll.u32 %v3550, 16
        %v3576 = vrot.slane %v3574, 5
        %v3577 = vor.u32 %v3573, %v3576
        %v3578 = vrot.slane %v3577, 4
        %v3580 = vshrl.u32 %v3551, 16
        %v3582 = vrot.slane %v3580, 4
        %v3583 = vshll.u32 %v3551, 16
        %v3585 = vrot.slane %v3583, 5
        %v3586 = vor.u32 %v3582, %v3585
        %v3587 = vrot.slane %v3586, 4
        %3588 = vrot.lane.b32.xlu0 %v3560, 64
        %v3589 = vpop.permute.xlu0 %3588
        %3590 = vrot.lane.b32.xlu0 %v3569, 64
        %v3591 = vpop.permute.xlu0 %3590
        %3592 = vrot.lane.b32.xlu0 %v3578, 64
        %v3593 = vpop.permute.xlu0 %3592
        %3594 = vrot.lane.b32.xlu0 %v3587, 64
        %v3595 = vpop.permute.xlu0 %3594
        %3600 = vst.msk [vmem:[#allocation3 + $0x8] sm:$0x3] %vm3411, %v3589
        %3601 = vst.msk [vmem:[#allocation3 + $0x1c] sm:$0x3] %vm3411, %v3591
        %3602 = vst.msk [vmem:[#allocation3 + $0x30] sm:$0x3] %vm3411, %v3593
        %3603 = vst.msk [vmem:[#allocation3 + $0x44] sm:$0x3] %vm3411, %v3595
        %v3604 = vld [vmem:[%s2159] sm:$0x8]
        %v3605 = vld [vmem:[%s2159 + $0x4] sm:$0x3]
        %v3606 = vld [vmem:[%s2159 + $0xc] sm:$0x8]
        %v3607 = vld [vmem:[%s2159 + $0x10] sm:$0x3]
        %v3608 = vld [vmem:[%s2159 + $0x18] sm:$0x8]
        %v3609 = vld [vmem:[%s2159 + $0x1c] sm:$0x3]
        %v3610 = vld [vmem:[%s2159 + $0x24] sm:$0x8]
        %v3611 = vld [vmem:[%s2159 + $0x28] sm:$0x3]
        %v3613 = vshrl.u32 %v3604, 16
        %v3615 = vrot.slane %v3613, 7
        %v3616 = vrot.slane %v3615, 4
        %v3618 = vshrl.u32 %v3605, 16
        %v3620 = vrot.slane %v3618, 7
        %v3621 = vshll.u32 %v3605, 16
        %v3623 = vor.u32 %v3620, %v3621
        %v3624 = vsel %vm1514, %v3616, %v3623
        %v3626 = vshrl.u32 %v3606, 16
        %v3628 = vrot.slane %v3626, 7
        %v3629 = vrot.slane %v3628, 4
        %v3631 = vshrl.u32 %v3607, 16
        %v3633 = vrot.slane %v3631, 7
        %v3634 = vshll.u32 %v3607, 16
        %v3636 = vor.u32 %v3633, %v3634
        %v3637 = vsel %vm1514, %v3629, %v3636
        %v3639 = vshrl.u32 %v3608, 16
        %v3641 = vrot.slane %v3639, 7
        %v3642 = vrot.slane %v3641, 4
        %v3644 = vshrl.u32 %v3609, 16
        %v3646 = vrot.slane %v3644, 7
        %v3647 = vshll.u32 %v3609, 16
        %v3649 = vor.u32 %v3646, %v3647
        %v3650 = vsel %vm1514, %v3642, %v3649
        %v3652 = vshrl.u32 %v3610, 16
        %v3654 = vrot.slane %v3652, 7
        %v3655 = vrot.slane %v3654, 4
        %v3657 = vshrl.u32 %v3611, 16
        %v3659 = vrot.slane %v3657, 7
        %v3660 = vshll.u32 %v3611, 16
        %v3662 = vor.u32 %v3659, %v3660
        %v3663 = vsel %vm1514, %v3655, %v3662
        %3668 = vst.msk [vmem:[#allocation3 + $0xc] sm:$0x3] %vm3276, %v3624
        %3669 = vst.msk [vmem:[#allocation3 + $0x20] sm:$0x3] %vm3276, %v3637
        %3670 = vst.msk [vmem:[#allocation3 + $0x34] sm:$0x3] %vm3276, %v3650
        %3671 = vst.msk [vmem:[#allocation3 + $0x48] sm:$0x3] %vm3276, %v3663
        %v3672 = vld [vmem:[%s2159 + $0x4] sm:$0x3]
        %v3673 = vld [vmem:[%s2159 + $0x10] sm:$0x3]
        %v3674 = vld [vmem:[%s2159 + $0x1c] sm:$0x3]
        %v3675 = vld [vmem:[%s2159 + $0x28] sm:$0x3]
        %3680 = vrot.lane.b32.xlu0 %v3672, 64
        %v3681 = vpop.permute.xlu0 %3680
        %3682 = vrot.lane.b32.xlu0 %v3673, 64
        %v3683 = vpop.permute.xlu0 %3682
        %3684 = vrot.lane.b32.xlu0 %v3674, 64
        %v3685 = vpop.permute.xlu0 %3684
        %3686 = vrot.lane.b32.xlu0 %v3675, 64
        %v3687 = vpop.permute.xlu0 %3686
        %3692 = vst.msk [vmem:[#allocation3 + $0xc] sm:$0x3] %vm3411, %v3681
        %3693 = vst.msk [vmem:[#allocation3 + $0x20] sm:$0x3] %vm3411, %v3683
        %3694 = vst.msk [vmem:[#allocation3 + $0x34] sm:$0x3] %vm3411, %v3685
        %3695 = vst.msk [vmem:[#allocation3 + $0x48] sm:$0x3] %vm3411, %v3687
        %v3696 = vld [vmem:[%s2159 + $0x4] sm:$0x7]
        %v3697 = vld [vmem:[%s2159 + $0x10] sm:$0x7]
        %v3698 = vld [vmem:[%s2159 + $0x1c] sm:$0x7]
        %v3699 = vld [vmem:[%s2159 + $0x28] sm:$0x7]
        %v3701 = vshrl.u32 %v3696, 16
        %v3703 = vrot.slane %v3701, 4
        %v3704 = vshll.u32 %v3696, 16
        %v3706 = vrot.slane %v3704, 5
        %v3707 = vor.u32 %v3703, %v3706
        %v3708 = vrot.slane %v3707, 4
        %v3710 = vshrl.u32 %v3697, 16
        %v3712 = vrot.slane %v3710, 4
        %v3713 = vshll.u32 %v3697, 16
        %v3715 = vrot.slane %v3713, 5
        %v3716 = vor.u32 %v3712, %v3715
        %v3717 = vrot.slane %v3716, 4
        %v3719 = vshrl.u32 %v3698, 16
        %v3721 = vrot.slane %v3719, 4
        %v3722 = vshll.u32 %v3698, 16
        %v3724 = vrot.slane %v3722, 5
        %v3725 = vor.u32 %v3721, %v3724
        %v3726 = vrot.slane %v3725, 4
        %v3728 = vshrl.u32 %v3699, 16
        %v3730 = vrot.slane %v3728, 4
        %v3731 = vshll.u32 %v3699, 16
        %v3733 = vrot.slane %v3731, 5
        %v3734 = vor.u32 %v3730, %v3733
        %v3735 = vrot.slane %v3734, 4
        %3740 = vst.msk [vmem:[#allocation3 + $0x10] sm:$0x3] %vm3276, %v3708
        %3741 = vst.msk [vmem:[#allocation3 + $0x24] sm:$0x3] %vm3276, %v3717
        %3742 = vst.msk [vmem:[#allocation3 + $0x38] sm:$0x3] %vm3276, %v3726
        %3743 = vst.msk [vmem:[#allocation3 + $0x4c] sm:$0x3] %vm3276, %v3735
        %v3744 = vld [vmem:[#allocation3] sm:$0x33]
        %v3745 = vld [vmem:[#allocation3 + $0x8] sm:$0x33]
        %v3746 = vld [vmem:[#allocation3 + $0x10] sm:$0x3]
        %v3747 = vld [vmem:[#allocation3 + $0x14] sm:$0x33]
        %v3748 = vld [vmem:[#allocation3 + $0x1c] sm:$0x33]
        %v3749 = vld [vmem:[#allocation3 + $0x24] sm:$0x3]
        %v3750 = vld [vmem:[#allocation3 + $0x28] sm:$0x33]
        %v3751 = vld [vmem:[#allocation3 + $0x30] sm:$0x33]
        %v3752 = vld [vmem:[#allocation3 + $0x38] sm:$0x3]
        %v3753 = vld [vmem:[#allocation3 + $0x3c] sm:$0x33]
        %v3754 = vld [vmem:[#allocation3 + $0x44] sm:$0x33]
        %v3755 = vld [vmem:[#allocation3 + $0x4c] sm:$0x3]
        %v3768 = vrot.slane %v3744, 2
        %v3769 = vrot.slane %v3745, 4
        %v3770 = vrot.slane %v3745, 6
        %v3771 = vrot.slane %v3746, 2
        %v3772 = vrot.slane %v3747, 2
        %v3773 = vrot.slane %v3748, 4
        %v3774 = vrot.slane %v3748, 6
        %v3775 = vrot.slane %v3749, 2
        %v3776 = vrot.slane %v3750, 2
        %v3777 = vrot.slane %v3751, 4
        %v3778 = vrot.slane %v3751, 6
        %v3779 = vrot.slane %v3752, 2
        %v3780 = vrot.slane %v3753, 2
        %v3781 = vrot.slane %v3754, 4
        %v3782 = vrot.slane %v3754, 6
        %v3783 = vrot.slane %v3755, 2
        %vm3784 = vcmask 1041408
        %v3787 = vsel %vm3784, %v3744, %v3768
        %vm3788 = vcmask 1045508
        %v3791 = vsel %vm3788, %v3769, %v3770
        %vm3792 = vcmask 1043456
        %v3793 = vsel %vm3792, %v3787, %v3791
        %v3796 = vsel %vm3784, %v3746, %v3771
        %v3799 = vsel %vm3784, %v3747, %v3772
        %v3802 = vsel %vm3788, %v3773, %v3774
        %v3803 = vsel %vm3792, %v3799, %v3802
        %v3806 = vsel %vm3784, %v3749, %v3775
        %v3809 = vsel %vm3784, %v3750, %v3776
        %v3812 = vsel %vm3788, %v3777, %v3778
        %v3813 = vsel %vm3792, %v3809, %v3812
        %v3816 = vsel %vm3784, %v3752, %v3779
        %v3819 = vsel %vm3784, %v3753, %v3780
        %v3822 = vsel %vm3788, %v3781, %v3782
        %v3823 = vsel %vm3792, %v3819, %v3822
        %v3826 = vsel %vm3784, %v3755, %v3783
        %v3827 = vld [vmem:[%s3] sm:$0xf]
        %v3828 = vld [vmem:[%s3 + $0x4] sm:$0xf]
        %v3829 = vld [vmem:[%s3 + $0x8] sm:$0xf]
        %v3830 = vld [vmem:[%s3 + $0xc] sm:$0xf]
        %v3831 = vld [vmem:[%s3 + $0x10] sm:$0xf]
        %v3832 = vld [vmem:[%s3 + $0x14] sm:$0xf]
        %v3833 = vld [vmem:[%s3 + $0x18] sm:$0xf]
        %v3834 = vld [vmem:[%s3 + $0x1c] sm:$0xf]
        %v3835 = vld [vmem:[%s3 + $0x20] sm:$0xf]
        %v3836 = vld [vmem:[%s3 + $0x24] sm:$0xf]
        %v3837 = vld [vmem:[%s3 + $0x28] sm:$0xf]
        %v3838 = vld [vmem:[%s3 + $0x2c] sm:$0xf]
        %v3839 = vld [vmem:[%s3 + $0x30] sm:$0xf]
        %v3840 = vld [vmem:[%s3 + $0x34] sm:$0xf]
        %v3841 = vld [vmem:[%s3 + $0x38] sm:$0xf]
        %v3842 = vld [vmem:[%s3 + $0x3c] sm:$0xf]
        %v3843 = vld [vmem:[%s3 + $0x40] sm:$0xf]
        %v3844 = vld [vmem:[%s3 + $0x44] sm:$0xf]
        %v3845 = vld [vmem:[%s3 + $0x48] sm:$0xf]
        %v3846 = vld [vmem:[%s3 + $0x4c] sm:$0xf]
        %v3847 = vld [vmem:[%s3 + $0x50] sm:$0xf]
        %v3848 = vld [vmem:[%s3 + $0x54] sm:$0xf]
        %v3849 = vld [vmem:[%s3 + $0x58] sm:$0xf]
        %v3850 = vld [vmem:[%s3 + $0x5c] sm:$0xf]
        %v3851 = vld [vmem:[%s3 + $0x60] sm:$0xf]
        %v3852 = vld [vmem:[%s3 + $0x64] sm:$0xf]
        %v3853 = vld [vmem:[%s3 + $0x68] sm:$0xf]
        %v3854 = vld [vmem:[%s3 + $0x6c] sm:$0xf]
        %v3855 = vld [vmem:[%s3 + $0x70] sm:$0xf]
        %v3856 = vld [vmem:[%s3 + $0x74] sm:$0xf]
        %v3857 = vld [vmem:[%s3 + $0x78] sm:$0xf]
        %v3858 = vld [vmem:[%s3 + $0x7c] sm:$0xf]
        %v3859 = vld [vmem:[%s3 + $0x80] sm:$0xf]
        %v3860 = vld [vmem:[%s3 + $0x84] sm:$0xf]
        %v3861 = vld [vmem:[%s3 + $0x88] sm:$0xf]
        %v3862 = vld [vmem:[%s3 + $0x8c] sm:$0xf]
        %v3863 = vld [vmem:[%s3 + $0x90] sm:$0xf]
        %v3864 = vld [vmem:[%s3 + $0x94] sm:$0xf]
        %v3865 = vld [vmem:[%s3 + $0x98] sm:$0xf]
        %v3866 = vld [vmem:[%s3 + $0x9c] sm:$0xf]
        %v3867 = vld [vmem:[%s3 + $0xa0] sm:$0xf]
        %v3868 = vld [vmem:[%s3 + $0xa4] sm:$0xf]
        %v3869 = vld [vmem:[%s3 + $0xa8] sm:$0xf]
        %v3870 = vld [vmem:[%s3 + $0xac] sm:$0xf]
        %v3871 = vld [vmem:[%s3 + $0xb0] sm:$0xf]
        %v3872 = vld [vmem:[%s3 + $0xb4] sm:$0xf]
        %v3873 = vld [vmem:[%s3 + $0xb8] sm:$0xf]
        %v3874 = vld [vmem:[%s3 + $0xbc] sm:$0xf]
        %v3875 = vld [vmem:[%s3 + $0xc0] sm:$0xf]
        %v3876 = vld [vmem:[%s3 + $0xc4] sm:$0xf]
        %v3877 = vld [vmem:[%s3 + $0xc8] sm:$0xf]
        %v3878 = vld [vmem:[%s3 + $0xcc] sm:$0xf]
        %v3879 = vld [vmem:[%s3 + $0xd0] sm:$0xf]
        %v3880 = vld [vmem:[%s3 + $0xd4] sm:$0xf]
        %v3881 = vld [vmem:[%s3 + $0xd8] sm:$0xf]
        %v3882 = vld [vmem:[%s3 + $0xdc] sm:$0xf]
        %v3883 = vld [vmem:[%s3 + $0xe0] sm:$0xf]
        %v3884 = vld [vmem:[%s3 + $0xe4] sm:$0xf]
        %v3885 = vld [vmem:[%s3 + $0xe8] sm:$0xf]
        %v3886 = vld [vmem:[%s3 + $0xec] sm:$0xf]
        %v3887 = vld [vmem:[%s3 + $0xf0] sm:$0xf]
        %v3888 = vld [vmem:[%s3 + $0xf4] sm:$0xf]
        %v3889 = vld [vmem:[%s3 + $0xf8] sm:$0xf]
        %v3890 = vld [vmem:[%s3 + $0xfc] sm:$0xf]
        %v3891 = vld [vmem:[%s3 + $0x100] sm:$0xf]
        %v3892 = vld [vmem:[%s3 + $0x104] sm:$0xf]
        %v3893 = vld [vmem:[%s3 + $0x108] sm:$0xf]
        %v3894 = vld [vmem:[%s3 + $0x10c] sm:$0xf]
        %v3895 = vld [vmem:[%s3 + $0x110] sm:$0xf]
        %v3896 = vld [vmem:[%s3 + $0x114] sm:$0xf]
        %v3897 = vld [vmem:[%s3 + $0x118] sm:$0xf]
        %v3898 = vld [vmem:[%s3 + $0x11c] sm:$0xf]
        %3899 = vst [vmem:[#allocation1] ss:$4 sm:$0xff] %v3793
        %s3900 = scalar_lea.vmem [#allocation1], 1
        %3901 = vst [vmem:[%s3900] ss:$4 sm:$0xff] %v3803
        %s3902 = scalar_lea.vmem [#allocation1], 2
        %3903 = vst [vmem:[%s3902] ss:$4 sm:$0xff] %v3813
        %s3904 = scalar_lea.vmem [#allocation1], 3
        %3905 = vst [vmem:[%s3904] ss:$4 sm:$0xff] %v3823
        %s3906 = scalar_lea.vmem [#allocation1], 32
        %3907 = vst [vmem:[%s3906] ss:$4 sm:$0xff] %v3796
        %s3908 = scalar_lea.vmem [#allocation1], 33
        %3909 = vst [vmem:[%s3908] ss:$4 sm:$0xff] %v3806
        %s3910 = scalar_lea.vmem [#allocation1], 34
        %3911 = vst [vmem:[%s3910] ss:$4 sm:$0xff] %v3816
        %s3912 = scalar_lea.vmem [#allocation1], 35
        %3913 = vst [vmem:[%s3912] ss:$4 sm:$0xff] %v3826
        %v3914 = vld.sshfl [vmem:[#allocation1] sm:$0xff pattern:$0x73625140]
        %v3915 = vld.sshfl [vmem:[#allocation1 + $0x8] sm:$0xff pattern:$0x73625140]
        %v3916 = vld.sshfl [vmem:[#allocation1 + $0x10] sm:$0xff pattern:$0x73625140]
        %v3917 = vld.sshfl [vmem:[#allocation1 + $0x18] sm:$0xff pattern:$0x73625140]
        %v3918 = vld.sshfl [vmem:[#allocation1 + $0x20] sm:$0xff pattern:$0x73625140]
        %v3995 = vunpack.c.l.b16 %v3827
        %v3996 = vunpack.c.l.b16 %v3828
        %v3997 = vunpack.c.l.b16 %v3829
        %v3998 = vunpack.c.l.b16 %v3830
        %v3999 = vunpack.c.l.b16 %v3831
        %v4000 = vunpack.c.l.b16 %v3832
        %v4001 = vunpack.c.l.b16 %v3833
        %v4002 = vunpack.c.l.b16 %v3834
        %v4003 = vunpack.c.l.b16 %v3835
        %v4004 = vunpack.c.l.b16 %v3836
        %v4005 = vunpack.c.l.b16 %v3837
        %v4006 = vunpack.c.l.b16 %v3838
        %v4007 = vunpack.c.l.b16 %v3839
        %v4008 = vunpack.c.l.b16 %v3840
        %v4009 = vunpack.c.l.b16 %v3841
        %v4010 = vunpack.c.l.b16 %v3842
        %v4011 = vunpack.c.l.b16 %v3843
        %v4012 = vunpack.c.l.b16 %v3844
        %v4013 = vunpack.c.l.b16 %v3845
        %v4014 = vunpack.c.l.b16 %v3846
        %v4015 = vunpack.c.l.b16 %v3847
        %v4016 = vunpack.c.l.b16 %v3848
        %v4017 = vunpack.c.l.b16 %v3849
        %v4018 = vunpack.c.l.b16 %v3850
        %v4019 = vunpack.c.l.b16 %v3851
        %v4020 = vunpack.c.l.b16 %v3852
        %v4021 = vunpack.c.l.b16 %v3853
        %v4022 = vunpack.c.l.b16 %v3854
        %v4023 = vunpack.c.l.b16 %v3855
        %v4024 = vunpack.c.l.b16 %v3856
        %v4025 = vunpack.c.l.b16 %v3857
        %v4026 = vunpack.c.l.b16 %v3858
        %v4027 = vunpack.c.l.b16 %v3859
        %v4028 = vunpack.c.l.b16 %v3860
        %v4029 = vunpack.c.l.b16 %v3861
        %v4030 = vunpack.c.l.b16 %v3862
        %v4031 = vunpack.c.l.b16 %v3863
        %v4032 = vunpack.c.l.b16 %v3864
        %v4033 = vunpack.c.l.b16 %v3865
        %v4034 = vunpack.c.l.b16 %v3866
        %v4035 = vunpack.c.l.b16 %v3867
        %v4036 = vunpack.c.l.b16 %v3868
        %v4037 = vunpack.c.l.b16 %v3869
        %v4038 = vunpack.c.l.b16 %v3870
        %v4039 = vunpack.c.l.b16 %v3871
        %v4040 = vunpack.c.l.b16 %v3872
        %v4041 = vunpack.c.l.b16 %v3873
        %v4042 = vunpack.c.l.b16 %v3874
        %v4043 = vunpack.c.l.b16 %v3875
        %v4044 = vunpack.c.l.b16 %v3876
        %v4045 = vunpack.c.l.b16 %v3877
        %v4046 = vunpack.c.l.b16 %v3878
        %v4047 = vunpack.c.l.b16 %v3879
        %v4048 = vunpack.c.l.b16 %v3880
        %v4049 = vunpack.c.l.b16 %v3881
        %v4050 = vunpack.c.l.b16 %v3882
        %v4051 = vunpack.c.l.b16 %v3883
        %v4052 = vunpack.c.l.b16 %v3884
        %v4053 = vunpack.c.l.b16 %v3885
        %v4054 = vunpack.c.l.b16 %v3886
        %v4055 = vunpack.c.l.b16 %v3887
        %v4056 = vunpack.c.l.b16 %v3888
        %v4057 = vunpack.c.l.b16 %v3889
        %v4058 = vunpack.c.l.b16 %v3890
        %v4059 = vunpack.c.l.b16 %v3891
        %v4060 = vunpack.c.l.b16 %v3892
        %v4061 = vunpack.c.l.b16 %v3893
        %v4062 = vunpack.c.l.b16 %v3894
        %v4063 = vunpack.c.l.b16 %v3895
        %v4064 = vunpack.c.l.b16 %v3896
        %v4065 = vunpack.c.l.b16 %v3897
        %v4066 = vunpack.c.l.b16 %v3898
        %v4067 = vpack.c.b16 %v3996, %v3995
        %v4068 = vpack.c.b16 %v3998, %v3997
        %v4069 = vpack.c.b16 %v4000, %v3999
        %v4070 = vpack.c.b16 %v4002, %v4001
        %v4071 = vpack.c.b16 %v4004, %v4003
        %v4072 = vpack.c.b16 %v4006, %v4005
        %v4073 = vpack.c.b16 %v4008, %v4007
        %v4074 = vpack.c.b16 %v4010, %v4009
        %v4075 = vpack.c.b16 %v4012, %v4011
        %v4076 = vpack.c.b16 %v4014, %v4013
        %v4077 = vpack.c.b16 %v4016, %v4015
        %v4078 = vpack.c.b16 %v4018, %v4017
        %v4079 = vpack.c.b16 %v4020, %v4019
        %v4080 = vpack.c.b16 %v4022, %v4021
        %v4081 = vpack.c.b16 %v4024, %v4023
        %v4082 = vpack.c.b16 %v4026, %v4025
        %v4083 = vpack.c.b16 %v4028, %v4027
        %v4084 = vpack.c.b16 %v4030, %v4029
        %v4085 = vpack.c.b16 %v4032, %v4031
        %v4086 = vpack.c.b16 %v4034, %v4033
        %v4087 = vpack.c.b16 %v4036, %v4035
        %v4088 = vpack.c.b16 %v4038, %v4037
        %v4089 = vpack.c.b16 %v4040, %v4039
        %v4090 = vpack.c.b16 %v4042, %v4041
        %v4091 = vpack.c.b16 %v4044, %v4043
        %v4092 = vpack.c.b16 %v4046, %v4045
        %v4093 = vpack.c.b16 %v4048, %v4047
        %v4094 = vpack.c.b16 %v4050, %v4049
        %v4095 = vpack.c.b16 %v4052, %v4051
        %v4096 = vpack.c.b16 %v4054, %v4053
        %v4097 = vpack.c.b16 %v4056, %v4055
        %v4098 = vpack.c.b16 %v4058, %v4057
        %v4099 = vpack.c.b16 %v4060, %v4059
        %v4100 = vpack.c.b16 %v4062, %v4061
        %v4101 = vpack.c.b16 %v4064, %v4063
        %v4102 = vpack.c.b16 %v4066, %v4065
        %v4139 = vsel %vm2900, %v3918, 0
        %4141 = vmatpush.bf16.msra.mxu0 %v4074
        %4142 = vmatpush.bf16.msra.mxu0 %v4073
        %4143 = vmatpush.bf16.msra.mxu0 %v4072
        %4144 = vmatpush.bf16.msra.mxu0 %v4071
        %4145 = vmatpush.bf16.msra.mxu0 %v4070
        %4146 = vmatpush.bf16.msra.mxu0 %v4069
        %4147 = vmatpush.bf16.msra.mxu0 %v4068
        %4148 = vmatpush.bf16.msra.mxu0 %v4067
        %4149 = vmatmul.bf16.gmra.mxu0 %v3914
        %v4150 = vpop.f32.mrf.mxu0
        %v4151 = vadd.f32 0.0, %v4150
        %v4152 = vpop.f32.mrf.mxu0
        %v4153 = vadd.f32 0.0, %v4152
        %4154 = vdwg.mxu0
        %4155 = vmatpush.bf16.msra.mxu0 %v4082
        %4156 = vmatpush.bf16.msra.mxu0 %v4081
        %4157 = vmatpush.bf16.msra.mxu0 %v4080
        %4158 = vmatpush.bf16.msra.mxu0 %v4079
        %4159 = vmatpush.bf16.msra.mxu0 %v4078
        %4160 = vmatpush.bf16.msra.mxu0 %v4077
        %4161 = vmatpush.bf16.msra.mxu0 %v4076
        %4162 = vmatpush.bf16.msra.mxu0 %v4075
        %4163 = vmatmul.bf16.gmra.mxu0 %v3915
        %v4164 = vpop.f32.mrf.mxu0
        %v4165 = vadd.f32 %v4151, %v4164
        %v4166 = vpop.f32.mrf.mxu0
        %v4167 = vadd.f32 %v4153, %v4166
        %4168 = vdwg.mxu0
        %4169 = vmatpush.bf16.msra.mxu0 %v4090
        %4170 = vmatpush.bf16.msra.mxu0 %v4089
        %4171 = vmatpush.bf16.msra.mxu0 %v4088
        %4172 = vmatpush.bf16.msra.mxu0 %v4087
        %4173 = vmatpush.bf16.msra.mxu0 %v4086
        %4174 = vmatpush.bf16.msra.mxu0 %v4085
        %4175 = vmatpush.bf16.msra.mxu0 %v4084
        %4176 = vmatpush.bf16.msra.mxu0 %v4083
        %4177 = vmatmul.bf16.gmra.mxu0 %v3916
        %v4178 = vpop.f32.mrf.mxu0
        %v4179 = vadd.f32 %v4165, %v4178
        %v4180 = vpop.f32.mrf.mxu0
        %v4181 = vadd.f32 %v4167, %v4180
        %4182 = vdwg.mxu0
        %4183 = vmatpush.bf16.msra.mxu0 %v4098
        %4184 = vmatpush.bf16.msra.mxu0 %v4097
        %4185 = vmatpush.bf16.msra.mxu0 %v4096
        %4186 = vmatpush.bf16.msra.mxu0 %v4095
        %4187 = vmatpush.bf16.msra.mxu0 %v4094
        %4188 = vmatpush.bf16.msra.mxu0 %v4093
        %4189 = vmatpush.bf16.msra.mxu0 %v4092
        %4190 = vmatpush.bf16.msra.mxu0 %v4091
        %4191 = vmatmul.bf16.gmra.mxu0 %v3917
        %v4192 = vpop.f32.mrf.mxu0
        %v4193 = vadd.f32 %v4179, %v4192
        %v4194 = vpop.f32.mrf.mxu0
        %v4195 = vadd.f32 %v4181, %v4194
        %4196 = vdwg.mxu0
        %4197 = vmatpush.bf16.msra.mxu0 0
        %4198 = vmatpush.bf16.msra.mxu0 0
        %4199 = vmatpush.bf16.msra.mxu0 0
        %4200 = vmatpush.bf16.msra.mxu0 0
        %4201 = vmatpush.bf16.msra.mxu0 %v4102
        %4202 = vmatpush.bf16.msra.mxu0 %v4101
        %4203 = vmatpush.bf16.msra.mxu0 %v4100
        %4204 = vmatpush.bf16.msra.mxu0 %v4099
        %4205 = vmatmul.bf16.gmra.mxu0 %v4139
        %v4206 = vpop.f32.mrf.mxu0
        %v4207 = vadd.f32 %v4193, %v4206
        %v4208 = vpop.f32.mrf.mxu0
        %v4209 = vadd.f32 %v4195, %v4208
        %4210 = vdwg.mxu0
        %v4211 = vperm.slane %v277, 2
        %v4212 = vmul.f32 %v4207, %v4211
        %v4213 = vmul.f32 %v4209, %v4211
        %v4214 = vperm.slane %v278, 2
        %v4215 = vadd.f32 %v4212, %v4214
        %v4216 = vadd.f32 %v4213, %v4214
        %vm4217 = vcmp.gt.f32.partialorder %v4215, 0.0
        %vm4218 = vcmp.gt.f32.partialorder %v4216, 0.0
        %v4219 = vmul.f32 %v4215, 0.2
        %v4220 = vmul.f32 %v4216, 0.2
        %v4221 = vsel %vm4217, %v4215, %v4219
        %v4222 = vsel %vm4218, %v4216, %v4220
        %v4225 = vrot.slane %v4221, 4
        %v4226 = vrot.slane %v4222, 4
        %v4229 = vmax.f32 %v4221, %v4225
        %v4230 = vmax.f32 %v4222, %v4226
        %v4233 = vrot.slane %v4229, 2
        %v4234 = vrot.slane %v4230, 2
        %v4235 = vsel %vm3784, %v4229, %v4233
        %vm4236 = vcmask 1043458
        %v4237 = vsel %vm4236, %v4229, %v4233
        %v4238 = vrot.slane %v4237, 2
        %v4239 = vsel %vm3784, %v4230, %v4234
        %v4240 = vsel %vm4236, %v4230, %v4234
        %v4241 = vrot.slane %v4240, 2
        %v4246 = vrot.slane %v4235, 7
        %v4247 = vrot.slane %v4246, 2
        %v4248 = vrot.slane %v4238, 7
        %v4249 = vrot.slane %v4248, 2
        %v4250 = vrot.slane %v4239, 7
        %v4251 = vrot.slane %v4250, 2
        %v4252 = vrot.slane %v4241, 7
        %v4253 = vrot.slane %v4252, 2
        %v4258 = vmax.f32 %v4235, %v4247
        %v4259 = vmax.f32 %v4238, %v4249
        %v4260 = vmax.f32 %v4239, %v4251
        %v4261 = vmax.f32 %v4241, %v4253
        %v4262 = vpack.c.bf16 %v4258, %v4258
        %v4263 = vpack.c.bf16 %v4259, %v4259
        %v4264 = vpack.c.bf16 %v4260, %v4260
        %v4265 = vpack.c.bf16 %v4261, %v4261
        %v4270 = vunpack.c.l.b16 %v4262
        %v4271 = vunpack.c.l.b16 %v4263
        %v4272 = vunpack.c.l.b16 %v4264
        %v4273 = vunpack.c.l.b16 %v4265
        %v4274 = vrot.slane %v4271, 7
        %v4275 = vsel %vm1284, %v4274, %v4270
        %v4276 = vrot.slane %v4273, 7
        %v4277 = vsel %vm1284, %v4276, %v4272
        %v4278 = vpack.c.b16 %v4275, %v4275
        %v4279 = vpack.c.b16 %v4277, %v4277
        %vm4282 = vcmask 516096
        %4283 = vst.msk [vmem:[%s1418 + $0x4] sm:$0x1] %vm4282, %v4278
        %4284 = vst.msk [vmem:[%s1418 + $0x10] sm:$0x1] %vm4282, %v4279
        %v4285 = vld [vmem:[#allocation2] sm:$0x8]
        %v4286 = vsel %vm1430, 0, %v4285
        %4287 = vst [vmem:[#allocation2] sm:$0x8] %v4286
        %vm4288 = vcmask 517120
        %vm4289 = vsmask.f32 1280
        %vm4290 = vmand %vm4288, %vm4289
        %v4291 = vld [vmem:[#allocation2 + $0x4] sm:$0x3]
        %v4292 = vsel %vm4290, 0, %v4291
        %4293 = vst [vmem:[#allocation2 + $0x4] sm:$0x3] %v4292
        %s4294 = scalar_lea.vmem [#allocation2], 36
        %v4295 = vld [vmem:[%s4294] sm:$0x8]
        %v4296 = vsel %vm1430, 0, %v4295
        %4297 = vst [vmem:[%s4294] sm:$0x8] %v4296
        %v4298 = vld [vmem:[%s4294 + $0x4] sm:$0x3]
        %v4299 = vsel %vm4290, 0, %v4298
        %4300 = vst [vmem:[%s4294 + $0x4] sm:$0x3] %v4299
        %v4301 = vld [vmem:[%s1418] sm:$0x8]
        %v4302 = vsel %vm1430, 0, %v4301
        %4303 = vst [vmem:[%s1418] sm:$0x8] %v4302
        %v4304 = vld [vmem:[%s1418 + $0xc] sm:$0x8]
        %v4305 = vsel %vm1430, 0, %v4304
        %4306 = vst [vmem:[%s1418 + $0xc] sm:$0x8] %v4305
        %vm4307 = vcmask 517121
        %vm4308 = vmand %vm4307, %vm4289
        %v4309 = vld [vmem:[%s1418 + $0x4] sm:$0x2]
        %v4310 = vsel %vm4308, 0, %v4309
        %4311 = vst [vmem:[%s1418 + $0x4] sm:$0x2] %v4310
        %v4312 = vld [vmem:[%s1418 + $0x10] sm:$0x2]
        %v4313 = vsel %vm4308, 0, %v4312
        %4314 = vst [vmem:[%s1418 + $0x10] sm:$0x2] %v4313
        %v4315 = vld [vmem:[#allocation2] sm:$0x8]
        %v4316 = vld [vmem:[#allocation2 + $0x4] sm:$0x1]
        %v4317 = vld [vmem:[#allocation2 + $0xc] sm:$0x8]
        %v4318 = vld [vmem:[#allocation2 + $0x10] sm:$0x1]
        %v4320 = vshrl.u32 %v4315, 16
        %v4322 = vrot.slane %v4320, 7
        %v4323 = vrot.slane %v4322, 4
        %v4325 = vshll.u32 %v4316, 16
        %v4327 = vsel %vm1514, %v4323, %v4325
        %v4329 = vshrl.u32 %v4317, 16
        %v4331 = vrot.slane %v4329, 7
        %v4332 = vrot.slane %v4331, 4
        %v4334 = vshll.u32 %v4318, 16
        %v4336 = vsel %vm1514, %v4332, %v4334
        %4339 = vst.msk [vmem:[#allocation3] sm:$0x1] %vm4282, %v4327
        %4340 = vst.msk [vmem:[#allocation3 + $0x14] sm:$0x1] %vm4282, %v4336
        %v4341 = vld [vmem:[#allocation2 + $0x4] sm:$0x1]
        %v4342 = vld [vmem:[#allocation2 + $0x10] sm:$0x1]
        %4345 = vrot.lane.b32.xlu0 %v4341, 64
        %v4346 = vpop.permute.xlu0 %4345
        %4347 = vrot.lane.b32.xlu0 %v4342, 64
        %v4348 = vpop.permute.xlu0 %4347
        %vm4351 = vcmask 1040896
        %4352 = vst.msk [vmem:[#allocation3] sm:$0x1] %vm4351, %v4346
        %4353 = vst.msk [vmem:[#allocation3 + $0x14] sm:$0x1] %vm4351, %v4348
        %v4354 = vld [vmem:[#allocation2 + $0x4] sm:$0x3]
        %v4355 = vld [vmem:[#allocation2 + $0x10] sm:$0x3]
        %v4357 = vshrl.u32 %v4354, 16
        %v4359 = vrot.slane %v4357, 4
        %v4360 = vshll.u32 %v4354, 16
        %v4362 = vrot.slane %v4360, 5
        %v4363 = vor.u32 %v4359, %v4362
        %v4364 = vrot.slane %v4363, 4
        %v4366 = vshrl.u32 %v4355, 16
        %v4368 = vrot.slane %v4366, 4
        %v4369 = vshll.u32 %v4355, 16
        %v4371 = vrot.slane %v4369, 5
        %v4372 = vor.u32 %v4368, %v4371
        %v4373 = vrot.slane %v4372, 4
        %4376 = vst.msk [vmem:[#allocation3 + $0x4] sm:$0x1] %vm4282, %v4364
        %4377 = vst.msk [vmem:[#allocation3 + $0x18] sm:$0x1] %vm4282, %v4373
        %v4378 = vld [vmem:[%s1418] sm:$0x8]
        %v4379 = vld [vmem:[%s1418 + $0x4] sm:$0x1]
        %v4380 = vld [vmem:[%s1418 + $0xc] sm:$0x8]
        %v4381 = vld [vmem:[%s1418 + $0x10] sm:$0x1]
        %v4383 = vshrl.u32 %v4378, 16
        %v4385 = vrot.slane %v4383, 7
        %v4386 = vrot.slane %v4385, 4
        %v4388 = vshll.u32 %v4379, 16
        %v4390 = vsel %vm1514, %v4386, %v4388
        %v4392 = vshrl.u32 %v4380, 16
        %v4394 = vrot.slane %v4392, 7
        %v4395 = vrot.slane %v4394, 4
        %v4397 = vshll.u32 %v4381, 16
        %v4399 = vsel %vm1514, %v4395, %v4397
        %4400 = vrot.lane.b32.xlu0 %v4390, 64
        %v4401 = vpop.permute.xlu0 %4400
        %4402 = vrot.lane.b32.xlu0 %v4399, 64
        %v4403 = vpop.permute.xlu0 %4402
        %4406 = vst.msk [vmem:[#allocation3 + $0x4] sm:$0x1] %vm4351, %v4401
        %4407 = vst.msk [vmem:[#allocation3 + $0x18] sm:$0x1] %vm4351, %v4403
        %v4408 = vld [vmem:[%s1418 + $0x4] sm:$0x1]
        %v4409 = vld [vmem:[%s1418 + $0x10] sm:$0x1]
        %4410 = vst.msk [vmem:[#allocation3 + $0x8] sm:$0x1] %vm4282, %v4408
        %4411 = vst.msk [vmem:[#allocation3 + $0x1c] sm:$0x1] %vm4282, %v4409
        %v4412 = vld [vmem:[%s1418 + $0x4] sm:$0x3]
        %v4413 = vld [vmem:[%s1418 + $0x10] sm:$0x3]
        %v4415 = vshrl.u32 %v4412, 16
        %v4417 = vrot.slane %v4415, 4
        %v4418 = vshll.u32 %v4412, 16
        %v4420 = vrot.slane %v4418, 5
        %v4421 = vor.u32 %v4417, %v4420
        %v4422 = vrot.slane %v4421, 4
        %v4424 = vshrl.u32 %v4413, 16
        %v4426 = vrot.slane %v4424, 4
        %v4427 = vshll.u32 %v4413, 16
        %v4429 = vrot.slane %v4427, 5
        %v4430 = vor.u32 %v4426, %v4429
        %v4431 = vrot.slane %v4430, 4
        %4432 = vrot.lane.b32.xlu0 %v4422, 64
        %v4433 = vpop.permute.xlu0 %4432
        %4434 = vrot.lane.b32.xlu0 %v4431, 64
        %v4435 = vpop.permute.xlu0 %4434
        %4438 = vst.msk [vmem:[#allocation3 + $0x8] sm:$0x1] %vm4351, %v4433
        %4439 = vst.msk [vmem:[#allocation3 + $0x1c] sm:$0x1] %vm4351, %v4435
        %v4440 = vld [vmem:[%s2159] sm:$0x8]
        %v4441 = vld [vmem:[%s2159 + $0x4] sm:$0x1]
        %v4442 = vld [vmem:[%s2159 + $0xc] sm:$0x8]
        %v4443 = vld [vmem:[%s2159 + $0x10] sm:$0x1]
        %v4445 = vshrl.u32 %v4440, 16
        %v4447 = vrot.slane %v4445, 7
        %v4448 = vrot.slane %v4447, 4
        %v4450 = vshll.u32 %v4441, 16
        %v4452 = vsel %vm1514, %v4448, %v4450
        %v4454 = vshrl.u32 %v4442, 16
        %v4456 = vrot.slane %v4454, 7
        %v4457 = vrot.slane %v4456, 4
        %v4459 = vshll.u32 %v4443, 16
        %v4461 = vsel %vm1514, %v4457, %v4459
        %4464 = vst.msk [vmem:[#allocation3 + $0xc] sm:$0x1] %vm4282, %v4452
        %4465 = vst.msk [vmem:[#allocation3 + $0x20] sm:$0x1] %vm4282, %v4461
        %v4466 = vld [vmem:[%s2159 + $0x4] sm:$0x1]
        %v4467 = vld [vmem:[%s2159 + $0x10] sm:$0x1]
        %4470 = vrot.lane.b32.xlu0 %v4466, 64
        %v4471 = vpop.permute.xlu0 %4470
        %4472 = vrot.lane.b32.xlu0 %v4467, 64
        %v4473 = vpop.permute.xlu0 %4472
        %4476 = vst.msk [vmem:[#allocation3 + $0xc] sm:$0x1] %vm4351, %v4471
        %4477 = vst.msk [vmem:[#allocation3 + $0x20] sm:$0x1] %vm4351, %v4473
        %v4478 = vld [vmem:[%s2159 + $0x4] sm:$0x3]
        %v4479 = vld [vmem:[%s2159 + $0x10] sm:$0x3]
        %v4481 = vshrl.u32 %v4478, 16
        %v4483 = vrot.slane %v4481, 4
        %v4484 = vshll.u32 %v4478, 16
        %v4486 = vrot.slane %v4484, 5
        %v4487 = vor.u32 %v4483, %v4486
        %v4488 = vrot.slane %v4487, 4
        %v4490 = vshrl.u32 %v4479, 16
        %v4492 = vrot.slane %v4490, 4
        %v4493 = vshll.u32 %v4479, 16
        %v4495 = vrot.slane %v4493, 5
        %v4496 = vor.u32 %v4492, %v4495
        %v4497 = vrot.slane %v4496, 4
        %4500 = vst.msk [vmem:[#allocation3 + $0x10] sm:$0x1] %vm4282, %v4488
        %4501 = vst.msk [vmem:[#allocation3 + $0x24] sm:$0x1] %vm4282, %v4497
        %v4502 = vld [vmem:[#allocation3] sm:$0x11]
        %v4503 = vld [vmem:[#allocation3 + $0x8] sm:$0x11]
        %v4504 = vld [vmem:[#allocation3 + $0x10] sm:$0x1]
        %v4505 = vld [vmem:[#allocation3 + $0x14] sm:$0x11]
        %v4506 = vld [vmem:[#allocation3 + $0x1c] sm:$0x11]
        %v4507 = vld [vmem:[#allocation3 + $0x24] sm:$0x1]
        %v4514 = vrot.slane %v4502, 3
        %v4515 = vrot.slane %v4503, 6
        %v4516 = vrot.slane %v4503, 1
        %v4517 = vrot.slane %v4504, 4
        %v4518 = vrot.slane %v4504, 7
        %v4519 = vrot.slane %v4505, 3
        %v4520 = vrot.slane %v4506, 6
        %v4521 = vrot.slane %v4506, 1
        %v4522 = vrot.slane %v4507, 4
        %v4523 = vrot.slane %v4507, 7
        %vm4524 = vcmask 1040384
        %v4527 = vsel %vm4524, %v4502, %v4514
        %v4529 = vsel %vm3784, %v4527, %v4515
        %v4532 = vsel %vm1290, %v4516, %v4517
        %vm4533 = vcmask 1044483
        %v4535 = vsel %vm4533, %v4532, %v4518
        %vm4536 = vcmask 1042432
        %v4537 = vsel %vm4536, %v4529, %v4535
        %v4540 = vsel %vm4524, %v4505, %v4519
        %v4542 = vsel %vm3784, %v4540, %v4520
        %v4545 = vsel %vm1290, %v4521, %v4522
        %v4547 = vsel %vm4533, %v4545, %v4523
        %v4548 = vsel %vm4536, %v4542, %v4547
        %v4549 = vld [vmem:[%s4] sm:$0xf]
        %v4550 = vld [vmem:[%s4 + $0x4] sm:$0xf]
        %v4551 = vld [vmem:[%s4 + $0x8] sm:$0xf]
        %v4552 = vld [vmem:[%s4 + $0xc] sm:$0xf]
        %v4553 = vld [vmem:[%s4 + $0x10] sm:$0xf]
        %v4554 = vld [vmem:[%s4 + $0x14] sm:$0xf]
        %v4555 = vld [vmem:[%s4 + $0x18] sm:$0xf]
        %v4556 = vld [vmem:[%s4 + $0x1c] sm:$0xf]
        %v4557 = vld [vmem:[%s4 + $0x20] sm:$0xf]
        %v4558 = vld [vmem:[%s4 + $0x24] sm:$0xf]
        %v4559 = vld [vmem:[%s4 + $0x28] sm:$0xf]
        %v4560 = vld [vmem:[%s4 + $0x2c] sm:$0xf]
        %v4561 = vld [vmem:[%s4 + $0x30] sm:$0xf]
        %v4562 = vld [vmem:[%s4 + $0x34] sm:$0xf]
        %v4563 = vld [vmem:[%s4 + $0x38] sm:$0xf]
        %v4564 = vld [vmem:[%s4 + $0x3c] sm:$0xf]
        %v4565 = vld [vmem:[%s4 + $0x40] sm:$0xf]
        %v4566 = vld [vmem:[%s4 + $0x44] sm:$0xf]
        %v4567 = vld [vmem:[%s4 + $0x48] sm:$0xf]
        %v4568 = vld [vmem:[%s4 + $0x4c] sm:$0xf]
        %v4569 = vld [vmem:[%s4 + $0x50] sm:$0xf]
        %v4570 = vld [vmem:[%s4 + $0x54] sm:$0xf]
        %v4571 = vld [vmem:[%s4 + $0x58] sm:$0xf]
        %v4572 = vld [vmem:[%s4 + $0x5c] sm:$0xf]
        %v4573 = vld [vmem:[%s4 + $0x60] sm:$0xf]
        %v4574 = vld [vmem:[%s4 + $0x64] sm:$0xf]
        %v4575 = vld [vmem:[%s4 + $0x68] sm:$0xf]
        %v4576 = vld [vmem:[%s4 + $0x6c] sm:$0xf]
        %v4577 = vld [vmem:[%s4 + $0x70] sm:$0xf]
        %v4578 = vld [vmem:[%s4 + $0x74] sm:$0xf]
        %v4579 = vld [vmem:[%s4 + $0x78] sm:$0xf]
        %v4580 = vld [vmem:[%s4 + $0x7c] sm:$0xf]
        %v4581 = vld [vmem:[%s4 + $0x80] sm:$0xf]
        %v4582 = vld [vmem:[%s4 + $0x84] sm:$0xf]
        %v4583 = vld [vmem:[%s4 + $0x88] sm:$0xf]
        %v4584 = vld [vmem:[%s4 + $0x8c] sm:$0xf]
        %v4585 = vld [vmem:[%s4 + $0x90] sm:$0xf]
        %v4586 = vld [vmem:[%s4 + $0x94] sm:$0xf]
        %v4587 = vld [vmem:[%s4 + $0x98] sm:$0xf]
        %v4588 = vld [vmem:[%s4 + $0x9c] sm:$0xf]
        %v4589 = vld [vmem:[%s4 + $0xa0] sm:$0xf]
        %v4590 = vld [vmem:[%s4 + $0xa4] sm:$0xf]
        %v4591 = vld [vmem:[%s4 + $0xa8] sm:$0xf]
        %v4592 = vld [vmem:[%s4 + $0xac] sm:$0xf]
        %v4593 = vld [vmem:[%s4 + $0xb0] sm:$0xf]
        %v4594 = vld [vmem:[%s4 + $0xb4] sm:$0xf]
        %v4595 = vld [vmem:[%s4 + $0xb8] sm:$0xf]
        %v4596 = vld [vmem:[%s4 + $0xbc] sm:$0xf]
        %v4597 = vld [vmem:[%s4 + $0xc0] sm:$0xf]
        %v4598 = vld [vmem:[%s4 + $0xc4] sm:$0xf]
        %v4599 = vld [vmem:[%s4 + $0xc8] sm:$0xf]
        %v4600 = vld [vmem:[%s4 + $0xcc] sm:$0xf]
        %v4601 = vld [vmem:[%s4 + $0xd0] sm:$0xf]
        %v4602 = vld [vmem:[%s4 + $0xd4] sm:$0xf]
        %v4603 = vld [vmem:[%s4 + $0xd8] sm:$0xf]
        %v4604 = vld [vmem:[%s4 + $0xdc] sm:$0xf]
        %v4605 = vld [vmem:[%s4 + $0xe0] sm:$0xf]
        %v4606 = vld [vmem:[%s4 + $0xe4] sm:$0xf]
        %v4607 = vld [vmem:[%s4 + $0xe8] sm:$0xf]
        %v4608 = vld [vmem:[%s4 + $0xec] sm:$0xf]
        %v4609 = vld [vmem:[%s4 + $0xf0] sm:$0xf]
        %v4610 = vld [vmem:[%s4 + $0xf4] sm:$0xf]
        %v4611 = vld [vmem:[%s4 + $0xf8] sm:$0xf]
        %v4612 = vld [vmem:[%s4 + $0xfc] sm:$0xf]
        %v4613 = vld [vmem:[%s4 + $0x100] sm:$0xf]
        %v4614 = vld [vmem:[%s4 + $0x104] sm:$0xf]
        %v4615 = vld [vmem:[%s4 + $0x108] sm:$0xf]
        %v4616 = vld [vmem:[%s4 + $0x10c] sm:$0xf]
        %v4617 = vld [vmem:[%s4 + $0x110] sm:$0xf]
        %v4618 = vld [vmem:[%s4 + $0x114] sm:$0xf]
        %v4619 = vld [vmem:[%s4 + $0x118] sm:$0xf]
        %v4620 = vld [vmem:[%s4 + $0x11c] sm:$0xf]
        %4621 = vst [vmem:[#allocation1] ss:$9 sm:$0xff] %v4537
        %s4622 = scalar_lea.vmem [#allocation1], 1
        %4623 = vst [vmem:[%s4622] ss:$9 sm:$0xff] %v4548
        %v4624 = vld [vmem:[#allocation1] sm:$0xff]
        %v4625 = vld [vmem:[#allocation1 + $0x9] sm:$0xff]
        %v4626 = vld [vmem:[#allocation1 + $0x12] sm:$0xff]
        %v4627 = vld [vmem:[#allocation1 + $0x1b] sm:$0xff]
        %v4628 = vld [vmem:[#allocation1 + $0x24] sm:$0xff]
        %v4705 = vunpack.c.l.b16 %v4549
        %v4706 = vunpack.c.l.b16 %v4550
        %v4707 = vunpack.c.l.b16 %v4551
        %v4708 = vunpack.c.l.b16 %v4552
        %v4709 = vunpack.c.l.b16 %v4553
        %v4710 = vunpack.c.l.b16 %v4554
        %v4711 = vunpack.c.l.b16 %v4555
        %v4712 = vunpack.c.l.b16 %v4556
        %v4713 = vunpack.c.l.b16 %v4557
        %v4714 = vunpack.c.l.b16 %v4558
        %v4715 = vunpack.c.l.b16 %v4559
        %v4716 = vunpack.c.l.b16 %v4560
        %v4717 = vunpack.c.l.b16 %v4561
        %v4718 = vunpack.c.l.b16 %v4562
        %v4719 = vunpack.c.l.b16 %v4563
        %v4720 = vunpack.c.l.b16 %v4564
        %v4721 = vunpack.c.l.b16 %v4565
        %v4722 = vunpack.c.l.b16 %v4566
        %v4723 = vunpack.c.l.b16 %v4567
        %v4724 = vunpack.c.l.b16 %v4568
        %v4725 = vunpack.c.l.b16 %v4569
        %v4726 = vunpack.c.l.b16 %v4570
        %v4727 = vunpack.c.l.b16 %v4571
        %v4728 = vunpack.c.l.b16 %v4572
        %v4729 = vunpack.c.l.b16 %v4573
        %v4730 = vunpack.c.l.b16 %v4574
        %v4731 = vunpack.c.l.b16 %v4575
        %v4732 = vunpack.c.l.b16 %v4576
        %v4733 = vunpack.c.l.b16 %v4577
        %v4734 = vunpack.c.l.b16 %v4578
        %v4735 = vunpack.c.l.b16 %v4579
        %v4736 = vunpack.c.l.b16 %v4580
        %v4737 = vunpack.c.l.b16 %v4581
        %v4738 = vunpack.c.l.b16 %v4582
        %v4739 = vunpack.c.l.b16 %v4583
        %v4740 = vunpack.c.l.b16 %v4584
        %v4741 = vunpack.c.l.b16 %v4585
        %v4742 = vunpack.c.l.b16 %v4586
        %v4743 = vunpack.c.l.b16 %v4587
        %v4744 = vunpack.c.l.b16 %v4588
        %v4745 = vunpack.c.l.b16 %v4589
        %v4746 = vunpack.c.l.b16 %v4590
        %v4747 = vunpack.c.l.b16 %v4591
        %v4748 = vunpack.c.l.b16 %v4592
        %v4749 = vunpack.c.l.b16 %v4593
        %v4750 = vunpack.c.l.b16 %v4594
        %v4751 = vunpack.c.l.b16 %v4595
        %v4752 = vunpack.c.l.b16 %v4596
        %v4753 = vunpack.c.l.b16 %v4597
        %v4754 = vunpack.c.l.b16 %v4598
        %v4755 = vunpack.c.l.b16 %v4599
        %v4756 = vunpack.c.l.b16 %v4600
        %v4757 = vunpack.c.l.b16 %v4601
        %v4758 = vunpack.c.l.b16 %v4602
        %v4759 = vunpack.c.l.b16 %v4603
        %v4760 = vunpack.c.l.b16 %v4604
        %v4761 = vunpack.c.l.b16 %v4605
        %v4762 = vunpack.c.l.b16 %v4606
        %v4763 = vunpack.c.l.b16 %v4607
        %v4764 = vunpack.c.l.b16 %v4608
        %v4765 = vunpack.c.l.b16 %v4609
        %v4766 = vunpack.c.l.b16 %v4610
        %v4767 = vunpack.c.l.b16 %v4611
        %v4768 = vunpack.c.l.b16 %v4612
        %v4769 = vunpack.c.l.b16 %v4613
        %v4770 = vunpack.c.l.b16 %v4614
        %v4771 = vunpack.c.l.b16 %v4615
        %v4772 = vunpack.c.l.b16 %v4616
        %v4773 = vunpack.c.l.b16 %v4617
        %v4774 = vunpack.c.l.b16 %v4618
        %v4775 = vunpack.c.l.b16 %v4619
        %v4776 = vunpack.c.l.b16 %v4620
        %v4777 = vpack.c.b16 %v4706, %v4705
        %v4778 = vpack.c.b16 %v4708, %v4707
        %v4779 = vpack.c.b16 %v4710, %v4709
        %v4780 = vpack.c.b16 %v4712, %v4711
        %v4781 = vpack.c.b16 %v4714, %v4713
        %v4782 = vpack.c.b16 %v4716, %v4715
        %v4783 = vpack.c.b16 %v4718, %v4717
        %v4784 = vpack.c.b16 %v4720, %v4719
        %v4785 = vpack.c.b16 %v4722, %v4721
        %v4786 = vpack.c.b16 %v4724, %v4723
        %v4787 = vpack.c.b16 %v4726, %v4725
        %v4788 = vpack.c.b16 %v4728, %v4727
        %v4789 = vpack.c.b16 %v4730, %v4729
        %v4790 = vpack.c.b16 %v4732, %v4731
        %v4791 = vpack.c.b16 %v4734, %v4733
        %v4792 = vpack.c.b16 %v4736, %v4735
        %v4793 = vpack.c.b16 %v4738, %v4737
        %v4794 = vpack.c.b16 %v4740, %v4739
        %v4795 = vpack.c.b16 %v4742, %v4741
        %v4796 = vpack.c.b16 %v4744, %v4743
        %v4797 = vpack.c.b16 %v4746, %v4745
        %v4798 = vpack.c.b16 %v4748, %v4747
        %v4799 = vpack.c.b16 %v4750, %v4749
        %v4800 = vpack.c.b16 %v4752, %v4751
        %v4801 = vpack.c.b16 %v4754, %v4753
        %v4802 = vpack.c.b16 %v4756, %v4755
        %v4803 = vpack.c.b16 %v4758, %v4757
        %v4804 = vpack.c.b16 %v4760, %v4759
        %v4805 = vpack.c.b16 %v4762, %v4761
        %v4806 = vpack.c.b16 %v4764, %v4763
        %v4807 = vpack.c.b16 %v4766, %v4765
        %v4808 = vpack.c.b16 %v4768, %v4767
        %v4809 = vpack.c.b16 %v4770, %v4769
        %v4810 = vpack.c.b16 %v4772, %v4771
        %v4811 = vpack.c.b16 %v4774, %v4773
        %v4812 = vpack.c.b16 %v4776, %v4775
        %v4849 = vsel %vm2900, %v4628, 0
        %4851 = vmatpush.bf16.msra.mxu0 %v4784
        %4852 = vmatpush.bf16.msra.mxu0 %v4783
        %4853 = vmatpush.bf16.msra.mxu0 %v4782
        %4854 = vmatpush.bf16.msra.mxu0 %v4781
        %4855 = vmatpush.bf16.msra.mxu0 %v4780
        %4856 = vmatpush.bf16.msra.mxu0 %v4779
        %4857 = vmatpush.bf16.msra.mxu0 %v4778
        %4858 = vmatpush.bf16.msra.mxu0 %v4777
        %4859 = vmatmul.bf16.gmra.mxu0 %v4624
        %v4860 = vpop.f32.mrf.mxu0
        %v4861 = vadd.f32 0.0, %v4860
        %v4862 = vpop.f32.mrf.mxu0
        %4863 = vdwg.mxu0
        %4864 = vmatpush.bf16.msra.mxu0 %v4792
        %4865 = vmatpush.bf16.msra.mxu0 %v4791
        %4866 = vmatpush.bf16.msra.mxu0 %v4790
        %4867 = vmatpush.bf16.msra.mxu0 %v4789
        %4868 = vmatpush.bf16.msra.mxu0 %v4788
        %4869 = vmatpush.bf16.msra.mxu0 %v4787
        %4870 = vmatpush.bf16.msra.mxu0 %v4786
        %4871 = vmatpush.bf16.msra.mxu0 %v4785
        %4872 = vmatmul.bf16.gmra.mxu0 %v4625
        %v4873 = vpop.f32.mrf.mxu0
        %v4874 = vadd.f32 %v4861, %v4873
        %v4875 = vpop.f32.mrf.mxu0
        %4876 = vdwg.mxu0
        %4877 = vmatpush.bf16.msra.mxu0 %v4800
        %4878 = vmatpush.bf16.msra.mxu0 %v4799
        %4879 = vmatpush.bf16.msra.mxu0 %v4798
        %4880 = vmatpush.bf16.msra.mxu0 %v4797
        %4881 = vmatpush.bf16.msra.mxu0 %v4796
        %4882 = vmatpush.bf16.msra.mxu0 %v4795
        %4883 = vmatpush.bf16.msra.mxu0 %v4794
        %4884 = vmatpush.bf16.msra.mxu0 %v4793
        %4885 = vmatmul.bf16.gmra.mxu0 %v4626
        %v4886 = vpop.f32.mrf.mxu0
        %v4887 = vadd.f32 %v4874, %v4886
        %v4888 = vpop.f32.mrf.mxu0
        %4889 = vdwg.mxu0
        %4890 = vmatpush.bf16.msra.mxu0 %v4808
        %4891 = vmatpush.bf16.msra.mxu0 %v4807
        %4892 = vmatpush.bf16.msra.mxu0 %v4806
        %4893 = vmatpush.bf16.msra.mxu0 %v4805
        %4894 = vmatpush.bf16.msra.mxu0 %v4804
        %4895 = vmatpush.bf16.msra.mxu0 %v4803
        %4896 = vmatpush.bf16.msra.mxu0 %v4802
        %4897 = vmatpush.bf16.msra.mxu0 %v4801
        %4898 = vmatmul.bf16.gmra.mxu0 %v4627
        %v4899 = vpop.f32.mrf.mxu0
        %v4900 = vadd.f32 %v4887, %v4899
        %v4901 = vpop.f32.mrf.mxu0
        %4902 = vdwg.mxu0
        %4903 = vmatpush.bf16.msra.mxu0 0
        %4904 = vmatpush.bf16.msra.mxu0 0
        %4905 = vmatpush.bf16.msra.mxu0 0
        %4906 = vmatpush.bf16.msra.mxu0 0
        %4907 = vmatpush.bf16.msra.mxu0 %v4812
        %4908 = vmatpush.bf16.msra.mxu0 %v4811
        %4909 = vmatpush.bf16.msra.mxu0 %v4810
        %4910 = vmatpush.bf16.msra.mxu0 %v4809
        %4911 = vmatmul.bf16.gmra.mxu0 %v4849
        %v4912 = vpop.f32.mrf.mxu0
        %v4913 = vadd.f32 %v4900, %v4912
        %v4914 = vpop.f32.mrf.mxu0
        %4915 = vdwg.mxu0
        %v4916 = vperm.slane %v277, 3
        %v4917 = vmul.f32 %v4913, %v4916
        %v4918 = vperm.slane %v278, 3
        %v4919 = vadd.f32 %v4917, %v4918
        %vm4920 = vcmp.gt.f32.partialorder %v4919, 0.0
        %v4921 = vmul.f32 %v4919, 0.2
        %v4922 = vsel %vm4920, %v4919, %v4921
        %v4924 = vrot.slane %v4922, 2
        %v4926 = vmax.f32 %v4922, %v4924
        %v4928 = vrot.slane %v4926, 7
        %v4929 = vrot.slane %v4928, 2
        %v4931 = vmax.f32 %v4926, %v4929
        %4932 = vst.msk [vmem:[%s270] sm:$0x1] %vm4282, %v4931
        %s4933 = sand.u32 %s181, 1
        %s4934 = scalar_lea.sflag [#allocation5], %s4933
        %s4935 = sand.u32 %s181, 1
        %s4936 = scalar_lea.vmem [#allocation4], %s4935
        // Predicated region
        $region49: #{conv64f_mcl_forward.1} parent=47 // pred_check
          %p4937 = pneg %p191
        $region50: #{conv64f_mcl_forward.1} parent=47 // pred_check_branch
          %4939 = sbr.rel (%p4937) target = $region52
        $region51: #{conv64f_mcl_forward.1} parent=47 // pred_region
          %4941 = vsyncadd %s4934, 0
          %s4942 = scalar_lea.hbm %s7, %s21
          %s4944 = sshll.u32 %s4936, 4
          %s4945 = int_to_ptr.vmem [resolvable:$true] %s4944
          %s4946 = sshll.u32 %s4942, 4
          %s4947 = int_to_ptr.hbm [resolvable:$true] %s4946
          %4949 = dma.vmem_to_hbm [thread:$0]  %s4945, 16, %s4947, %s4934
        $region52: #{conv64f_mcl_forward.1} parent=47 // pred_fallthru
          _
      $region48: #{conv64f_mcl_forward.1} parent=5 // pred_fallthru
        _
      %p4950 = scmp.le.s32.totalorder 2, %s16
      // Predicated region
      $region53: #{conv64f_mcl_forward.1} parent=5 // pred_check
        %p4951 = pneg %p4950
      $region54: #{conv64f_mcl_forward.1} parent=5 // pred_check_branch
        %4953 = sbr.rel (%p4951) target = $region56
      $region55: #{conv64f_mcl_forward.1} parent=5 // pred_region
        %s4954 = ssub.s32 %s16, 2
        // Predicated region
        $region57: #{conv64f_mcl_forward.1} parent=55 // pred_check
          %p4955 = pneg %p197
        $region58: #{conv64f_mcl_forward.1} parent=55 // pred_check_branch
          %4957 = sbr.rel (%p4955) target = $region60
        $region59: #{conv64f_mcl_forward.1} parent=55 // pred_region
          %s4958 = sand.u32 %s182, 1
          %s4959 = scalar_lea.sflag [#allocation5], %s4958
          %s4960 = sand.u32 %s182, 1
          %s4961 = scalar_lea.vmem [#allocation4], %s4960
          %4963 = dma.done %s4959, 16
        $region60: #{conv64f_mcl_forward.1} parent=55 // pred_fallthru
          _
      $region56: #{conv64f_mcl_forward.1} parent=5 // pred_fallthru
        _
    $region6: #{conv64f_mcl_forward.1} parent=1 // loop_footer
      %s20 = sadd.s32 1, %s16
    $region7: #{conv64f_mcl_forward.1} parent=1 // loop_footer_branch
      %15 = sbr.rel target = $region3
    $region8: #{conv64f_mcl_forward.1} parent=1 // loop_exit
      _
    %4964 = vsyncpa [#allocation5], 1
    %s4965 = scalar_lea.sflag [#allocation5], 1
    %4966 = vsyncpa %s4965, 1

</llo_original>
